<compile_context>
chip_gen: v6e
topology: v6e:2x2x1
jax: 0.10.0
libtpu: 0.0.40
codegen_flags: <defaults>
</compile_context>

<pallas_src>
import jax
import jax.numpy as jnp
from jax.experimental import pallas as pl
from jax.experimental.pallas import tpu as pltpu

# Logical (PyTorch) dims.
D_IN, H1, H2, D_OUT = 1000, 600, 300, 1
# Lane-aligned (multiple-of-128) padded dims used inside the kernel.
D_IN_P, H1_P, H2_P = 1024, 640, 384


def _round_up(n, m):
    return ((n + m - 1) // m) * m


def mlp_kernel(x_ref, w1_ref, b1_ref, w2_ref, b2_ref, w3_ref, b3_ref, o_ref):
    # Fused 3-layer MLP: bf16 MXU inputs, fp32 accumulation / bias / ReLU.
    x = x_ref[...].astype(jnp.bfloat16)                          # [TB, 1024]
    h1 = jnp.dot(x, w1_ref[...], preferred_element_type=jnp.float32)
    h1 = jnp.maximum(h1 + b1_ref[...], 0.0)                      # f32 [TB, 640]
    h2 = jnp.dot(h1.astype(jnp.bfloat16), w2_ref[...],
                 preferred_element_type=jnp.float32)
    h2 = jnp.maximum(h2 + b2_ref[...], 0.0)                      # f32 [TB, 384]
    # fc3 has out_features=1: VPU multiply + XLU lane reduce instead of a
    # wasteful N=1 MXU pass.
    w3_row = w3_ref[...].astype(jnp.float32)                     # [1, 384]
    out = jnp.sum(h2 * w3_row, axis=-1, keepdims=True) + b3_ref[...]
    o_ref[...] = out                                             # [TB, 1]


def net_forward(x, packed_params, *, tb=128):
    """x: [batch, 1000] fp32; packed_params from pack_params()."""
    w1, b1, w2, b2, w3, b3 = packed_params
    batch = x.shape[0]

    tb = min(tb, _round_up(batch, 8))        # batch tile, sublane aligned
    b_pad = _round_up(batch, tb)
    n_tiles = b_pad // tb

    # Zero-pad activations to the lane/sublane-aligned slab.
    x_p = jnp.zeros((b_pad, D_IN_P), jnp.float32)
    x_p = x_p.at[:batch, :D_IN].set(x.astype(jnp.float32))

    batched = lambda shape: pl.BlockSpec(shape, lambda i: (i, 0))
    resident = lambda shape: pl.BlockSpec(shape, lambda i: (0, 0))

    weight_bytes = 2 * (D_IN_P * H1_P + H1_P * H2_P + H2_P)      # bf16
    bias_bytes = 4 * (H1_P + H2_P + 1)                           # fp32
    act_bytes = 4 * (b_pad * D_IN_P + b_pad * D_OUT)             # fp32
    cost = pl.CostEstimate(
        flops=int(2 * b_pad * (D_IN_P * H1_P + H1_P * H2_P + H2_P)),
        transcendentals=0,
        bytes_accessed=int(weight_bytes + bias_bytes + act_bytes),
    )

    out = pl.pallas_call(
        mlp_kernel,
        out_shape=jax.ShapeDtypeStruct((b_pad, D_OUT), jnp.float32),
        grid=(n_tiles,),
        in_specs=[
            batched((tb, D_IN_P)),       # x: tiled along batch
            resident((D_IN_P, H1_P)),    # w1 (bf16), VMEM-resident
            resident((1, H1_P)),         # b1 (f32)
            resident((H1_P, H2_P)),      # w2 (bf16)
            resident((1, H2_P)),         # b2 (f32)
            resident((1, H2_P)),         # w3 row (bf16)
            resident((1, 1)),            # b3 (f32)
        ],
        out_specs=batched((tb, D_OUT)),
        compiler_params=pltpu.CompilerParams(
            dimension_semantics=("parallel",),
            vmem_limit_bytes=16 << 20,
        ),
        cost_estimate=cost,
    )(x_p, w1, b1, w2, b2, w3, b3)
    return out[:batch]


def init_params(key):
    # Deterministic synthetic init (uniform, PyTorch-Linear-like scale),
    # stored in logical [in_features, out_features] layout, fp32.
    ks = jax.random.split(key, 6)

    def lin(kw, kb, fan_in, fan_out):
        bound = 1.0 / jnp.sqrt(fan_in)
        w = jax.random.uniform(kw, (fan_in, fan_out), jnp.float32, -bound, bound)
        b = jax.random.uniform(kb, (fan_out,), jnp.float32, -bound, bound)
        return w, b

    w1, b1 = lin(ks[0], ks[1], D_IN, H1)
    w2, b2 = lin(ks[2], ks[3], H1, H2)
    w3, b3 = lin(ks[4], ks[5], H2, D_OUT)
    return (w1, b1, w2, b2, w3, b3)


def pack_params(params):
    """Zero-pad to lane-aligned shapes; weights -> bf16, biases stay fp32."""
    w1, b1, w2, b2, w3, b3 = params

    def pad2(a, rows, cols):
        out = jnp.zeros((rows, cols), a.dtype)
        return out.at[: a.shape[0], : a.shape[1]].set(a)

    w1_p = pad2(w1, D_IN_P, H1_P).astype(jnp.bfloat16)
    w2_p = pad2(w2, H1_P, H2_P).astype(jnp.bfloat16)
    # fc3 weight as a (1, H2_P) row for the VPU-multiply / lane-reduce path.
    w3_p = pad2(w3.reshape(H2, D_OUT).T, 1, H2_P).astype(jnp.bfloat16)
    b1_p = pad2(b1.reshape(1, H1), 1, H1_P).astype(jnp.float32)
    b2_p = pad2(b2.reshape(1, H2), 1, H2_P).astype(jnp.float32)
    b3_p = b3.reshape(1, 1).astype(jnp.float32)
    return (w1_p, b1_p, w2_p, b2_p, w3_p, b3_p)


def ref_forward(x, packed_params):
    # Plain-JAX reference using the same bf16-weight / fp32-accum recipe.
    w1, b1, w2, b2, w3, b3 = packed_params
    xb = jnp.zeros((x.shape[0], D_IN_P), jnp.float32).at[:, :D_IN].set(x)
    xb = xb.astype(jnp.bfloat16)
    h1 = jnp.maximum(
        jnp.dot(xb, w1, preferred_element_type=jnp.float32) + b1, 0.0)
    h2 = jnp.maximum(
        jnp.dot(h1.astype(jnp.bfloat16), w2,
                preferred_element_type=jnp.float32) + b2, 0.0)
    return jnp.sum(h2 * w3.astype(jnp.float32), axis=-1, keepdims=True) + b3


if __name__ == "__main__":
    key = jax.random.PRNGKey(0)
    k_x, k_p = jax.random.split(key)

    batch = 8
    x = jax.random.normal(k_x, (batch, D_IN), jnp.float32)
    params = init_params(k_p)
    packed = pack_params(params)

    out = net_forward(x, packed)
    jax.block_until_ready(out)

    ref = ref_forward(x, packed)
    assert out.shape == (batch, D_OUT)
    assert jnp.allclose(out, ref, atol=2e-3, rtol=2e-3), (
        float(jnp.max(jnp.abs(out - ref))))

    print("KERNEL_OK")
</pallas_src>

<mosaic_0001>
module attributes {stable_mosaic.version = 11 : i64} {
  func.func @mlp_kernel(%arg0: i32, %arg1: memref<8x1024xf32, #tpu.memory_space<vmem>>, %arg2: memref<1024x640xbf16, #tpu.memory_space<vmem>>, %arg3: memref<1x640xf32, #tpu.memory_space<vmem>>, %arg4: memref<640x384xbf16, #tpu.memory_space<vmem>>, %arg5: memref<1x384xf32, #tpu.memory_space<vmem>>, %arg6: memref<1x384xbf16, #tpu.memory_space<vmem>>, %arg7: memref<1x1xf32, #tpu.memory_space<vmem>>, %arg8: memref<8x1xf32, #tpu.memory_space<vmem>>) attributes {dimension_semantics = [#tpu.dimension_semantics<parallel>], iteration_bounds = array<i64: 1>, scalar_prefetch = 0 : i64, scratch_operands = 0 : i64, tpu.core_type = #tpu.core_type<tc>, window_params = [{transform_indices = @transform_0, window_bounds = array<i64: 8, 1024>}, {pipeline_mode = #tpu.pipeline_mode<synchronous>, transform_indices = @transform_1, window_bounds = array<i64: 1024, 640>}, {pipeline_mode = #tpu.pipeline_mode<synchronous>, transform_indices = @transform_2, window_bounds = array<i64: 1, 640>}, {pipeline_mode = #tpu.pipeline_mode<synchronous>, transform_indices = @transform_3, window_bounds = array<i64: 640, 384>}, {pipeline_mode = #tpu.pipeline_mode<synchronous>, transform_indices = @transform_4, window_bounds = array<i64: 1, 384>}, {pipeline_mode = #tpu.pipeline_mode<synchronous>, transform_indices = @transform_5, window_bounds = array<i64: 1, 384>}, {pipeline_mode = #tpu.pipeline_mode<synchronous>, transform_indices = @transform_6, window_bounds = array<i64: 1, 1>}, {transform_indices = @transform_7, window_bounds = array<i64: 8, 1>}]} {
    %c0 = arith.constant 0 : index
    %c0_0 = arith.constant 0 : index
    %0 = vector.load %arg1[%c0, %c0_0] : memref<8x1024xf32, #tpu.memory_space<vmem>>, vector<8x1024xf32>
    %1 = arith.truncf %0 : vector<8x1024xf32> to vector<8x1024xbf16>
    %c0_1 = arith.constant 0 : index
    %c0_2 = arith.constant 0 : index
    %2 = vector.load %arg2[%c0_1, %c0_2] : memref<1024x640xbf16, #tpu.memory_space<vmem>>, vector<1024x640xbf16>
    %cst = arith.constant dense<0.000000e+00> : vector<8x640xf32>
    %3 = tpu.matmul %1, %2, %cst {dimension_numbers = #tpu.dot_dimension_numbers<[1], [0], [0], [1], [0, 0, 1, 1], [], []>} : vector<8x1024xbf16>, vector<1024x640xbf16>, vector<8x640xf32> -> vector<8x640xf32>
    %c0_3 = arith.constant 0 : index
    %c0_4 = arith.constant 0 : index
    %4 = vector.load %arg3[%c0_3, %c0_4] : memref<1x640xf32, #tpu.memory_space<vmem>>, vector<1x640xf32>
    %5 = vector.broadcast %4 : vector<1x640xf32> to vector<8x640xf32>
    %6 = arith.addf %3, %5 : vector<8x640xf32>
    %cst_5 = arith.constant 0.000000e+00 : f32
    %7 = vector.broadcast %cst_5 : f32 to vector<8x640xf32>
    %8 = arith.maximumf %6, %7 : vector<8x640xf32>
    %9 = arith.truncf %8 : vector<8x640xf32> to vector<8x640xbf16>
    %c0_6 = arith.constant 0 : index
    %c0_7 = arith.constant 0 : index
    %10 = vector.load %arg4[%c0_6, %c0_7] : memref<640x384xbf16, #tpu.memory_space<vmem>>, vector<640x384xbf16>
    %cst_8 = arith.constant dense<0.000000e+00> : vector<8x384xf32>
    %11 = tpu.matmul %9, %10, %cst_8 {dimension_numbers = #tpu.dot_dimension_numbers<[1], [0], [0], [1], [0, 0, 1, 1], [], []>} : vector<8x640xbf16>, vector<640x384xbf16>, vector<8x384xf32> -> vector<8x384xf32>
    %c0_9 = arith.constant 0 : index
    %c0_10 = arith.constant 0 : index
    %12 = vector.load %arg5[%c0_9, %c0_10] : memref<1x384xf32, #tpu.memory_space<vmem>>, vector<1x384xf32>
    %13 = vector.broadcast %12 : vector<1x384xf32> to vector<8x384xf32>
    %14 = arith.addf %11, %13 : vector<8x384xf32>
    %cst_11 = arith.constant 0.000000e+00 : f32
    %15 = vector.broadcast %cst_11 : f32 to vector<8x384xf32>
    %16 = arith.maximumf %14, %15 : vector<8x384xf32>
    %c0_12 = arith.constant 0 : index
    %c0_13 = arith.constant 0 : index
    %17 = vector.load %arg6[%c0_12, %c0_13] : memref<1x384xbf16, #tpu.memory_space<vmem>>, vector<1x384xbf16>
    %18 = arith.extf %17 : vector<1x384xbf16> to vector<1x384xf32>
    %19 = vector.broadcast %18 : vector<1x384xf32> to vector<8x384xf32>
    %20 = arith.mulf %16, %19 : vector<8x384xf32>
    %cst_14 = arith.constant dense<0.000000e+00> : vector<8xf32>
    %21 = vector.multi_reduction <add>, %20, %cst_14 [1] : vector<8x384xf32> to vector<8xf32>
    %22 = vector.shape_cast %21 : vector<8xf32> to vector<8x1xf32>
    %c0_15 = arith.constant 0 : index
    %c0_16 = arith.constant 0 : index
    %23 = vector.load %arg7[%c0_15, %c0_16] : memref<1x1xf32, #tpu.memory_space<vmem>>, vector<1x1xf32>
    %24 = vector.broadcast %23 : vector<1x1xf32> to vector<8x1xf32>
    %25 = arith.addf %22, %24 : vector<8x1xf32>
    %c0_17 = arith.constant 0 : index
    %c0_18 = arith.constant 0 : index
    %26 = vector.load %arg8[%c0_17, %c0_18] : memref<8x1xf32, #tpu.memory_space<vmem>>, vector<8x1xf32>
    tpu.vector_store %arg8[%c0_17, %c0_18], %25 {strides = array<i32>} : memref<8x1xf32, #tpu.memory_space<vmem>>, vector<8x1xf32>,
    return
  }
  func.func @transform_0(%arg0: i32) -> (i32, i32) {
    %c0_i32 = arith.constant 0 : i32
    %c0_i32_0 = arith.constant 0 : i32
    return %arg0, %c0_i32 : i32, i32
  }
  func.func @transform_1(%arg0: i32) -> (i32, i32) {
    %c0_i32 = arith.constant 0 : i32
    %c0_i32_0 = arith.constant 0 : i32
    %c0_i32_1 = arith.constant 0 : i32
    return %c0_i32, %c0_i32_0 : i32, i32
  }
  func.func @transform_2(%arg0: i32) -> (i32, i32) {
    %c0_i32 = arith.constant 0 : i32
    %c0_i32_0 = arith.constant 0 : i32
    %c0_i32_1 = arith.constant 0 : i32
    return %c0_i32, %c0_i32_0 : i32, i32
  }
  func.func @transform_3(%arg0: i32) -> (i32, i32) {
    %c0_i32 = arith.constant 0 : i32
    %c0_i32_0 = arith.constant 0 : i32
    %c0_i32_1 = arith.constant 0 : i32
    return %c0_i32, %c0_i32_0 : i32, i32
  }
  func.func @transform_4(%arg0: i32) -> (i32, i32) {
    %c0_i32 = arith.constant 0 : i32
    %c0_i32_0 = arith.constant 0 : i32
    %c0_i32_1 = arith.constant 0 : i32
    return %c0_i32, %c0_i32_0 : i32, i32
  }
  func.func @transform_5(%arg0: i32) -> (i32, i32) {
    %c0_i32 = arith.constant 0 : i32
    %c0_i32_0 = arith.constant 0 : i32
    %c0_i32_1 = arith.constant 0 : i32
    return %c0_i32, %c0_i32_0 : i32, i32
  }
  func.func @transform_6(%arg0: i32) -> (i32, i32) {
    %c0_i32 = arith.constant 0 : i32
    %c0_i32_0 = arith.constant 0 : i32
    %c0_i32_1 = arith.constant 0 : i32
    return %c0_i32, %c0_i32_0 : i32, i32
  }
  func.func @transform_7(%arg0: i32) -> (i32, i32) {
    %c0_i32 = arith.constant 0 : i32
    %c0_i32_0 = arith.constant 0 : i32
    return %arg0, %c0_i32 : i32, i32
  }
}

</mosaic_0001>

<llo_original>
// kernel: tpu_custom_call.1
$region0: #{tpu_custom_call.1}
  #allocation0 [shape = 'u32[]', space=smem, size = 0x4, offset = 0x4, fixed_abs, tag = 'smem constant byte address 0x4 - core index']
  #allocation1 [shape = 'u32[144,128]{1,0:T(1,128)}', space=vmem, size = 0x12000, scoped, tag = 'internal scratch']
  #allocation2 [shape = 'f32[1,1]{1,0:T(1,128)S(1)}', space=vmem, size = 0x200, scoped, tag = 'scoped memory for tpu_custom_call.1']
  %s0 = inlined_call_operand.hbm [shape: f32[8,1024], index: 0, kind: input, shape index: {}]
  %s1 = inlined_call_operand.hbm [shape: bf16[1024,640], index: 1, kind: input, shape index: {}]
  %s2 = inlined_call_operand.hbm [shape: f32[1,640], index: 2, kind: input, shape index: {}]
  %s3 = inlined_call_operand.hbm [shape: bf16[640,384], index: 3, kind: input, shape index: {}]
  %s4 = inlined_call_operand.hbm [shape: f32[1,384], index: 4, kind: input, shape index: {}]
  %s5 = inlined_call_operand.hbm [shape: bf16[1,384], index: 5, kind: input, shape index: {}]
  %s6 = inlined_call_operand.<no memory space> [shape: f32[1,1], index: 6, kind: input, shape index: {}]
  %s7 = inlined_call_operand.vmem [shape: f32[8,1], index: 7, kind: output, shape index: {}]
  %s8 = sld [smem:[#allocation0]]
  $region62: #{tpu_custom_call.1} parent=0
    _
  %s10 = ssub.s32 1, %s8
  %s11 = scalar_select 0, %s10, %s8
  %v12 = vstv %s6
  %13 = vst [vmem:[#allocation2] sm:$0x1] %v12
  $region1: #{tpu_custom_call.1} parent=0
    #allocation3 [shape = 'u8[32768]{0}', space=vmem, size = 0x8000, scoped, tag = 'input window, operand 0, single buffered']
    #allocation4 [shape = 's32[1]{0}', space=sflag, size = 0x4, scoped, tag = 'scoped memory for tpu_custom_call.1']
    #allocation5 [shape = 'u8[1310720]{0}', space=vmem, size = 0x140000, scoped, tag = 'input window, operand 1, single buffered']
    #allocation6 [shape = 's32[1]{0}', space=sflag, size = 0x4, scoped, tag = 'scoped memory for tpu_custom_call.1']
    #allocation7 [shape = 'u8[2560]{0}', space=vmem, size = 0xc00, scoped, tag = 'input window, operand 2, single buffered']
    #allocation8 [shape = 'u8[491520]{0}', space=vmem, size = 0x78000, scoped, tag = 'input window, operand 3, single buffered']
    #allocation9 [shape = 's32[1]{0}', space=sflag, size = 0x4, scoped, tag = 'scoped memory for tpu_custom_call.1']
    #allocation10 [shape = 'u8[1536]{0}', space=vmem, size = 0x800, scoped, tag = 'input window, operand 4, single buffered']
    #allocation11 [shape = 'u8[1536]{0}', space=vmem, size = 0x800, scoped, tag = 'input window, operand 5, single buffered']
    #allocation12 [shape = 's32[1]{0}', space=sflag, size = 0x4, scoped, tag = 'scoped memory for tpu_custom_call.1']
    %14 = vsyncpa [#allocation4], 0
    %15 = vsyncpa [#allocation6], 0
    %16 = vsyncpa [#allocation9], 0
    %17 = vsyncpa [#allocation12], 0
    // Predicated region
    $region2: #{tpu_custom_call.1} parent=1 // pred_check
      _
    $region3: #{tpu_custom_call.1} parent=1 // pred_check_branch
      %19 = sbr.rel (0) target = $region5
    $region4: #{tpu_custom_call.1} parent=1 // pred_region
      %s21 = ssub.s32 1024, 1024
      %22 = vsyncadd [#allocation4], %s21
      %s24 = sshll.u32 [#allocation3], 4
      %s25 = int_to_ptr.vmem [resolvable:$true] %s24
      %27 = dma.hbm_to_vmem [thread:$0]  %s0, 1024, %s25, [#allocation4]
    $region5: #{tpu_custom_call.1} parent=1 // pred_fallthru
      _
    // Predicated region
    $region6: #{tpu_custom_call.1} parent=1 // pred_check
      _
    $region7: #{tpu_custom_call.1} parent=1 // pred_check_branch
      %29 = sbr.rel (0) target = $region9
    $region8: #{tpu_custom_call.1} parent=1 // pred_region
      %s31 = ssub.s32 40960, 40960
      %32 = vsyncadd [#allocation6], %s31
      %s33 = sshll.u32 [#allocation5], 4
      %s34 = int_to_ptr.vmem [resolvable:$true] %s33
      %39 = dma.hbm_to_vmem [thread:$0]  %s1, 40960, %s34, [#allocation6], 320, 320, 20
    $region9: #{tpu_custom_call.1} parent=1 // pred_fallthru
      _
    // Predicated region
    $region10: #{tpu_custom_call.1} parent=1 // pred_check
      _
    $region11: #{tpu_custom_call.1} parent=1 // pred_check_branch
      %41 = sbr.rel (0) target = $region13
    $region12: #{tpu_custom_call.1} parent=1 // pred_region
      %s43 = ssub.s32 80, 80
      %44 = vsyncadd [#allocation6], %s43
      %s46 = sshll.u32 [#allocation7], 4
      %s47 = int_to_ptr.vmem [resolvable:$true] %s46
      %49 = dma.hbm_to_vmem [thread:$0]  %s2, 80, %s47, [#allocation6]
    $region13: #{tpu_custom_call.1} parent=1 // pred_fallthru
      _
    // Predicated region
    $region14: #{tpu_custom_call.1} parent=1 // pred_check
      _
    $region15: #{tpu_custom_call.1} parent=1 // pred_check_branch
      %51 = sbr.rel (0) target = $region17
    $region16: #{tpu_custom_call.1} parent=1 // pred_region
      %s53 = ssub.s32 15360, 15360
      %54 = vsyncadd [#allocation9], %s53
      %s55 = sshll.u32 [#allocation8], 4
      %s56 = int_to_ptr.vmem [resolvable:$true] %s55
      %61 = dma.hbm_to_vmem [thread:$0]  %s3, 15360, %s56, [#allocation9], 192, 192, 12
    $region17: #{tpu_custom_call.1} parent=1 // pred_fallthru
      _
    // Predicated region
    $region18: #{tpu_custom_call.1} parent=1 // pred_check
      _
    $region19: #{tpu_custom_call.1} parent=1 // pred_check_branch
      %63 = sbr.rel (0) target = $region21
    $region20: #{tpu_custom_call.1} parent=1 // pred_region
      %s65 = ssub.s32 48, 48
      %66 = vsyncadd [#allocation9], %s65
      %s68 = sshll.u32 [#allocation10], 4
      %s69 = int_to_ptr.vmem [resolvable:$true] %s68
      %71 = dma.hbm_to_vmem [thread:$0]  %s4, 48, %s69, [#allocation9]
    $region21: #{tpu_custom_call.1} parent=1 // pred_fallthru
      _
    // Predicated region
    $region22: #{tpu_custom_call.1} parent=1 // pred_check
      _
    $region23: #{tpu_custom_call.1} parent=1 // pred_check_branch
      %73 = sbr.rel (0) target = $region25
    $region24: #{tpu_custom_call.1} parent=1 // pred_region
      %s75 = ssub.s32 48, 48
      %76 = vsyncadd [#allocation12], %s75
      %s78 = sshll.u32 [#allocation11], 4
      %s79 = int_to_ptr.vmem [resolvable:$true] %s78
      %81 = dma.hbm_to_vmem [thread:$0]  %s5, 48, %s79, [#allocation12]
    $region25: #{tpu_custom_call.1} parent=1 // pred_fallthru
      _
    // Predicated region
    $region26: #{tpu_custom_call.1} parent=1 // pred_check
      _
    $region27: #{tpu_custom_call.1} parent=1 // pred_check_branch
      %83 = sbr.rel (0) target = $region29
    $region28: #{tpu_custom_call.1} parent=1 // pred_region
      _
    $region29: #{tpu_custom_call.1} parent=1 // pred_fallthru
      _
    // Predicated region
    $region30: #{tpu_custom_call.1} parent=1 // pred_check
      _
    $region31: #{tpu_custom_call.1} parent=1 // pred_check_branch
      %85 = sbr.rel (0) target = $region33
    $region32: #{tpu_custom_call.1} parent=1 // pred_region
      %86 = dma.done [#allocation4], 1024
    $region33: #{tpu_custom_call.1} parent=1 // pred_fallthru
      _
    // Predicated region
    $region34: #{tpu_custom_call.1} parent=1 // pred_check
      _
    $region35: #{tpu_custom_call.1} parent=1 // pred_check_branch
      %88 = sbr.rel (0) target = $region37
    $region36: #{tpu_custom_call.1} parent=1 // pred_region
      %89 = dma.done [#allocation6], 40960
    $region37: #{tpu_custom_call.1} parent=1 // pred_fallthru
      _
    // Predicated region
    $region38: #{tpu_custom_call.1} parent=1 // pred_check
      _
    $region39: #{tpu_custom_call.1} parent=1 // pred_check_branch
      %91 = sbr.rel (0) target = $region41
    $region40: #{tpu_custom_call.1} parent=1 // pred_region
      %92 = dma.done [#allocation6], 80
    $region41: #{tpu_custom_call.1} parent=1 // pred_fallthru
      _
    // Predicated region
    $region42: #{tpu_custom_call.1} parent=1 // pred_check
      _
    $region43: #{tpu_custom_call.1} parent=1 // pred_check_branch
      %94 = sbr.rel (0) target = $region45
    $region44: #{tpu_custom_call.1} parent=1 // pred_region
      %95 = dma.done [#allocation9], 15360
    $region45: #{tpu_custom_call.1} parent=1 // pred_fallthru
      _
    // Predicated region
    $region46: #{tpu_custom_call.1} parent=1 // pred_check
      _
    $region47: #{tpu_custom_call.1} parent=1 // pred_check_branch
      %97 = sbr.rel (0) target = $region49
    $region48: #{tpu_custom_call.1} parent=1 // pred_region
      %98 = dma.done [#allocation9], 48
    $region49: #{tpu_custom_call.1} parent=1 // pred_fallthru
      _
    // Predicated region
    $region50: #{tpu_custom_call.1} parent=1 // pred_check
      _
    $region51: #{tpu_custom_call.1} parent=1 // pred_check_branch
      %100 = sbr.rel (0) target = $region53
    $region52: #{tpu_custom_call.1} parent=1 // pred_region
      %101 = dma.done [#allocation12], 48
    $region53: #{tpu_custom_call.1} parent=1 // pred_fallthru
      _
    %v103 = vld [vmem:[#allocation3] sm:$0xff]
    %v104 = vld [vmem:[#allocation3 + $0x8] sm:$0xff]
    %v105 = vld [vmem:[#allocation3 + $0x10] sm:$0xff]
    %v106 = vld [vmem:[#allocation3 + $0x18] sm:$0xff]
    %v107 = vld [vmem:[#allocation3 + $0x20] sm:$0xff]
    %v108 = vld [vmem:[#allocation3 + $0x28] sm:$0xff]
    %v109 = vld [vmem:[#allocation3 + $0x30] sm:$0xff]
    %v110 = vld [vmem:[#allocation3 + $0x38] sm:$0xff]
    %v111 = vpack.c.bf16 %v103, %v103
    %v112 = vpack.c.bf16 %v104, %v104
    %v113 = vpack.c.bf16 %v105, %v105
    %v114 = vpack.c.bf16 %v106, %v106
    %v115 = vpack.c.bf16 %v107, %v107
    %v116 = vpack.c.bf16 %v108, %v108
    %v117 = vpack.c.bf16 %v109, %v109
    %v118 = vpack.c.bf16 %v110, %v110
    %v119 = vld [vmem:[#allocation5] sm:$0xff]
    %v120 = vld [vmem:[#allocation5 + $0x8] sm:$0xff]
    %v121 = vld [vmem:[#allocation5 + $0x10] sm:$0xf]
    %v122 = vld [vmem:[#allocation5 + $0x14] sm:$0xff]
    %v123 = vld [vmem:[#allocation5 + $0x1c] sm:$0xff]
    %v124 = vld [vmem:[#allocation5 + $0x24] sm:$0xf]
    %v125 = vld [vmem:[#allocation5 + $0x28] sm:$0xff]
    %v126 = vld [vmem:[#allocation5 + $0x30] sm:$0xff]
    %v127 = vld [vmem:[#allocation5 + $0x38] sm:$0xf]
    %v128 = vld [vmem:[#allocation5 + $0x3c] sm:$0xff]
    %v129 = vld [vmem:[#allocation5 + $0x44] sm:$0xff]
    %v130 = vld [vmem:[#allocation5 + $0x4c] sm:$0xf]
    %v131 = vld [vmem:[#allocation5 + $0x50] sm:$0xff]
    %v132 = vld [vmem:[#allocation5 + $0x58] sm:$0xff]
    %v133 = vld [vmem:[#allocation5 + $0x60] sm:$0xf]
    %v134 = vld [vmem:[#allocation5 + $0x64] sm:$0xff]
    %v135 = vld [vmem:[#allocation5 + $0x6c] sm:$0xff]
    %v136 = vld [vmem:[#allocation5 + $0x74] sm:$0xf]
    %v137 = vld [vmem:[#allocation5 + $0x78] sm:$0xff]
    %v138 = vld [vmem:[#allocation5 + $0x80] sm:$0xff]
    %v139 = vld [vmem:[#allocation5 + $0x88] sm:$0xf]
    %v140 = vld [vmem:[#allocation5 + $0x8c] sm:$0xff]
    %v141 = vld [vmem:[#allocation5 + $0x94] sm:$0xff]
    %v142 = vld [vmem:[#allocation5 + $0x9c] sm:$0xf]
    %v143 = vld [vmem:[#allocation5 + $0xa0] sm:$0xff]
    %v144 = vld [vmem:[#allocation5 + $0xa8] sm:$0xff]
    %v145 = vld [vmem:[#allocation5 + $0xb0] sm:$0xf]
    %v146 = vld [vmem:[#allocation5 + $0xb4] sm:$0xff]
    %v147 = vld [vmem:[#allocation5 + $0xbc] sm:$0xff]
    %v148 = vld [vmem:[#allocation5 + $0xc4] sm:$0xf]
    %v149 = vld [vmem:[#allocation5 + $0xc8] sm:$0xff]
    %v150 = vld [vmem:[#allocation5 + $0xd0] sm:$0xff]
    %v151 = vld [vmem:[#allocation5 + $0xd8] sm:$0xf]
    %v152 = vld [vmem:[#allocation5 + $0xdc] sm:$0xff]
    %v153 = vld [vmem:[#allocation5 + $0xe4] sm:$0xff]
    %v154 = vld [vmem:[#allocation5 + $0xec] sm:$0xf]
    %v155 = vld [vmem:[#allocation5 + $0xf0] sm:$0xff]
    %v156 = vld [vmem:[#allocation5 + $0xf8] sm:$0xff]
    %v157 = vld [vmem:[#allocation5 + $0x100] sm:$0xf]
    %v158 = vld [vmem:[#allocation5 + $0x104] sm:$0xff]
    %v159 = vld [vmem:[#allocation5 + $0x10c] sm:$0xff]
    %v160 = vld [vmem:[#allocation5 + $0x114] sm:$0xf]
    %v161 = vld [vmem:[#allocation5 + $0x118] sm:$0xff]
    %v162 = vld [vmem:[#allocation5 + $0x120] sm:$0xff]
    %v163 = vld [vmem:[#allocation5 + $0x128] sm:$0xf]
    %v164 = vld [vmem:[#allocation5 + $0x12c] sm:$0xff]
    %v165 = vld [vmem:[#allocation5 + $0x134] sm:$0xff]
    %v166 = vld [vmem:[#allocation5 + $0x13c] sm:$0xf]
    %v167 = vld [vmem:[#allocation5 + $0x140] sm:$0xff]
    %v168 = vld [vmem:[#allocation5 + $0x148] sm:$0xff]
    %v169 = vld [vmem:[#allocation5 + $0x150] sm:$0xf]
    %v170 = vld [vmem:[#allocation5 + $0x154] sm:$0xff]
    %v171 = vld [vmem:[#allocation5 + $0x15c] sm:$0xff]
    %v172 = vld [vmem:[#allocation5 + $0x164] sm:$0xf]
    %v173 = vld [vmem:[#allocation5 + $0x168] sm:$0xff]
    %v174 = vld [vmem:[#allocation5 + $0x170] sm:$0xff]
    %v175 = vld [vmem:[#allocation5 + $0x178] sm:$0xf]
    %v176 = vld [vmem:[#allocation5 + $0x17c] sm:$0xff]
    %v177 = vld [vmem:[#allocation5 + $0x184] sm:$0xff]
    %v178 = vld [vmem:[#allocation5 + $0x18c] sm:$0xf]
    %v179 = vld [vmem:[#allocation5 + $0x190] sm:$0xff]
    %v180 = vld [vmem:[#allocation5 + $0x198] sm:$0xff]
    %v181 = vld [vmem:[#allocation5 + $0x1a0] sm:$0xf]
    %v182 = vld [vmem:[#allocation5 + $0x1a4] sm:$0xff]
    %v183 = vld [vmem:[#allocation5 + $0x1ac] sm:$0xff]
    %v184 = vld [vmem:[#allocation5 + $0x1b4] sm:$0xf]
    %v185 = vld [vmem:[#allocation5 + $0x1b8] sm:$0xff]
    %v186 = vld [vmem:[#allocation5 + $0x1c0] sm:$0xff]
    %v187 = vld [vmem:[#allocation5 + $0x1c8] sm:$0xf]
    %v188 = vld [vmem:[#allocation5 + $0x1cc] sm:$0xff]
    %v189 = vld [vmem:[#allocation5 + $0x1d4] sm:$0xff]
    %v190 = vld [vmem:[#allocation5 + $0x1dc] sm:$0xf]
    %v191 = vld [vmem:[#allocation5 + $0x1e0] sm:$0xff]
    %v192 = vld [vmem:[#allocation5 + $0x1e8] sm:$0xff]
    %v193 = vld [vmem:[#allocation5 + $0x1f0] sm:$0xf]
    %v194 = vld [vmem:[#allocation5 + $0x1f4] sm:$0xff]
    %v195 = vld [vmem:[#allocation5 + $0x1fc] sm:$0xff]
    %v196 = vld [vmem:[#allocation5 + $0x204] sm:$0xf]
    %v197 = vld [vmem:[#allocation5 + $0x208] sm:$0xff]
    %v198 = vld [vmem:[#allocation5 + $0x210] sm:$0xff]
    %v199 = vld [vmem:[#allocation5 + $0x218] sm:$0xf]
    %v200 = vld [vmem:[#allocation5 + $0x21c] sm:$0xff]
    %v201 = vld [vmem:[#allocation5 + $0x224] sm:$0xff]
    %v202 = vld [vmem:[#allocation5 + $0x22c] sm:$0xf]
    %v203 = vld [vmem:[#allocation5 + $0x230] sm:$0xff]
    %v204 = vld [vmem:[#allocation5 + $0x238] sm:$0xff]
    %v205 = vld [vmem:[#allocation5 + $0x240] sm:$0xf]
    %v206 = vld [vmem:[#allocation5 + $0x244] sm:$0xff]
    %v207 = vld [vmem:[#allocation5 + $0x24c] sm:$0xff]
    %v208 = vld [vmem:[#allocation5 + $0x254] sm:$0xf]
    %v209 = vld [vmem:[#allocation5 + $0x258] sm:$0xff]
    %v210 = vld [vmem:[#allocation5 + $0x260] sm:$0xff]
    %v211 = vld [vmem:[#allocation5 + $0x268] sm:$0xf]
    %v212 = vld [vmem:[#allocation5 + $0x26c] sm:$0xff]
    %v213 = vld [vmem:[#allocation5 + $0x274] sm:$0xff]
    %v214 = vld [vmem:[#allocation5 + $0x27c] sm:$0xf]
    %v215 = vld [vmem:[#allocation5 + $0x280] sm:$0xff]
    %v216 = vld [vmem:[#allocation5 + $0x288] sm:$0xff]
    %v217 = vld [vmem:[#allocation5 + $0x290] sm:$0xf]
    %v218 = vld [vmem:[#allocation5 + $0x294] sm:$0xff]
    %v219 = vld [vmem:[#allocation5 + $0x29c] sm:$0xff]
    %v220 = vld [vmem:[#allocation5 + $0x2a4] sm:$0xf]
    %v221 = vld [vmem:[#allocation5 + $0x2a8] sm:$0xff]
    %v222 = vld [vmem:[#allocation5 + $0x2b0] sm:$0xff]
    %v223 = vld [vmem:[#allocation5 + $0x2b8] sm:$0xf]
    %v224 = vld [vmem:[#allocation5 + $0x2bc] sm:$0xff]
    %v225 = vld [vmem:[#allocation5 + $0x2c4] sm:$0xff]
    %v226 = vld [vmem:[#allocation5 + $0x2cc] sm:$0xf]
    %v227 = vld [vmem:[#allocation5 + $0x2d0] sm:$0xff]
    %v228 = vld [vmem:[#allocation5 + $0x2d8] sm:$0xff]
    %v229 = vld [vmem:[#allocation5 + $0x2e0] sm:$0xf]
    %v230 = vld [vmem:[#allocation5 + $0x2e4] sm:$0xff]
    %v231 = vld [vmem:[#allocation5 + $0x2ec] sm:$0xff]
    %v232 = vld [vmem:[#allocation5 + $0x2f4] sm:$0xf]
    %v233 = vld [vmem:[#allocation5 + $0x2f8] sm:$0xff]
    %v234 = vld [vmem:[#allocation5 + $0x300] sm:$0xff]
    %v235 = vld [vmem:[#allocation5 + $0x308] sm:$0xf]
    %v236 = vld [vmem:[#allocation5 + $0x30c] sm:$0xff]
    %v237 = vld [vmem:[#allocation5 + $0x314] sm:$0xff]
    %v238 = vld [vmem:[#allocation5 + $0x31c] sm:$0xf]
    %v239 = vld [vmem:[#allocation5 + $0x320] sm:$0xff]
    %v240 = vld [vmem:[#allocation5 + $0x328] sm:$0xff]
    %v241 = vld [vmem:[#allocation5 + $0x330] sm:$0xf]
    %v242 = vld [vmem:[#allocation5 + $0x334] sm:$0xff]
    %v243 = vld [vmem:[#allocation5 + $0x33c] sm:$0xff]
    %v244 = vld [vmem:[#allocation5 + $0x344] sm:$0xf]
    %v245 = vld [vmem:[#allocation5 + $0x348] sm:$0xff]
    %v246 = vld [vmem:[#allocation5 + $0x350] sm:$0xff]
    %v247 = vld [vmem:[#allocation5 + $0x358] sm:$0xf]
    %v248 = vld [vmem:[#allocation5 + $0x35c] sm:$0xff]
    %v249 = vld [vmem:[#allocation5 + $0x364] sm:$0xff]
    %v250 = vld [vmem:[#allocation5 + $0x36c] sm:$0xf]
    %v251 = vld [vmem:[#allocation5 + $0x370] sm:$0xff]
    %v252 = vld [vmem:[#allocation5 + $0x378] sm:$0xff]
    %v253 = vld [vmem:[#allocation5 + $0x380] sm:$0xf]
    %v254 = vld [vmem:[#allocation5 + $0x384] sm:$0xff]
    %v255 = vld [vmem:[#allocation5 + $0x38c] sm:$0xff]
    %v256 = vld [vmem:[#allocation5 + $0x394] sm:$0xf]
    %v257 = vld [vmem:[#allocation5 + $0x398] sm:$0xff]
    %v258 = vld [vmem:[#allocation5 + $0x3a0] sm:$0xff]
    %v259 = vld [vmem:[#allocation5 + $0x3a8] sm:$0xf]
    %v260 = vld [vmem:[#allocation5 + $0x3ac] sm:$0xff]
    %v261 = vld [vmem:[#allocation5 + $0x3b4] sm:$0xff]
    %v262 = vld [vmem:[#allocation5 + $0x3bc] sm:$0xf]
    %v263 = vld [vmem:[#allocation5 + $0x3c0] sm:$0xff]
    %v264 = vld [vmem:[#allocation5 + $0x3c8] sm:$0xff]
    %v265 = vld [vmem:[#allocation5 + $0x3d0] sm:$0xf]
    %v266 = vld [vmem:[#allocation5 + $0x3d4] sm:$0xff]
    %v267 = vld [vmem:[#allocation5 + $0x3dc] sm:$0xff]
    %v268 = vld [vmem:[#allocation5 + $0x3e4] sm:$0xf]
    %v269 = vld [vmem:[#allocation5 + $0x3e8] sm:$0xff]
    %v270 = vld [vmem:[#allocation5 + $0x3f0] sm:$0xff]
    %v271 = vld [vmem:[#allocation5 + $0x3f8] sm:$0xf]
    %v272 = vld [vmem:[#allocation5 + $0x3fc] sm:$0xff]
    %v273 = vld [vmem:[#allocation5 + $0x404] sm:$0xff]
    %v274 = vld [vmem:[#allocation5 + $0x40c] sm:$0xf]
    %v275 = vld [vmem:[#allocation5 + $0x410] sm:$0xff]
    %v276 = vld [vmem:[#allocation5 + $0x418] sm:$0xff]
    %v277 = vld [vmem:[#allocation5 + $0x420] sm:$0xf]
    %v278 = vld [vmem:[#allocation5 + $0x424] sm:$0xff]
    %v279 = vld [vmem:[#allocation5 + $0x42c] sm:$0xff]
    %v280 = vld [vmem:[#allocation5 + $0x434] sm:$0xf]
    %v281 = vld [vmem:[#allocation5 + $0x438] sm:$0xff]
    %v282 = vld [vmem:[#allocation5 + $0x440] sm:$0xff]
    %v283 = vld [vmem:[#allocation5 + $0x448] sm:$0xf]
    %v284 = vld [vmem:[#allocation5 + $0x44c] sm:$0xff]
    %v285 = vld [vmem:[#allocation5 + $0x454] sm:$0xff]
    %v286 = vld [vmem:[#allocation5 + $0x45c] sm:$0xf]
    %v287 = vld [vmem:[#allocation5 + $0x460] sm:$0xff]
    %v288 = vld [vmem:[#allocation5 + $0x468] sm:$0xff]
    %v289 = vld [vmem:[#allocation5 + $0x470] sm:$0xf]
    %v290 = vld [vmem:[#allocation5 + $0x474] sm:$0xff]
    %v291 = vld [vmem:[#allocation5 + $0x47c] sm:$0xff]
    %v292 = vld [vmem:[#allocation5 + $0x484] sm:$0xf]
    %v293 = vld [vmem:[#allocation5 + $0x488] sm:$0xff]
    %v294 = vld [vmem:[#allocation5 + $0x490] sm:$0xff]
    %v295 = vld [vmem:[#allocation5 + $0x498] sm:$0xf]
    %v296 = vld [vmem:[#allocation5 + $0x49c] sm:$0xff]
    %v297 = vld [vmem:[#allocation5 + $0x4a4] sm:$0xff]
    %v298 = vld [vmem:[#allocation5 + $0x4ac] sm:$0xf]
    %v299 = vld [vmem:[#allocation5 + $0x4b0] sm:$0xff]
    %v300 = vld [vmem:[#allocation5 + $0x4b8] sm:$0xff]
    %v301 = vld [vmem:[#allocation5 + $0x4c0] sm:$0xf]
    %v302 = vld [vmem:[#allocation5 + $0x4c4] sm:$0xff]
    %v303 = vld [vmem:[#allocation5 + $0x4cc] sm:$0xff]
    %v304 = vld [vmem:[#allocation5 + $0x4d4] sm:$0xf]
    %v305 = vld [vmem:[#allocation5 + $0x4d8] sm:$0xff]
    %v306 = vld [vmem:[#allocation5 + $0x4e0] sm:$0xff]
    %v307 = vld [vmem:[#allocation5 + $0x4e8] sm:$0xf]
    %v308 = vld [vmem:[#allocation5 + $0x4ec] sm:$0xff]
    %v309 = vld [vmem:[#allocation5 + $0x4f4] sm:$0xff]
    %v310 = vld [vmem:[#allocation5 + $0x4fc] sm:$0xf]
    %v311 = vld [vmem:[#allocation5 + $0x500] sm:$0xff]
    %v312 = vld [vmem:[#allocation5 + $0x508] sm:$0xff]
    %v313 = vld [vmem:[#allocation5 + $0x510] sm:$0xf]
    %v314 = vld [vmem:[#allocation5 + $0x514] sm:$0xff]
    %v315 = vld [vmem:[#allocation5 + $0x51c] sm:$0xff]
    %v316 = vld [vmem:[#allocation5 + $0x524] sm:$0xf]
    %v317 = vld [vmem:[#allocation5 + $0x528] sm:$0xff]
    %v318 = vld [vmem:[#allocation5 + $0x530] sm:$0xff]
    %v319 = vld [vmem:[#allocation5 + $0x538] sm:$0xf]
    %v320 = vld [vmem:[#allocation5 + $0x53c] sm:$0xff]
    %v321 = vld [vmem:[#allocation5 + $0x544] sm:$0xff]
    %v322 = vld [vmem:[#allocation5 + $0x54c] sm:$0xf]
    %v323 = vld [vmem:[#allocation5 + $0x550] sm:$0xff]
    %v324 = vld [vmem:[#allocation5 + $0x558] sm:$0xff]
    %v325 = vld [vmem:[#allocation5 + $0x560] sm:$0xf]
    %v326 = vld [vmem:[#allocation5 + $0x564] sm:$0xff]
    %v327 = vld [vmem:[#allocation5 + $0x56c] sm:$0xff]
    %v328 = vld [vmem:[#allocation5 + $0x574] sm:$0xf]
    %v329 = vld [vmem:[#allocation5 + $0x578] sm:$0xff]
    %v330 = vld [vmem:[#allocation5 + $0x580] sm:$0xff]
    %v331 = vld [vmem:[#allocation5 + $0x588] sm:$0xf]
    %v332 = vld [vmem:[#allocation5 + $0x58c] sm:$0xff]
    %v333 = vld [vmem:[#allocation5 + $0x594] sm:$0xff]
    %v334 = vld [vmem:[#allocation5 + $0x59c] sm:$0xf]
    %v335 = vld [vmem:[#allocation5 + $0x5a0] sm:$0xff]
    %v336 = vld [vmem:[#allocation5 + $0x5a8] sm:$0xff]
    %v337 = vld [vmem:[#allocation5 + $0x5b0] sm:$0xf]
    %v338 = vld [vmem:[#allocation5 + $0x5b4] sm:$0xff]
    %v339 = vld [vmem:[#allocation5 + $0x5bc] sm:$0xff]
    %v340 = vld [vmem:[#allocation5 + $0x5c4] sm:$0xf]
    %v341 = vld [vmem:[#allocation5 + $0x5c8] sm:$0xff]
    %v342 = vld [vmem:[#allocation5 + $0x5d0] sm:$0xff]
    %v343 = vld [vmem:[#allocation5 + $0x5d8] sm:$0xf]
    %v344 = vld [vmem:[#allocation5 + $0x5dc] sm:$0xff]
    %v345 = vld [vmem:[#allocation5 + $0x5e4] sm:$0xff]
    %v346 = vld [vmem:[#allocation5 + $0x5ec] sm:$0xf]
    %v347 = vld [vmem:[#allocation5 + $0x5f0] sm:$0xff]
    %v348 = vld [vmem:[#allocation5 + $0x5f8] sm:$0xff]
    %v349 = vld [vmem:[#allocation5 + $0x600] sm:$0xf]
    %v350 = vld [vmem:[#allocation5 + $0x604] sm:$0xff]
    %v351 = vld [vmem:[#allocation5 + $0x60c] sm:$0xff]
    %v352 = vld [vmem:[#allocation5 + $0x614] sm:$0xf]
    %v353 = vld [vmem:[#allocation5 + $0x618] sm:$0xff]
    %v354 = vld [vmem:[#allocation5 + $0x620] sm:$0xff]
    %v355 = vld [vmem:[#allocation5 + $0x628] sm:$0xf]
    %v356 = vld [vmem:[#allocation5 + $0x62c] sm:$0xff]
    %v357 = vld [vmem:[#allocation5 + $0x634] sm:$0xff]
    %v358 = vld [vmem:[#allocation5 + $0x63c] sm:$0xf]
    %v359 = vld [vmem:[#allocation5 + $0x640] sm:$0xff]
    %v360 = vld [vmem:[#allocation5 + $0x648] sm:$0xff]
    %v361 = vld [vmem:[#allocation5 + $0x650] sm:$0xf]
    %v362 = vld [vmem:[#allocation5 + $0x654] sm:$0xff]
    %v363 = vld [vmem:[#allocation5 + $0x65c] sm:$0xff]
    %v364 = vld [vmem:[#allocation5 + $0x664] sm:$0xf]
    %v365 = vld [vmem:[#allocation5 + $0x668] sm:$0xff]
    %v366 = vld [vmem:[#allocation5 + $0x670] sm:$0xff]
    %v367 = vld [vmem:[#allocation5 + $0x678] sm:$0xf]
    %v368 = vld [vmem:[#allocation5 + $0x67c] sm:$0xff]
    %v369 = vld [vmem:[#allocation5 + $0x684] sm:$0xff]
    %v370 = vld [vmem:[#allocation5 + $0x68c] sm:$0xf]
    %v371 = vld [vmem:[#allocation5 + $0x690] sm:$0xff]
    %v372 = vld [vmem:[#allocation5 + $0x698] sm:$0xff]
    %v373 = vld [vmem:[#allocation5 + $0x6a0] sm:$0xf]
    %v374 = vld [vmem:[#allocation5 + $0x6a4] sm:$0xff]
    %v375 = vld [vmem:[#allocation5 + $0x6ac] sm:$0xff]
    %v376 = vld [vmem:[#allocation5 + $0x6b4] sm:$0xf]
    %v377 = vld [vmem:[#allocation5 + $0x6b8] sm:$0xff]
    %v378 = vld [vmem:[#allocation5 + $0x6c0] sm:$0xff]
    %v379 = vld [vmem:[#allocation5 + $0x6c8] sm:$0xf]
    %v380 = vld [vmem:[#allocation5 + $0x6cc] sm:$0xff]
    %v381 = vld [vmem:[#allocation5 + $0x6d4] sm:$0xff]
    %v382 = vld [vmem:[#allocation5 + $0x6dc] sm:$0xf]
    %v383 = vld [vmem:[#allocation5 + $0x6e0] sm:$0xff]
    %v384 = vld [vmem:[#allocation5 + $0x6e8] sm:$0xff]
    %v385 = vld [vmem:[#allocation5 + $0x6f0] sm:$0xf]
    %v386 = vld [vmem:[#allocation5 + $0x6f4] sm:$0xff]
    %v387 = vld [vmem:[#allocation5 + $0x6fc] sm:$0xff]
    %v388 = vld [vmem:[#allocation5 + $0x704] sm:$0xf]
    %v389 = vld [vmem:[#allocation5 + $0x708] sm:$0xff]
    %v390 = vld [vmem:[#allocation5 + $0x710] sm:$0xff]
    %v391 = vld [vmem:[#allocation5 + $0x718] sm:$0xf]
    %v392 = vld [vmem:[#allocation5 + $0x71c] sm:$0xff]
    %v393 = vld [vmem:[#allocation5 + $0x724] sm:$0xff]
    %v394 = vld [vmem:[#allocation5 + $0x72c] sm:$0xf]
    %v395 = vld [vmem:[#allocation5 + $0x730] sm:$0xff]
    %v396 = vld [vmem:[#allocation5 + $0x738] sm:$0xff]
    %v397 = vld [vmem:[#allocation5 + $0x740] sm:$0xf]
    %v398 = vld [vmem:[#allocation5 + $0x744] sm:$0xff]
    %v399 = vld [vmem:[#allocation5 + $0x74c] sm:$0xff]
    %v400 = vld [vmem:[#allocation5 + $0x754] sm:$0xf]
    %v401 = vld [vmem:[#allocation5 + $0x758] sm:$0xff]
    %v402 = vld [vmem:[#allocation5 + $0x760] sm:$0xff]
    %v403 = vld [vmem:[#allocation5 + $0x768] sm:$0xf]
    %v404 = vld [vmem:[#allocation5 + $0x76c] sm:$0xff]
    %v405 = vld [vmem:[#allocation5 + $0x774] sm:$0xff]
    %v406 = vld [vmem:[#allocation5 + $0x77c] sm:$0xf]
    %v407 = vld [vmem:[#allocation5 + $0x780] sm:$0xff]
    %v408 = vld [vmem:[#allocation5 + $0x788] sm:$0xff]
    %v409 = vld [vmem:[#allocation5 + $0x790] sm:$0xf]
    %v410 = vld [vmem:[#allocation5 + $0x794] sm:$0xff]
    %v411 = vld [vmem:[#allocation5 + $0x79c] sm:$0xff]
    %v412 = vld [vmem:[#allocation5 + $0x7a4] sm:$0xf]
    %v413 = vld [vmem:[#allocation5 + $0x7a8] sm:$0xff]
    %v414 = vld [vmem:[#allocation5 + $0x7b0] sm:$0xff]
    %v415 = vld [vmem:[#allocation5 + $0x7b8] sm:$0xf]
    %v416 = vld [vmem:[#allocation5 + $0x7bc] sm:$0xff]
    %v417 = vld [vmem:[#allocation5 + $0x7c4] sm:$0xff]
    %v418 = vld [vmem:[#allocation5 + $0x7cc] sm:$0xf]
    %v419 = vld [vmem:[#allocation5 + $0x7d0] sm:$0xff]
    %v420 = vld [vmem:[#allocation5 + $0x7d8] sm:$0xff]
    %v421 = vld [vmem:[#allocation5 + $0x7e0] sm:$0xf]
    %v422 = vld [vmem:[#allocation5 + $0x7e4] sm:$0xff]
    %v423 = vld [vmem:[#allocation5 + $0x7ec] sm:$0xff]
    %v424 = vld [vmem:[#allocation5 + $0x7f4] sm:$0xf]
    %v425 = vld [vmem:[#allocation5 + $0x7f8] sm:$0xff]
    %v426 = vld [vmem:[#allocation5 + $0x800] sm:$0xff]
    %v427 = vld [vmem:[#allocation5 + $0x808] sm:$0xf]
    %v428 = vld [vmem:[#allocation5 + $0x80c] sm:$0xff]
    %v429 = vld [vmem:[#allocation5 + $0x814] sm:$0xff]
    %v430 = vld [vmem:[#allocation5 + $0x81c] sm:$0xf]
    %v431 = vld [vmem:[#allocation5 + $0x820] sm:$0xff]
    %v432 = vld [vmem:[#allocation5 + $0x828] sm:$0xff]
    %v433 = vld [vmem:[#allocation5 + $0x830] sm:$0xf]
    %v434 = vld [vmem:[#allocation5 + $0x834] sm:$0xff]
    %v435 = vld [vmem:[#allocation5 + $0x83c] sm:$0xff]
    %v436 = vld [vmem:[#allocation5 + $0x844] sm:$0xf]
    %v437 = vld [vmem:[#allocation5 + $0x848] sm:$0xff]
    %v438 = vld [vmem:[#allocation5 + $0x850] sm:$0xff]
    %v439 = vld [vmem:[#allocation5 + $0x858] sm:$0xf]
    %v440 = vld [vmem:[#allocation5 + $0x85c] sm:$0xff]
    %v441 = vld [vmem:[#allocation5 + $0x864] sm:$0xff]
    %v442 = vld [vmem:[#allocation5 + $0x86c] sm:$0xf]
    %v443 = vld [vmem:[#allocation5 + $0x870] sm:$0xff]
    %v444 = vld [vmem:[#allocation5 + $0x878] sm:$0xff]
    %v445 = vld [vmem:[#allocation5 + $0x880] sm:$0xf]
    %v446 = vld [vmem:[#allocation5 + $0x884] sm:$0xff]
    %v447 = vld [vmem:[#allocation5 + $0x88c] sm:$0xff]
    %v448 = vld [vmem:[#allocation5 + $0x894] sm:$0xf]
    %v449 = vld [vmem:[#allocation5 + $0x898] sm:$0xff]
    %v450 = vld [vmem:[#allocation5 + $0x8a0] sm:$0xff]
    %v451 = vld [vmem:[#allocation5 + $0x8a8] sm:$0xf]
    %v452 = vld [vmem:[#allocation5 + $0x8ac] sm:$0xff]
    %v453 = vld [vmem:[#allocation5 + $0x8b4] sm:$0xff]
    %v454 = vld [vmem:[#allocation5 + $0x8bc] sm:$0xf]
    %v455 = vld [vmem:[#allocation5 + $0x8c0] sm:$0xff]
    %v456 = vld [vmem:[#allocation5 + $0x8c8] sm:$0xff]
    %v457 = vld [vmem:[#allocation5 + $0x8d0] sm:$0xf]
    %v458 = vld [vmem:[#allocation5 + $0x8d4] sm:$0xff]
    %v459 = vld [vmem:[#allocation5 + $0x8dc] sm:$0xff]
    %v460 = vld [vmem:[#allocation5 + $0x8e4] sm:$0xf]
    %v461 = vld [vmem:[#allocation5 + $0x8e8] sm:$0xff]
    %v462 = vld [vmem:[#allocation5 + $0x8f0] sm:$0xff]
    %v463 = vld [vmem:[#allocation5 + $0x8f8] sm:$0xf]
    %v464 = vld [vmem:[#allocation5 + $0x8fc] sm:$0xff]
    %v465 = vld [vmem:[#allocation5 + $0x904] sm:$0xff]
    %v466 = vld [vmem:[#allocation5 + $0x90c] sm:$0xf]
    %v467 = vld [vmem:[#allocation5 + $0x910] sm:$0xff]
    %v468 = vld [vmem:[#allocation5 + $0x918] sm:$0xff]
    %v469 = vld [vmem:[#allocation5 + $0x920] sm:$0xf]
    %v470 = vld [vmem:[#allocation5 + $0x924] sm:$0xff]
    %v471 = vld [vmem:[#allocation5 + $0x92c] sm:$0xff]
    %v472 = vld [vmem:[#allocation5 + $0x934] sm:$0xf]
    %v473 = vld [vmem:[#allocation5 + $0x938] sm:$0xff]
    %v474 = vld [vmem:[#allocation5 + $0x940] sm:$0xff]
    %v475 = vld [vmem:[#allocation5 + $0x948] sm:$0xf]
    %v476 = vld [vmem:[#allocation5 + $0x94c] sm:$0xff]
    %v477 = vld [vmem:[#allocation5 + $0x954] sm:$0xff]
    %v478 = vld [vmem:[#allocation5 + $0x95c] sm:$0xf]
    %v479 = vld [vmem:[#allocation5 + $0x960] sm:$0xff]
    %v480 = vld [vmem:[#allocation5 + $0x968] sm:$0xff]
    %v481 = vld [vmem:[#allocation5 + $0x970] sm:$0xf]
    %v482 = vld [vmem:[#allocation5 + $0x974] sm:$0xff]
    %v483 = vld [vmem:[#allocation5 + $0x97c] sm:$0xff]
    %v484 = vld [vmem:[#allocation5 + $0x984] sm:$0xf]
    %v485 = vld [vmem:[#allocation5 + $0x988] sm:$0xff]
    %v486 = vld [vmem:[#allocation5 + $0x990] sm:$0xff]
    %v487 = vld [vmem:[#allocation5 + $0x998] sm:$0xf]
    %v488 = vld [vmem:[#allocation5 + $0x99c] sm:$0xff]
    %v489 = vld [vmem:[#allocation5 + $0x9a4] sm:$0xff]
    %v490 = vld [vmem:[#allocation5 + $0x9ac] sm:$0xf]
    %v491 = vld [vmem:[#allocation5 + $0x9b0] sm:$0xff]
    %v492 = vld [vmem:[#allocation5 + $0x9b8] sm:$0xff]
    %v493 = vld [vmem:[#allocation5 + $0x9c0] sm:$0xf]
    %v494 = vld [vmem:[#allocation5 + $0x9c4] sm:$0xff]
    %v495 = vld [vmem:[#allocation5 + $0x9cc] sm:$0xff]
    %v496 = vld [vmem:[#allocation5 + $0x9d4] sm:$0xf]
    %v497 = vld [vmem:[#allocation5 + $0x9d8] sm:$0xff]
    %v498 = vld [vmem:[#allocation5 + $0x9e0] sm:$0xff]
    %v499 = vld [vmem:[#allocation5 + $0x9e8] sm:$0xf]
    %v500 = vld [vmem:[#allocation5 + $0x9ec] sm:$0xff]
    %v501 = vld [vmem:[#allocation5 + $0x9f4] sm:$0xff]
    %v502 = vld [vmem:[#allocation5 + $0x9fc] sm:$0xf]
    %v503 = vld [vmem:[#allocation7] sm:$0x1f]
    %v505 = vlaneseq
    %v506 = vshrl.u32 %v505, 7
    %v507 = vsub.s32 0, %v506
    %v508 = vrot.slane %v503, %v507
    %v509 = vlaneseq
    %v510 = vshrl.u32 %v509, 7
    %v511 = vsub.s32 1, %v510
    %v512 = vrot.slane %v503, %v511
    %v513 = vlaneseq
    %v514 = vshrl.u32 %v513, 7
    %v515 = vsub.s32 2, %v514
    %v516 = vrot.slane %v503, %v515
    %v517 = vlaneseq
    %v518 = vshrl.u32 %v517, 7
    %v519 = vsub.s32 3, %v518
    %v520 = vrot.slane %v503, %v519
    %v521 = vlaneseq
    %v522 = vshrl.u32 %v521, 7
    %v523 = vsub.s32 4, %v522
    %v524 = vrot.slane %v503, %v523
    %v914 = vunpack.c.l.b16 %v119
    %v915 = vunpack.c.h.b16 %v119
    %v916 = vunpack.c.l.b16 %v120
    %v917 = vunpack.c.h.b16 %v120
    %v918 = vunpack.c.l.b16 %v121
    %v919 = vunpack.c.l.b16 %v122
    %v920 = vunpack.c.h.b16 %v122
    %v921 = vunpack.c.l.b16 %v123
    %v922 = vunpack.c.h.b16 %v123
    %v923 = vunpack.c.l.b16 %v124
    %v924 = vunpack.c.l.b16 %v125
    %v925 = vunpack.c.h.b16 %v125
    %v926 = vunpack.c.l.b16 %v126
    %v927 = vunpack.c.h.b16 %v126
    %v928 = vunpack.c.l.b16 %v127
    %v929 = vunpack.c.l.b16 %v128
    %v930 = vunpack.c.h.b16 %v128
    %v931 = vunpack.c.l.b16 %v129
    %v932 = vunpack.c.h.b16 %v129
    %v933 = vunpack.c.l.b16 %v130
    %v934 = vunpack.c.l.b16 %v131
    %v935 = vunpack.c.h.b16 %v131
    %v936 = vunpack.c.l.b16 %v132
    %v937 = vunpack.c.h.b16 %v132
    %v938 = vunpack.c.l.b16 %v133
    %v939 = vunpack.c.l.b16 %v134
    %v940 = vunpack.c.h.b16 %v134
    %v941 = vunpack.c.l.b16 %v135
    %v942 = vunpack.c.h.b16 %v135
    %v943 = vunpack.c.l.b16 %v136
    %v944 = vunpack.c.l.b16 %v137
    %v945 = vunpack.c.h.b16 %v137
    %v946 = vunpack.c.l.b16 %v138
    %v947 = vunpack.c.h.b16 %v138
    %v948 = vunpack.c.l.b16 %v139
    %v949 = vunpack.c.l.b16 %v140
    %v950 = vunpack.c.h.b16 %v140
    %v951 = vunpack.c.l.b16 %v141
    %v952 = vunpack.c.h.b16 %v141
    %v953 = vunpack.c.l.b16 %v142
    %v954 = vunpack.c.l.b16 %v143
    %v955 = vunpack.c.h.b16 %v143
    %v956 = vunpack.c.l.b16 %v144
    %v957 = vunpack.c.h.b16 %v144
    %v958 = vunpack.c.l.b16 %v145
    %v959 = vunpack.c.l.b16 %v146
    %v960 = vunpack.c.h.b16 %v146
    %v961 = vunpack.c.l.b16 %v147
    %v962 = vunpack.c.h.b16 %v147
    %v963 = vunpack.c.l.b16 %v148
    %v964 = vunpack.c.l.b16 %v149
    %v965 = vunpack.c.h.b16 %v149
    %v966 = vunpack.c.l.b16 %v150
    %v967 = vunpack.c.h.b16 %v150
    %v968 = vunpack.c.l.b16 %v151
    %v969 = vunpack.c.l.b16 %v152
    %v970 = vunpack.c.h.b16 %v152
    %v971 = vunpack.c.l.b16 %v153
    %v972 = vunpack.c.h.b16 %v153
    %v973 = vunpack.c.l.b16 %v154
    %v974 = vunpack.c.l.b16 %v155
    %v975 = vunpack.c.h.b16 %v155
    %v976 = vunpack.c.l.b16 %v156
    %v977 = vunpack.c.h.b16 %v156
    %v978 = vunpack.c.l.b16 %v157
    %v979 = vunpack.c.l.b16 %v158
    %v980 = vunpack.c.h.b16 %v158
    %v981 = vunpack.c.l.b16 %v159
    %v982 = vunpack.c.h.b16 %v159
    %v983 = vunpack.c.l.b16 %v160
    %v984 = vunpack.c.l.b16 %v161
    %v985 = vunpack.c.h.b16 %v161
    %v986 = vunpack.c.l.b16 %v162
    %v987 = vunpack.c.h.b16 %v162
    %v988 = vunpack.c.l.b16 %v163
    %v989 = vunpack.c.l.b16 %v164
    %v990 = vunpack.c.h.b16 %v164
    %v991 = vunpack.c.l.b16 %v165
    %v992 = vunpack.c.h.b16 %v165
    %v993 = vunpack.c.l.b16 %v166
    %v994 = vunpack.c.l.b16 %v167
    %v995 = vunpack.c.h.b16 %v167
    %v996 = vunpack.c.l.b16 %v168
    %v997 = vunpack.c.h.b16 %v168
    %v998 = vunpack.c.l.b16 %v169
    %v999 = vunpack.c.l.b16 %v170
    %v1000 = vunpack.c.h.b16 %v170
    %v1001 = vunpack.c.l.b16 %v171
    %v1002 = vunpack.c.h.b16 %v171
    %v1003 = vunpack.c.l.b16 %v172
    %v1004 = vunpack.c.l.b16 %v173
    %v1005 = vunpack.c.h.b16 %v173
    %v1006 = vunpack.c.l.b16 %v174
    %v1007 = vunpack.c.h.b16 %v174
    %v1008 = vunpack.c.l.b16 %v175
    %v1009 = vunpack.c.l.b16 %v176
    %v1010 = vunpack.c.h.b16 %v176
    %v1011 = vunpack.c.l.b16 %v177
    %v1012 = vunpack.c.h.b16 %v177
    %v1013 = vunpack.c.l.b16 %v178
    %v1014 = vunpack.c.l.b16 %v179
    %v1015 = vunpack.c.h.b16 %v179
    %v1016 = vunpack.c.l.b16 %v180
    %v1017 = vunpack.c.h.b16 %v180
    %v1018 = vunpack.c.l.b16 %v181
    %v1019 = vunpack.c.l.b16 %v182
    %v1020 = vunpack.c.h.b16 %v182
    %v1021 = vunpack.c.l.b16 %v183
    %v1022 = vunpack.c.h.b16 %v183
    %v1023 = vunpack.c.l.b16 %v184
    %v1024 = vunpack.c.l.b16 %v185
    %v1025 = vunpack.c.h.b16 %v185
    %v1026 = vunpack.c.l.b16 %v186
    %v1027 = vunpack.c.h.b16 %v186
    %v1028 = vunpack.c.l.b16 %v187
    %v1029 = vunpack.c.l.b16 %v188
    %v1030 = vunpack.c.h.b16 %v188
    %v1031 = vunpack.c.l.b16 %v189
    %v1032 = vunpack.c.h.b16 %v189
    %v1033 = vunpack.c.l.b16 %v190
    %v1034 = vunpack.c.l.b16 %v191
    %v1035 = vunpack.c.h.b16 %v191
    %v1036 = vunpack.c.l.b16 %v192
    %v1037 = vunpack.c.h.b16 %v192
    %v1038 = vunpack.c.l.b16 %v193
    %v1039 = vunpack.c.l.b16 %v194
    %v1040 = vunpack.c.h.b16 %v194
    %v1041 = vunpack.c.l.b16 %v195
    %v1042 = vunpack.c.h.b16 %v195
    %v1043 = vunpack.c.l.b16 %v196
    %v1044 = vunpack.c.l.b16 %v197
    %v1045 = vunpack.c.h.b16 %v197
    %v1046 = vunpack.c.l.b16 %v198
    %v1047 = vunpack.c.h.b16 %v198
    %v1048 = vunpack.c.l.b16 %v199
    %v1049 = vunpack.c.l.b16 %v200
    %v1050 = vunpack.c.h.b16 %v200
    %v1051 = vunpack.c.l.b16 %v201
    %v1052 = vunpack.c.h.b16 %v201
    %v1053 = vunpack.c.l.b16 %v202
    %v1054 = vunpack.c.l.b16 %v203
    %v1055 = vunpack.c.h.b16 %v203
    %v1056 = vunpack.c.l.b16 %v204
    %v1057 = vunpack.c.h.b16 %v204
    %v1058 = vunpack.c.l.b16 %v205
    %v1059 = vunpack.c.l.b16 %v206
    %v1060 = vunpack.c.h.b16 %v206
    %v1061 = vunpack.c.l.b16 %v207
    %v1062 = vunpack.c.h.b16 %v207
    %v1063 = vunpack.c.l.b16 %v208
    %v1064 = vunpack.c.l.b16 %v209
    %v1065 = vunpack.c.h.b16 %v209
    %v1066 = vunpack.c.l.b16 %v210
    %v1067 = vunpack.c.h.b16 %v210
    %v1068 = vunpack.c.l.b16 %v211
    %v1069 = vunpack.c.l.b16 %v212
    %v1070 = vunpack.c.h.b16 %v212
    %v1071 = vunpack.c.l.b16 %v213
    %v1072 = vunpack.c.h.b16 %v213
    %v1073 = vunpack.c.l.b16 %v214
    %v1074 = vunpack.c.l.b16 %v215
    %v1075 = vunpack.c.h.b16 %v215
    %v1076 = vunpack.c.l.b16 %v216
    %v1077 = vunpack.c.h.b16 %v216
    %v1078 = vunpack.c.l.b16 %v217
    %v1079 = vunpack.c.l.b16 %v218
    %v1080 = vunpack.c.h.b16 %v218
    %v1081 = vunpack.c.l.b16 %v219
    %v1082 = vunpack.c.h.b16 %v219
    %v1083 = vunpack.c.l.b16 %v220
    %v1084 = vunpack.c.l.b16 %v221
    %v1085 = vunpack.c.h.b16 %v221
    %v1086 = vunpack.c.l.b16 %v222
    %v1087 = vunpack.c.h.b16 %v222
    %v1088 = vunpack.c.l.b16 %v223
    %v1089 = vunpack.c.l.b16 %v224
    %v1090 = vunpack.c.h.b16 %v224
    %v1091 = vunpack.c.l.b16 %v225
    %v1092 = vunpack.c.h.b16 %v225
    %v1093 = vunpack.c.l.b16 %v226
    %v1094 = vunpack.c.l.b16 %v227
    %v1095 = vunpack.c.h.b16 %v227
    %v1096 = vunpack.c.l.b16 %v228
    %v1097 = vunpack.c.h.b16 %v228
    %v1098 = vunpack.c.l.b16 %v229
    %v1099 = vunpack.c.l.b16 %v230
    %v1100 = vunpack.c.h.b16 %v230
    %v1101 = vunpack.c.l.b16 %v231
    %v1102 = vunpack.c.h.b16 %v231
    %v1103 = vunpack.c.l.b16 %v232
    %v1104 = vunpack.c.l.b16 %v233
    %v1105 = vunpack.c.h.b16 %v233
    %v1106 = vunpack.c.l.b16 %v234
    %v1107 = vunpack.c.h.b16 %v234
    %v1108 = vunpack.c.l.b16 %v235
    %v1109 = vunpack.c.l.b16 %v236
    %v1110 = vunpack.c.h.b16 %v236
    %v1111 = vunpack.c.l.b16 %v237
    %v1112 = vunpack.c.h.b16 %v237
    %v1113 = vunpack.c.l.b16 %v238
    %v1114 = vunpack.c.l.b16 %v239
    %v1115 = vunpack.c.h.b16 %v239
    %v1116 = vunpack.c.l.b16 %v240
    %v1117 = vunpack.c.h.b16 %v240
    %v1118 = vunpack.c.l.b16 %v241
    %v1119 = vunpack.c.l.b16 %v242
    %v1120 = vunpack.c.h.b16 %v242
    %v1121 = vunpack.c.l.b16 %v243
    %v1122 = vunpack.c.h.b16 %v243
    %v1123 = vunpack.c.l.b16 %v244
    %v1124 = vunpack.c.l.b16 %v245
    %v1125 = vunpack.c.h.b16 %v245
    %v1126 = vunpack.c.l.b16 %v246
    %v1127 = vunpack.c.h.b16 %v246
    %v1128 = vunpack.c.l.b16 %v247
    %v1129 = vunpack.c.l.b16 %v248
    %v1130 = vunpack.c.h.b16 %v248
    %v1131 = vunpack.c.l.b16 %v249
    %v1132 = vunpack.c.h.b16 %v249
    %v1133 = vunpack.c.l.b16 %v250
    %v1134 = vunpack.c.l.b16 %v251
    %v1135 = vunpack.c.h.b16 %v251
    %v1136 = vunpack.c.l.b16 %v252
    %v1137 = vunpack.c.h.b16 %v252
    %v1138 = vunpack.c.l.b16 %v253
    %v1139 = vunpack.c.l.b16 %v254
    %v1140 = vunpack.c.h.b16 %v254
    %v1141 = vunpack.c.l.b16 %v255
    %v1142 = vunpack.c.h.b16 %v255
    %v1143 = vunpack.c.l.b16 %v256
    %v1144 = vunpack.c.l.b16 %v257
    %v1145 = vunpack.c.h.b16 %v257
    %v1146 = vunpack.c.l.b16 %v258
    %v1147 = vunpack.c.h.b16 %v258
    %v1148 = vunpack.c.l.b16 %v259
    %v1149 = vunpack.c.l.b16 %v260
    %v1150 = vunpack.c.h.b16 %v260
    %v1151 = vunpack.c.l.b16 %v261
    %v1152 = vunpack.c.h.b16 %v261
    %v1153 = vunpack.c.l.b16 %v262
    %v1154 = vunpack.c.l.b16 %v263
    %v1155 = vunpack.c.h.b16 %v263
    %v1156 = vunpack.c.l.b16 %v264
    %v1157 = vunpack.c.h.b16 %v264
    %v1158 = vunpack.c.l.b16 %v265
    %v1159 = vunpack.c.l.b16 %v266
    %v1160 = vunpack.c.h.b16 %v266
    %v1161 = vunpack.c.l.b16 %v267
    %v1162 = vunpack.c.h.b16 %v267
    %v1163 = vunpack.c.l.b16 %v268
    %v1164 = vunpack.c.l.b16 %v269
    %v1165 = vunpack.c.h.b16 %v269
    %v1166 = vunpack.c.l.b16 %v270
    %v1167 = vunpack.c.h.b16 %v270
    %v1168 = vunpack.c.l.b16 %v271
    %v1169 = vunpack.c.l.b16 %v272
    %v1170 = vunpack.c.h.b16 %v272
    %v1171 = vunpack.c.l.b16 %v273
    %v1172 = vunpack.c.h.b16 %v273
    %v1173 = vunpack.c.l.b16 %v274
    %v1174 = vunpack.c.l.b16 %v275
    %v1175 = vunpack.c.h.b16 %v275
    %v1176 = vunpack.c.l.b16 %v276
    %v1177 = vunpack.c.h.b16 %v276
    %v1178 = vunpack.c.l.b16 %v277
    %v1179 = vunpack.c.l.b16 %v278
    %v1180 = vunpack.c.h.b16 %v278
    %v1181 = vunpack.c.l.b16 %v279
    %v1182 = vunpack.c.h.b16 %v279
    %v1183 = vunpack.c.l.b16 %v280
    %v1184 = vunpack.c.l.b16 %v281
    %v1185 = vunpack.c.h.b16 %v281
    %v1186 = vunpack.c.l.b16 %v282
    %v1187 = vunpack.c.h.b16 %v282
    %v1188 = vunpack.c.l.b16 %v283
    %v1189 = vunpack.c.l.b16 %v284
    %v1190 = vunpack.c.h.b16 %v284
    %v1191 = vunpack.c.l.b16 %v285
    %v1192 = vunpack.c.h.b16 %v285
    %v1193 = vunpack.c.l.b16 %v286
    %v1194 = vunpack.c.l.b16 %v287
    %v1195 = vunpack.c.h.b16 %v287
    %v1196 = vunpack.c.l.b16 %v288
    %v1197 = vunpack.c.h.b16 %v288
    %v1198 = vunpack.c.l.b16 %v289
    %v1199 = vunpack.c.l.b16 %v290
    %v1200 = vunpack.c.h.b16 %v290
    %v1201 = vunpack.c.l.b16 %v291
    %v1202 = vunpack.c.h.b16 %v291
    %v1203 = vunpack.c.l.b16 %v292
    %v1204 = vunpack.c.l.b16 %v293
    %v1205 = vunpack.c.h.b16 %v293
    %v1206 = vunpack.c.l.b16 %v294
    %v1207 = vunpack.c.h.b16 %v294
    %v1208 = vunpack.c.l.b16 %v295
    %v1209 = vunpack.c.l.b16 %v296
    %v1210 = vunpack.c.h.b16 %v296
    %v1211 = vunpack.c.l.b16 %v297
    %v1212 = vunpack.c.h.b16 %v297
    %v1213 = vunpack.c.l.b16 %v298
    %v1214 = vunpack.c.l.b16 %v299
    %v1215 = vunpack.c.h.b16 %v299
    %v1216 = vunpack.c.l.b16 %v300
    %v1217 = vunpack.c.h.b16 %v300
    %v1218 = vunpack.c.l.b16 %v301
    %v1219 = vunpack.c.l.b16 %v302
    %v1220 = vunpack.c.h.b16 %v302
    %v1221 = vunpack.c.l.b16 %v303
    %v1222 = vunpack.c.h.b16 %v303
    %v1223 = vunpack.c.l.b16 %v304
    %v1224 = vunpack.c.l.b16 %v305
    %v1225 = vunpack.c.h.b16 %v305
    %v1226 = vunpack.c.l.b16 %v306
    %v1227 = vunpack.c.h.b16 %v306
    %v1228 = vunpack.c.l.b16 %v307
    %v1229 = vunpack.c.l.b16 %v308
    %v1230 = vunpack.c.h.b16 %v308
    %v1231 = vunpack.c.l.b16 %v309
    %v1232 = vunpack.c.h.b16 %v309
    %v1233 = vunpack.c.l.b16 %v310
    %v1234 = vunpack.c.l.b16 %v311
    %v1235 = vunpack.c.h.b16 %v311
    %v1236 = vunpack.c.l.b16 %v312
    %v1237 = vunpack.c.h.b16 %v312
    %v1238 = vunpack.c.l.b16 %v313
    %v1239 = vunpack.c.l.b16 %v314
    %v1240 = vunpack.c.h.b16 %v314
    %v1241 = vunpack.c.l.b16 %v315
    %v1242 = vunpack.c.h.b16 %v315
    %v1243 = vunpack.c.l.b16 %v316
    %v1244 = vunpack.c.l.b16 %v317
    %v1245 = vunpack.c.h.b16 %v317
    %v1246 = vunpack.c.l.b16 %v318
    %v1247 = vunpack.c.h.b16 %v318
    %v1248 = vunpack.c.l.b16 %v319
    %v1249 = vunpack.c.l.b16 %v320
    %v1250 = vunpack.c.h.b16 %v320
    %v1251 = vunpack.c.l.b16 %v321
    %v1252 = vunpack.c.h.b16 %v321
    %v1253 = vunpack.c.l.b16 %v322
    %v1254 = vunpack.c.l.b16 %v323
    %v1255 = vunpack.c.h.b16 %v323
    %v1256 = vunpack.c.l.b16 %v324
    %v1257 = vunpack.c.h.b16 %v324
    %v1258 = vunpack.c.l.b16 %v325
    %v1259 = vunpack.c.l.b16 %v326
    %v1260 = vunpack.c.h.b16 %v326
    %v1261 = vunpack.c.l.b16 %v327
    %v1262 = vunpack.c.h.b16 %v327
    %v1263 = vunpack.c.l.b16 %v328
    %v1264 = vunpack.c.l.b16 %v329
    %v1265 = vunpack.c.h.b16 %v329
    %v1266 = vunpack.c.l.b16 %v330
    %v1267 = vunpack.c.h.b16 %v330
    %v1268 = vunpack.c.l.b16 %v331
    %v1269 = vunpack.c.l.b16 %v332
    %v1270 = vunpack.c.h.b16 %v332
    %v1271 = vunpack.c.l.b16 %v333
    %v1272 = vunpack.c.h.b16 %v333
    %v1273 = vunpack.c.l.b16 %v334
    %v1274 = vunpack.c.l.b16 %v335
    %v1275 = vunpack.c.h.b16 %v335
    %v1276 = vunpack.c.l.b16 %v336
    %v1277 = vunpack.c.h.b16 %v336
    %v1278 = vunpack.c.l.b16 %v337
    %v1279 = vunpack.c.l.b16 %v338
    %v1280 = vunpack.c.h.b16 %v338
    %v1281 = vunpack.c.l.b16 %v339
    %v1282 = vunpack.c.h.b16 %v339
    %v1283 = vunpack.c.l.b16 %v340
    %v1284 = vunpack.c.l.b16 %v341
    %v1285 = vunpack.c.h.b16 %v341
    %v1286 = vunpack.c.l.b16 %v342
    %v1287 = vunpack.c.h.b16 %v342
    %v1288 = vunpack.c.l.b16 %v343
    %v1289 = vunpack.c.l.b16 %v344
    %v1290 = vunpack.c.h.b16 %v344
    %v1291 = vunpack.c.l.b16 %v345
    %v1292 = vunpack.c.h.b16 %v345
    %v1293 = vunpack.c.l.b16 %v346
    %v1294 = vunpack.c.l.b16 %v347
    %v1295 = vunpack.c.h.b16 %v347
    %v1296 = vunpack.c.l.b16 %v348
    %v1297 = vunpack.c.h.b16 %v348
    %v1298 = vunpack.c.l.b16 %v349
    %v1299 = vunpack.c.l.b16 %v350
    %v1300 = vunpack.c.h.b16 %v350
    %v1301 = vunpack.c.l.b16 %v351
    %v1302 = vunpack.c.h.b16 %v351
    %v1303 = vunpack.c.l.b16 %v352
    %v1304 = vunpack.c.l.b16 %v353
    %v1305 = vunpack.c.h.b16 %v353
    %v1306 = vunpack.c.l.b16 %v354
    %v1307 = vunpack.c.h.b16 %v354
    %v1308 = vunpack.c.l.b16 %v355
    %v1309 = vunpack.c.l.b16 %v356
    %v1310 = vunpack.c.h.b16 %v356
    %v1311 = vunpack.c.l.b16 %v357
    %v1312 = vunpack.c.h.b16 %v357
    %v1313 = vunpack.c.l.b16 %v358
    %v1314 = vunpack.c.l.b16 %v359
    %v1315 = vunpack.c.h.b16 %v359
    %v1316 = vunpack.c.l.b16 %v360
    %v1317 = vunpack.c.h.b16 %v360
    %v1318 = vunpack.c.l.b16 %v361
    %v1319 = vunpack.c.l.b16 %v362
    %v1320 = vunpack.c.h.b16 %v362
    %v1321 = vunpack.c.l.b16 %v363
    %v1322 = vunpack.c.h.b16 %v363
    %v1323 = vunpack.c.l.b16 %v364
    %v1324 = vunpack.c.l.b16 %v365
    %v1325 = vunpack.c.h.b16 %v365
    %v1326 = vunpack.c.l.b16 %v366
    %v1327 = vunpack.c.h.b16 %v366
    %v1328 = vunpack.c.l.b16 %v367
    %v1329 = vunpack.c.l.b16 %v368
    %v1330 = vunpack.c.h.b16 %v368
    %v1331 = vunpack.c.l.b16 %v369
    %v1332 = vunpack.c.h.b16 %v369
    %v1333 = vunpack.c.l.b16 %v370
    %v1334 = vunpack.c.l.b16 %v371
    %v1335 = vunpack.c.h.b16 %v371
    %v1336 = vunpack.c.l.b16 %v372
    %v1337 = vunpack.c.h.b16 %v372
    %v1338 = vunpack.c.l.b16 %v373
    %v1339 = vunpack.c.l.b16 %v374
    %v1340 = vunpack.c.h.b16 %v374
    %v1341 = vunpack.c.l.b16 %v375
    %v1342 = vunpack.c.h.b16 %v375
    %v1343 = vunpack.c.l.b16 %v376
    %v1344 = vunpack.c.l.b16 %v377
    %v1345 = vunpack.c.h.b16 %v377
    %v1346 = vunpack.c.l.b16 %v378
    %v1347 = vunpack.c.h.b16 %v378
    %v1348 = vunpack.c.l.b16 %v379
    %v1349 = vunpack.c.l.b16 %v380
    %v1350 = vunpack.c.h.b16 %v380
    %v1351 = vunpack.c.l.b16 %v381
    %v1352 = vunpack.c.h.b16 %v381
    %v1353 = vunpack.c.l.b16 %v382
    %v1354 = vunpack.c.l.b16 %v383
    %v1355 = vunpack.c.h.b16 %v383
    %v1356 = vunpack.c.l.b16 %v384
    %v1357 = vunpack.c.h.b16 %v384
    %v1358 = vunpack.c.l.b16 %v385
    %v1359 = vunpack.c.l.b16 %v386
    %v1360 = vunpack.c.h.b16 %v386
    %v1361 = vunpack.c.l.b16 %v387
    %v1362 = vunpack.c.h.b16 %v387
    %v1363 = vunpack.c.l.b16 %v388
    %v1364 = vunpack.c.l.b16 %v389
    %v1365 = vunpack.c.h.b16 %v389
    %v1366 = vunpack.c.l.b16 %v390
    %v1367 = vunpack.c.h.b16 %v390
    %v1368 = vunpack.c.l.b16 %v391
    %v1369 = vunpack.c.l.b16 %v392
    %v1370 = vunpack.c.h.b16 %v392
    %v1371 = vunpack.c.l.b16 %v393
    %v1372 = vunpack.c.h.b16 %v393
    %v1373 = vunpack.c.l.b16 %v394
    %v1374 = vunpack.c.l.b16 %v395
    %v1375 = vunpack.c.h.b16 %v395
    %v1376 = vunpack.c.l.b16 %v396
    %v1377 = vunpack.c.h.b16 %v396
    %v1378 = vunpack.c.l.b16 %v397
    %v1379 = vunpack.c.l.b16 %v398
    %v1380 = vunpack.c.h.b16 %v398
    %v1381 = vunpack.c.l.b16 %v399
    %v1382 = vunpack.c.h.b16 %v399
    %v1383 = vunpack.c.l.b16 %v400
    %v1384 = vunpack.c.l.b16 %v401
    %v1385 = vunpack.c.h.b16 %v401
    %v1386 = vunpack.c.l.b16 %v402
    %v1387 = vunpack.c.h.b16 %v402
    %v1388 = vunpack.c.l.b16 %v403
    %v1389 = vunpack.c.l.b16 %v404
    %v1390 = vunpack.c.h.b16 %v404
    %v1391 = vunpack.c.l.b16 %v405
    %v1392 = vunpack.c.h.b16 %v405
    %v1393 = vunpack.c.l.b16 %v406
    %v1394 = vunpack.c.l.b16 %v407
    %v1395 = vunpack.c.h.b16 %v407
    %v1396 = vunpack.c.l.b16 %v408
    %v1397 = vunpack.c.h.b16 %v408
    %v1398 = vunpack.c.l.b16 %v409
    %v1399 = vunpack.c.l.b16 %v410
    %v1400 = vunpack.c.h.b16 %v410
    %v1401 = vunpack.c.l.b16 %v411
    %v1402 = vunpack.c.h.b16 %v411
    %v1403 = vunpack.c.l.b16 %v412
    %v1404 = vunpack.c.l.b16 %v413
    %v1405 = vunpack.c.h.b16 %v413
    %v1406 = vunpack.c.l.b16 %v414
    %v1407 = vunpack.c.h.b16 %v414
    %v1408 = vunpack.c.l.b16 %v415
    %v1409 = vunpack.c.l.b16 %v416
    %v1410 = vunpack.c.h.b16 %v416
    %v1411 = vunpack.c.l.b16 %v417
    %v1412 = vunpack.c.h.b16 %v417
    %v1413 = vunpack.c.l.b16 %v418
    %v1414 = vunpack.c.l.b16 %v419
    %v1415 = vunpack.c.h.b16 %v419
    %v1416 = vunpack.c.l.b16 %v420
    %v1417 = vunpack.c.h.b16 %v420
    %v1418 = vunpack.c.l.b16 %v421
    %v1419 = vunpack.c.l.b16 %v422
    %v1420 = vunpack.c.h.b16 %v422
    %v1421 = vunpack.c.l.b16 %v423
    %v1422 = vunpack.c.h.b16 %v423
    %v1423 = vunpack.c.l.b16 %v424
    %v1424 = vunpack.c.l.b16 %v425
    %v1425 = vunpack.c.h.b16 %v425
    %v1426 = vunpack.c.l.b16 %v426
    %v1427 = vunpack.c.h.b16 %v426
    %v1428 = vunpack.c.l.b16 %v427
    %v1429 = vunpack.c.l.b16 %v428
    %v1430 = vunpack.c.h.b16 %v428
    %v1431 = vunpack.c.l.b16 %v429
    %v1432 = vunpack.c.h.b16 %v429
    %v1433 = vunpack.c.l.b16 %v430
    %v1434 = vunpack.c.l.b16 %v431
    %v1435 = vunpack.c.h.b16 %v431
    %v1436 = vunpack.c.l.b16 %v432
    %v1437 = vunpack.c.h.b16 %v432
    %v1438 = vunpack.c.l.b16 %v433
    %v1439 = vunpack.c.l.b16 %v434
    %v1440 = vunpack.c.h.b16 %v434
    %v1441 = vunpack.c.l.b16 %v435
    %v1442 = vunpack.c.h.b16 %v435
    %v1443 = vunpack.c.l.b16 %v436
    %v1444 = vunpack.c.l.b16 %v437
    %v1445 = vunpack.c.h.b16 %v437
    %v1446 = vunpack.c.l.b16 %v438
    %v1447 = vunpack.c.h.b16 %v438
    %v1448 = vunpack.c.l.b16 %v439
    %v1449 = vunpack.c.l.b16 %v440
    %v1450 = vunpack.c.h.b16 %v440
    %v1451 = vunpack.c.l.b16 %v441
    %v1452 = vunpack.c.h.b16 %v441
    %v1453 = vunpack.c.l.b16 %v442
    %v1454 = vunpack.c.l.b16 %v443
    %v1455 = vunpack.c.h.b16 %v443
    %v1456 = vunpack.c.l.b16 %v444
    %v1457 = vunpack.c.h.b16 %v444
    %v1458 = vunpack.c.l.b16 %v445
    %v1459 = vunpack.c.l.b16 %v446
    %v1460 = vunpack.c.h.b16 %v446
    %v1461 = vunpack.c.l.b16 %v447
    %v1462 = vunpack.c.h.b16 %v447
    %v1463 = vunpack.c.l.b16 %v448
    %v1464 = vunpack.c.l.b16 %v449
    %v1465 = vunpack.c.h.b16 %v449
    %v1466 = vunpack.c.l.b16 %v450
    %v1467 = vunpack.c.h.b16 %v450
    %v1468 = vunpack.c.l.b16 %v451
    %v1469 = vunpack.c.l.b16 %v452
    %v1470 = vunpack.c.h.b16 %v452
    %v1471 = vunpack.c.l.b16 %v453
    %v1472 = vunpack.c.h.b16 %v453
    %v1473 = vunpack.c.l.b16 %v454
    %v1474 = vunpack.c.l.b16 %v455
    %v1475 = vunpack.c.h.b16 %v455
    %v1476 = vunpack.c.l.b16 %v456
    %v1477 = vunpack.c.h.b16 %v456
    %v1478 = vunpack.c.l.b16 %v457
    %v1479 = vunpack.c.l.b16 %v458
    %v1480 = vunpack.c.h.b16 %v458
    %v1481 = vunpack.c.l.b16 %v459
    %v1482 = vunpack.c.h.b16 %v459
    %v1483 = vunpack.c.l.b16 %v460
    %v1484 = vunpack.c.l.b16 %v461
    %v1485 = vunpack.c.h.b16 %v461
    %v1486 = vunpack.c.l.b16 %v462
    %v1487 = vunpack.c.h.b16 %v462
    %v1488 = vunpack.c.l.b16 %v463
    %v1489 = vunpack.c.l.b16 %v464
    %v1490 = vunpack.c.h.b16 %v464
    %v1491 = vunpack.c.l.b16 %v465
    %v1492 = vunpack.c.h.b16 %v465
    %v1493 = vunpack.c.l.b16 %v466
    %v1494 = vunpack.c.l.b16 %v467
    %v1495 = vunpack.c.h.b16 %v467
    %v1496 = vunpack.c.l.b16 %v468
    %v1497 = vunpack.c.h.b16 %v468
    %v1498 = vunpack.c.l.b16 %v469
    %v1499 = vunpack.c.l.b16 %v470
    %v1500 = vunpack.c.h.b16 %v470
    %v1501 = vunpack.c.l.b16 %v471
    %v1502 = vunpack.c.h.b16 %v471
    %v1503 = vunpack.c.l.b16 %v472
    %v1504 = vunpack.c.l.b16 %v473
    %v1505 = vunpack.c.h.b16 %v473
    %v1506 = vunpack.c.l.b16 %v474
    %v1507 = vunpack.c.h.b16 %v474
    %v1508 = vunpack.c.l.b16 %v475
    %v1509 = vunpack.c.l.b16 %v476
    %v1510 = vunpack.c.h.b16 %v476
    %v1511 = vunpack.c.l.b16 %v477
    %v1512 = vunpack.c.h.b16 %v477
    %v1513 = vunpack.c.l.b16 %v478
    %v1514 = vunpack.c.l.b16 %v479
    %v1515 = vunpack.c.h.b16 %v479
    %v1516 = vunpack.c.l.b16 %v480
    %v1517 = vunpack.c.h.b16 %v480
    %v1518 = vunpack.c.l.b16 %v481
    %v1519 = vunpack.c.l.b16 %v482
    %v1520 = vunpack.c.h.b16 %v482
    %v1521 = vunpack.c.l.b16 %v483
    %v1522 = vunpack.c.h.b16 %v483
    %v1523 = vunpack.c.l.b16 %v484
    %v1524 = vunpack.c.l.b16 %v485
    %v1525 = vunpack.c.h.b16 %v485
    %v1526 = vunpack.c.l.b16 %v486
    %v1527 = vunpack.c.h.b16 %v486
    %v1528 = vunpack.c.l.b16 %v487
    %v1529 = vunpack.c.l.b16 %v488
    %v1530 = vunpack.c.h.b16 %v488
    %v1531 = vunpack.c.l.b16 %v489
    %v1532 = vunpack.c.h.b16 %v489
    %v1533 = vunpack.c.l.b16 %v490
    %v1534 = vunpack.c.l.b16 %v491
    %v1535 = vunpack.c.h.b16 %v491
    %v1536 = vunpack.c.l.b16 %v492
    %v1537 = vunpack.c.h.b16 %v492
    %v1538 = vunpack.c.l.b16 %v493
    %v1539 = vunpack.c.l.b16 %v494
    %v1540 = vunpack.c.h.b16 %v494
    %v1541 = vunpack.c.l.b16 %v495
    %v1542 = vunpack.c.h.b16 %v495
    %v1543 = vunpack.c.l.b16 %v496
    %v1544 = vunpack.c.l.b16 %v497
    %v1545 = vunpack.c.h.b16 %v497
    %v1546 = vunpack.c.l.b16 %v498
    %v1547 = vunpack.c.h.b16 %v498
    %v1548 = vunpack.c.l.b16 %v499
    %v1549 = vunpack.c.l.b16 %v500
    %v1550 = vunpack.c.h.b16 %v500
    %v1551 = vunpack.c.l.b16 %v501
    %v1552 = vunpack.c.h.b16 %v501
    %v1553 = vunpack.c.l.b16 %v502
    %v1554 = vpack.c.b16 %v919, %v914
    %v1555 = vpack.c.b16 %v920, %v915
    %v1556 = vpack.c.b16 %v921, %v916
    %v1557 = vpack.c.b16 %v922, %v917
    %v1558 = vpack.c.b16 %v923, %v918
    %v1559 = vpack.c.b16 %v929, %v924
    %v1560 = vpack.c.b16 %v930, %v925
    %v1561 = vpack.c.b16 %v931, %v926
    %v1562 = vpack.c.b16 %v932, %v927
    %v1563 = vpack.c.b16 %v933, %v928
    %v1564 = vpack.c.b16 %v939, %v934
    %v1565 = vpack.c.b16 %v940, %v935
    %v1566 = vpack.c.b16 %v941, %v936
    %v1567 = vpack.c.b16 %v942, %v937
    %v1568 = vpack.c.b16 %v943, %v938
    %v1569 = vpack.c.b16 %v949, %v944
    %v1570 = vpack.c.b16 %v950, %v945
    %v1571 = vpack.c.b16 %v951, %v946
    %v1572 = vpack.c.b16 %v952, %v947
    %v1573 = vpack.c.b16 %v953, %v948
    %v1574 = vpack.c.b16 %v959, %v954
    %v1575 = vpack.c.b16 %v960, %v955
    %v1576 = vpack.c.b16 %v961, %v956
    %v1577 = vpack.c.b16 %v962, %v957
    %v1578 = vpack.c.b16 %v963, %v958
    %v1579 = vpack.c.b16 %v969, %v964
    %v1580 = vpack.c.b16 %v970, %v965
    %v1581 = vpack.c.b16 %v971, %v966
    %v1582 = vpack.c.b16 %v972, %v967
    %v1583 = vpack.c.b16 %v973, %v968
    %v1584 = vpack.c.b16 %v979, %v974
    %v1585 = vpack.c.b16 %v980, %v975
    %v1586 = vpack.c.b16 %v981, %v976
    %v1587 = vpack.c.b16 %v982, %v977
    %v1588 = vpack.c.b16 %v983, %v978
    %v1589 = vpack.c.b16 %v989, %v984
    %v1590 = vpack.c.b16 %v990, %v985
    %v1591 = vpack.c.b16 %v991, %v986
    %v1592 = vpack.c.b16 %v992, %v987
    %v1593 = vpack.c.b16 %v993, %v988
    %v1594 = vpack.c.b16 %v999, %v994
    %v1595 = vpack.c.b16 %v1000, %v995
    %v1596 = vpack.c.b16 %v1001, %v996
    %v1597 = vpack.c.b16 %v1002, %v997
    %v1598 = vpack.c.b16 %v1003, %v998
    %v1599 = vpack.c.b16 %v1009, %v1004
    %v1600 = vpack.c.b16 %v1010, %v1005
    %v1601 = vpack.c.b16 %v1011, %v1006
    %v1602 = vpack.c.b16 %v1012, %v1007
    %v1603 = vpack.c.b16 %v1013, %v1008
    %v1604 = vpack.c.b16 %v1019, %v1014
    %v1605 = vpack.c.b16 %v1020, %v1015
    %v1606 = vpack.c.b16 %v1021, %v1016
    %v1607 = vpack.c.b16 %v1022, %v1017
    %v1608 = vpack.c.b16 %v1023, %v1018
    %v1609 = vpack.c.b16 %v1029, %v1024
    %v1610 = vpack.c.b16 %v1030, %v1025
    %v1611 = vpack.c.b16 %v1031, %v1026
    %v1612 = vpack.c.b16 %v1032, %v1027
    %v1613 = vpack.c.b16 %v1033, %v1028
    %v1614 = vpack.c.b16 %v1039, %v1034
    %v1615 = vpack.c.b16 %v1040, %v1035
    %v1616 = vpack.c.b16 %v1041, %v1036
    %v1617 = vpack.c.b16 %v1042, %v1037
    %v1618 = vpack.c.b16 %v1043, %v1038
    %v1619 = vpack.c.b16 %v1049, %v1044
    %v1620 = vpack.c.b16 %v1050, %v1045
    %v1621 = vpack.c.b16 %v1051, %v1046
    %v1622 = vpack.c.b16 %v1052, %v1047
    %v1623 = vpack.c.b16 %v1053, %v1048
    %v1624 = vpack.c.b16 %v1059, %v1054
    %v1625 = vpack.c.b16 %v1060, %v1055
    %v1626 = vpack.c.b16 %v1061, %v1056
    %v1627 = vpack.c.b16 %v1062, %v1057
    %v1628 = vpack.c.b16 %v1063, %v1058
    %v1629 = vpack.c.b16 %v1069, %v1064
    %v1630 = vpack.c.b16 %v1070, %v1065
    %v1631 = vpack.c.b16 %v1071, %v1066
    %v1632 = vpack.c.b16 %v1072, %v1067
    %v1633 = vpack.c.b16 %v1073, %v1068
    %v1634 = vpack.c.b16 %v1079, %v1074
    %v1635 = vpack.c.b16 %v1080, %v1075
    %v1636 = vpack.c.b16 %v1081, %v1076
    %v1637 = vpack.c.b16 %v1082, %v1077
    %v1638 = vpack.c.b16 %v1083, %v1078
    %v1639 = vpack.c.b16 %v1089, %v1084
    %v1640 = vpack.c.b16 %v1090, %v1085
    %v1641 = vpack.c.b16 %v1091, %v1086
    %v1642 = vpack.c.b16 %v1092, %v1087
    %v1643 = vpack.c.b16 %v1093, %v1088
    %v1644 = vpack.c.b16 %v1099, %v1094
    %v1645 = vpack.c.b16 %v1100, %v1095
    %v1646 = vpack.c.b16 %v1101, %v1096
    %v1647 = vpack.c.b16 %v1102, %v1097
    %v1648 = vpack.c.b16 %v1103, %v1098
    %v1649 = vpack.c.b16 %v1109, %v1104
    %v1650 = vpack.c.b16 %v1110, %v1105
    %v1651 = vpack.c.b16 %v1111, %v1106
    %v1652 = vpack.c.b16 %v1112, %v1107
    %v1653 = vpack.c.b16 %v1113, %v1108
    %v1654 = vpack.c.b16 %v1119, %v1114
    %v1655 = vpack.c.b16 %v1120, %v1115
    %v1656 = vpack.c.b16 %v1121, %v1116
    %v1657 = vpack.c.b16 %v1122, %v1117
    %v1658 = vpack.c.b16 %v1123, %v1118
    %v1659 = vpack.c.b16 %v1129, %v1124
    %v1660 = vpack.c.b16 %v1130, %v1125
    %v1661 = vpack.c.b16 %v1131, %v1126
    %v1662 = vpack.c.b16 %v1132, %v1127
    %v1663 = vpack.c.b16 %v1133, %v1128
    %v1664 = vpack.c.b16 %v1139, %v1134
    %v1665 = vpack.c.b16 %v1140, %v1135
    %v1666 = vpack.c.b16 %v1141, %v1136
    %v1667 = vpack.c.b16 %v1142, %v1137
    %v1668 = vpack.c.b16 %v1143, %v1138
    %v1669 = vpack.c.b16 %v1149, %v1144
    %v1670 = vpack.c.b16 %v1150, %v1145
    %v1671 = vpack.c.b16 %v1151, %v1146
    %v1672 = vpack.c.b16 %v1152, %v1147
    %v1673 = vpack.c.b16 %v1153, %v1148
    %v1674 = vpack.c.b16 %v1159, %v1154
    %v1675 = vpack.c.b16 %v1160, %v1155
    %v1676 = vpack.c.b16 %v1161, %v1156
    %v1677 = vpack.c.b16 %v1162, %v1157
    %v1678 = vpack.c.b16 %v1163, %v1158
    %v1679 = vpack.c.b16 %v1169, %v1164
    %v1680 = vpack.c.b16 %v1170, %v1165
    %v1681 = vpack.c.b16 %v1171, %v1166
    %v1682 = vpack.c.b16 %v1172, %v1167
    %v1683 = vpack.c.b16 %v1173, %v1168
    %v1684 = vpack.c.b16 %v1179, %v1174
    %v1685 = vpack.c.b16 %v1180, %v1175
    %v1686 = vpack.c.b16 %v1181, %v1176
    %v1687 = vpack.c.b16 %v1182, %v1177
    %v1688 = vpack.c.b16 %v1183, %v1178
    %v1689 = vpack.c.b16 %v1189, %v1184
    %v1690 = vpack.c.b16 %v1190, %v1185
    %v1691 = vpack.c.b16 %v1191, %v1186
    %v1692 = vpack.c.b16 %v1192, %v1187
    %v1693 = vpack.c.b16 %v1193, %v1188
    %v1694 = vpack.c.b16 %v1199, %v1194
    %v1695 = vpack.c.b16 %v1200, %v1195
    %v1696 = vpack.c.b16 %v1201, %v1196
    %v1697 = vpack.c.b16 %v1202, %v1197
    %v1698 = vpack.c.b16 %v1203, %v1198
    %v1699 = vpack.c.b16 %v1209, %v1204
    %v1700 = vpack.c.b16 %v1210, %v1205
    %v1701 = vpack.c.b16 %v1211, %v1206
    %v1702 = vpack.c.b16 %v1212, %v1207
    %v1703 = vpack.c.b16 %v1213, %v1208
    %v1704 = vpack.c.b16 %v1219, %v1214
    %v1705 = vpack.c.b16 %v1220, %v1215
    %v1706 = vpack.c.b16 %v1221, %v1216
    %v1707 = vpack.c.b16 %v1222, %v1217
    %v1708 = vpack.c.b16 %v1223, %v1218
    %v1709 = vpack.c.b16 %v1229, %v1224
    %v1710 = vpack.c.b16 %v1230, %v1225
    %v1711 = vpack.c.b16 %v1231, %v1226
    %v1712 = vpack.c.b16 %v1232, %v1227
    %v1713 = vpack.c.b16 %v1233, %v1228
    %v1714 = vpack.c.b16 %v1239, %v1234
    %v1715 = vpack.c.b16 %v1240, %v1235
    %v1716 = vpack.c.b16 %v1241, %v1236
    %v1717 = vpack.c.b16 %v1242, %v1237
    %v1718 = vpack.c.b16 %v1243, %v1238
    %v1719 = vpack.c.b16 %v1249, %v1244
    %v1720 = vpack.c.b16 %v1250, %v1245
    %v1721 = vpack.c.b16 %v1251, %v1246
    %v1722 = vpack.c.b16 %v1252, %v1247
    %v1723 = vpack.c.b16 %v1253, %v1248
    %v1724 = vpack.c.b16 %v1259, %v1254
    %v1725 = vpack.c.b16 %v1260, %v1255
    %v1726 = vpack.c.b16 %v1261, %v1256
    %v1727 = vpack.c.b16 %v1262, %v1257
    %v1728 = vpack.c.b16 %v1263, %v1258
    %v1729 = vpack.c.b16 %v1269, %v1264
    %v1730 = vpack.c.b16 %v1270, %v1265
    %v1731 = vpack.c.b16 %v1271, %v1266
    %v1732 = vpack.c.b16 %v1272, %v1267
    %v1733 = vpack.c.b16 %v1273, %v1268
    %v1734 = vpack.c.b16 %v1279, %v1274
    %v1735 = vpack.c.b16 %v1280, %v1275
    %v1736 = vpack.c.b16 %v1281, %v1276
    %v1737 = vpack.c.b16 %v1282, %v1277
    %v1738 = vpack.c.b16 %v1283, %v1278
    %v1739 = vpack.c.b16 %v1289, %v1284
    %v1740 = vpack.c.b16 %v1290, %v1285
    %v1741 = vpack.c.b16 %v1291, %v1286
    %v1742 = vpack.c.b16 %v1292, %v1287
    %v1743 = vpack.c.b16 %v1293, %v1288
    %v1744 = vpack.c.b16 %v1299, %v1294
    %v1745 = vpack.c.b16 %v1300, %v1295
    %v1746 = vpack.c.b16 %v1301, %v1296
    %v1747 = vpack.c.b16 %v1302, %v1297
    %v1748 = vpack.c.b16 %v1303, %v1298
    %v1749 = vpack.c.b16 %v1309, %v1304
    %v1750 = vpack.c.b16 %v1310, %v1305
    %v1751 = vpack.c.b16 %v1311, %v1306
    %v1752 = vpack.c.b16 %v1312, %v1307
    %v1753 = vpack.c.b16 %v1313, %v1308
    %v1754 = vpack.c.b16 %v1319, %v1314
    %v1755 = vpack.c.b16 %v1320, %v1315
    %v1756 = vpack.c.b16 %v1321, %v1316
    %v1757 = vpack.c.b16 %v1322, %v1317
    %v1758 = vpack.c.b16 %v1323, %v1318
    %v1759 = vpack.c.b16 %v1329, %v1324
    %v1760 = vpack.c.b16 %v1330, %v1325
    %v1761 = vpack.c.b16 %v1331, %v1326
    %v1762 = vpack.c.b16 %v1332, %v1327
    %v1763 = vpack.c.b16 %v1333, %v1328
    %v1764 = vpack.c.b16 %v1339, %v1334
    %v1765 = vpack.c.b16 %v1340, %v1335
    %v1766 = vpack.c.b16 %v1341, %v1336
    %v1767 = vpack.c.b16 %v1342, %v1337
    %v1768 = vpack.c.b16 %v1343, %v1338
    %v1769 = vpack.c.b16 %v1349, %v1344
    %v1770 = vpack.c.b16 %v1350, %v1345
    %v1771 = vpack.c.b16 %v1351, %v1346
    %v1772 = vpack.c.b16 %v1352, %v1347
    %v1773 = vpack.c.b16 %v1353, %v1348
    %v1774 = vpack.c.b16 %v1359, %v1354
    %v1775 = vpack.c.b16 %v1360, %v1355
    %v1776 = vpack.c.b16 %v1361, %v1356
    %v1777 = vpack.c.b16 %v1362, %v1357
    %v1778 = vpack.c.b16 %v1363, %v1358
    %v1779 = vpack.c.b16 %v1369, %v1364
    %v1780 = vpack.c.b16 %v1370, %v1365
    %v1781 = vpack.c.b16 %v1371, %v1366
    %v1782 = vpack.c.b16 %v1372, %v1367
    %v1783 = vpack.c.b16 %v1373, %v1368
    %v1784 = vpack.c.b16 %v1379, %v1374
    %v1785 = vpack.c.b16 %v1380, %v1375
    %v1786 = vpack.c.b16 %v1381, %v1376
    %v1787 = vpack.c.b16 %v1382, %v1377
    %v1788 = vpack.c.b16 %v1383, %v1378
    %v1789 = vpack.c.b16 %v1389, %v1384
    %v1790 = vpack.c.b16 %v1390, %v1385
    %v1791 = vpack.c.b16 %v1391, %v1386
    %v1792 = vpack.c.b16 %v1392, %v1387
    %v1793 = vpack.c.b16 %v1393, %v1388
    %v1794 = vpack.c.b16 %v1399, %v1394
    %v1795 = vpack.c.b16 %v1400, %v1395
    %v1796 = vpack.c.b16 %v1401, %v1396
    %v1797 = vpack.c.b16 %v1402, %v1397
    %v1798 = vpack.c.b16 %v1403, %v1398
    %v1799 = vpack.c.b16 %v1409, %v1404
    %v1800 = vpack.c.b16 %v1410, %v1405
    %v1801 = vpack.c.b16 %v1411, %v1406
    %v1802 = vpack.c.b16 %v1412, %v1407
    %v1803 = vpack.c.b16 %v1413, %v1408
    %v1804 = vpack.c.b16 %v1419, %v1414
    %v1805 = vpack.c.b16 %v1420, %v1415
    %v1806 = vpack.c.b16 %v1421, %v1416
    %v1807 = vpack.c.b16 %v1422, %v1417
    %v1808 = vpack.c.b16 %v1423, %v1418
    %v1809 = vpack.c.b16 %v1429, %v1424
    %v1810 = vpack.c.b16 %v1430, %v1425
    %v1811 = vpack.c.b16 %v1431, %v1426
    %v1812 = vpack.c.b16 %v1432, %v1427
    %v1813 = vpack.c.b16 %v1433, %v1428
    %v1814 = vpack.c.b16 %v1439, %v1434
    %v1815 = vpack.c.b16 %v1440, %v1435
    %v1816 = vpack.c.b16 %v1441, %v1436
    %v1817 = vpack.c.b16 %v1442, %v1437
    %v1818 = vpack.c.b16 %v1443, %v1438
    %v1819 = vpack.c.b16 %v1449, %v1444
    %v1820 = vpack.c.b16 %v1450, %v1445
    %v1821 = vpack.c.b16 %v1451, %v1446
    %v1822 = vpack.c.b16 %v1452, %v1447
    %v1823 = vpack.c.b16 %v1453, %v1448
    %v1824 = vpack.c.b16 %v1459, %v1454
    %v1825 = vpack.c.b16 %v1460, %v1455
    %v1826 = vpack.c.b16 %v1461, %v1456
    %v1827 = vpack.c.b16 %v1462, %v1457
    %v1828 = vpack.c.b16 %v1463, %v1458
    %v1829 = vpack.c.b16 %v1469, %v1464
    %v1830 = vpack.c.b16 %v1470, %v1465
    %v1831 = vpack.c.b16 %v1471, %v1466
    %v1832 = vpack.c.b16 %v1472, %v1467
    %v1833 = vpack.c.b16 %v1473, %v1468
    %v1834 = vpack.c.b16 %v1479, %v1474
    %v1835 = vpack.c.b16 %v1480, %v1475
    %v1836 = vpack.c.b16 %v1481, %v1476
    %v1837 = vpack.c.b16 %v1482, %v1477
    %v1838 = vpack.c.b16 %v1483, %v1478
    %v1839 = vpack.c.b16 %v1489, %v1484
    %v1840 = vpack.c.b16 %v1490, %v1485
    %v1841 = vpack.c.b16 %v1491, %v1486
    %v1842 = vpack.c.b16 %v1492, %v1487
    %v1843 = vpack.c.b16 %v1493, %v1488
    %v1844 = vpack.c.b16 %v1499, %v1494
    %v1845 = vpack.c.b16 %v1500, %v1495
    %v1846 = vpack.c.b16 %v1501, %v1496
    %v1847 = vpack.c.b16 %v1502, %v1497
    %v1848 = vpack.c.b16 %v1503, %v1498
    %v1849 = vpack.c.b16 %v1509, %v1504
    %v1850 = vpack.c.b16 %v1510, %v1505
    %v1851 = vpack.c.b16 %v1511, %v1506
    %v1852 = vpack.c.b16 %v1512, %v1507
    %v1853 = vpack.c.b16 %v1513, %v1508
    %v1854 = vpack.c.b16 %v1519, %v1514
    %v1855 = vpack.c.b16 %v1520, %v1515
    %v1856 = vpack.c.b16 %v1521, %v1516
    %v1857 = vpack.c.b16 %v1522, %v1517
    %v1858 = vpack.c.b16 %v1523, %v1518
    %v1859 = vpack.c.b16 %v1529, %v1524
    %v1860 = vpack.c.b16 %v1530, %v1525
    %v1861 = vpack.c.b16 %v1531, %v1526
    %v1862 = vpack.c.b16 %v1532, %v1527
    %v1863 = vpack.c.b16 %v1533, %v1528
    %v1864 = vpack.c.b16 %v1539, %v1534
    %v1865 = vpack.c.b16 %v1540, %v1535
    %v1866 = vpack.c.b16 %v1541, %v1536
    %v1867 = vpack.c.b16 %v1542, %v1537
    %v1868 = vpack.c.b16 %v1543, %v1538
    %v1869 = vpack.c.b16 %v1549, %v1544
    %v1870 = vpack.c.b16 %v1550, %v1545
    %v1871 = vpack.c.b16 %v1551, %v1546
    %v1872 = vpack.c.b16 %v1552, %v1547
    %v1873 = vpack.c.b16 %v1553, %v1548
    %2194 = vmatprep.subr.bf16.mxu0 %v1590
    %2195 = vmatpush1.bf16.msra.mxu0 %v1589
    %2196 = vmatprep.subr.bf16.mxu0 %v1585
    %2197 = vmatpush1.bf16.msra.mxu0 %v1584
    %2198 = vmatprep.subr.bf16.mxu0 %v1580
    %2199 = vmatpush1.bf16.msra.mxu0 %v1579
    %2200 = vmatprep.subr.bf16.mxu0 %v1575
    %2201 = vmatpush1.bf16.msra.mxu0 %v1574
    %2202 = vmatprep.subr.bf16.mxu0 %v1570
    %2203 = vmatpush1.bf16.msra.mxu0 %v1569
    %2204 = vmatprep.subr.bf16.mxu0 %v1565
    %2205 = vmatpush1.bf16.msra.mxu0 %v1564
    %2206 = vmatprep.subr.bf16.mxu0 %v1560
    %2207 = vmatpush1.bf16.msra.mxu0 %v1559
    %2208 = vmatprep.subr.bf16.mxu0 %v1555
    %2209 = vmatpush1.bf16.msra.mxu0 %v1554
    %2210 = vmatprep.subr.bf16.mxu0 %v1630
    %2211 = vmatpush2.bf16.msra.mxu0 %v1629
    %2212 = vmatprep.subr.bf16.mxu0 %v1625
    %2213 = vmatpush2.bf16.msra.mxu0 %v1624
    %2214 = vmatprep.subr.bf16.mxu0 %v1620
    %2215 = vmatpush2.bf16.msra.mxu0 %v1619
    %2216 = vmatprep.subr.bf16.mxu0 %v1615
    %2217 = vmatpush2.bf16.msra.mxu0 %v1614
    %2218 = vmatprep.subr.bf16.mxu0 %v1610
    %2219 = vmatpush2.bf16.msra.mxu0 %v1609
    %2220 = vmatprep.subr.bf16.mxu0 %v1605
    %2221 = vmatpush2.bf16.msra.mxu0 %v1604
    %2222 = vmatprep.subr.bf16.mxu0 %v1600
    %2223 = vmatpush2.bf16.msra.mxu0 %v1599
    %2224 = vmatprep.subr.bf16.mxu0 %v1595
    %2225 = vmatpush2.bf16.msra.mxu0 %v1594
    %2226 = vmatprep.mubr.bf16.mxu0 %v112
    %2227 = vmatmul.mubr.bf16.gmra.mxu0 %v111
    %v2228 = vpop.f32.mrf.mxu0
    %v2229 = vadd.f32 %v508, %v2228
    %v2230 = vpop.f32.mrf.mxu0
    %v2231 = vadd.f32 %v512, %v2230
    %v2232 = vpop.f32.mrf.mxu0
    %v2233 = vpop.f32.mrf.mxu0
    %2234 = vdwg.mxu0
    %2235 = vmatprep.subr.bf16.mxu0 %v1670
    %2236 = vmatpush1.bf16.msra.mxu0 %v1669
    %2237 = vmatprep.subr.bf16.mxu0 %v1665
    %2238 = vmatpush1.bf16.msra.mxu0 %v1664
    %2239 = vmatprep.subr.bf16.mxu0 %v1660
    %2240 = vmatpush1.bf16.msra.mxu0 %v1659
    %2241 = vmatprep.subr.bf16.mxu0 %v1655
    %2242 = vmatpush1.bf16.msra.mxu0 %v1654
    %2243 = vmatprep.subr.bf16.mxu0 %v1650
    %2244 = vmatpush1.bf16.msra.mxu0 %v1649
    %2245 = vmatprep.subr.bf16.mxu0 %v1645
    %2246 = vmatpush1.bf16.msra.mxu0 %v1644
    %2247 = vmatprep.subr.bf16.mxu0 %v1640
    %2248 = vmatpush1.bf16.msra.mxu0 %v1639
    %2249 = vmatprep.subr.bf16.mxu0 %v1635
    %2250 = vmatpush1.bf16.msra.mxu0 %v1634
    %2251 = vmatprep.subr.bf16.mxu0 %v1710
    %2252 = vmatpush2.bf16.msra.mxu0 %v1709
    %2253 = vmatprep.subr.bf16.mxu0 %v1705
    %2254 = vmatpush2.bf16.msra.mxu0 %v1704
    %2255 = vmatprep.subr.bf16.mxu0 %v1700
    %2256 = vmatpush2.bf16.msra.mxu0 %v1699
    %2257 = vmatprep.subr.bf16.mxu0 %v1695
    %2258 = vmatpush2.bf16.msra.mxu0 %v1694
    %2259 = vmatprep.subr.bf16.mxu0 %v1690
    %2260 = vmatpush2.bf16.msra.mxu0 %v1689
    %2261 = vmatprep.subr.bf16.mxu0 %v1685
    %2262 = vmatpush2.bf16.msra.mxu0 %v1684
    %2263 = vmatprep.subr.bf16.mxu0 %v1680
    %2264 = vmatpush2.bf16.msra.mxu0 %v1679
    %2265 = vmatprep.subr.bf16.mxu0 %v1675
    %2266 = vmatpush2.bf16.msra.mxu0 %v1674
    %2267 = vmatprep.mubr.bf16.mxu0 %v114
    %2268 = vmatmul.mubr.bf16.gmra.mxu0 %v113
    %v2269 = vpop.f32.mrf.mxu0
    %v2270 = vadd.f32 %v2229, %v2269
    %v2271 = vpop.f32.mrf.mxu0
    %v2272 = vadd.f32 %v2231, %v2271
    %v2273 = vpop.f32.mrf.mxu0
    %v2274 = vpop.f32.mrf.mxu0
    %2275 = vdwg.mxu0
    %2276 = vmatprep.subr.bf16.mxu0 %v1750
    %2277 = vmatpush1.bf16.msra.mxu0 %v1749
    %2278 = vmatprep.subr.bf16.mxu0 %v1745
    %2279 = vmatpush1.bf16.msra.mxu0 %v1744
    %2280 = vmatprep.subr.bf16.mxu0 %v1740
    %2281 = vmatpush1.bf16.msra.mxu0 %v1739
    %2282 = vmatprep.subr.bf16.mxu0 %v1735
    %2283 = vmatpush1.bf16.msra.mxu0 %v1734
    %2284 = vmatprep.subr.bf16.mxu0 %v1730
    %2285 = vmatpush1.bf16.msra.mxu0 %v1729
    %2286 = vmatprep.subr.bf16.mxu0 %v1725
    %2287 = vmatpush1.bf16.msra.mxu0 %v1724
    %2288 = vmatprep.subr.bf16.mxu0 %v1720
    %2289 = vmatpush1.bf16.msra.mxu0 %v1719
    %2290 = vmatprep.subr.bf16.mxu0 %v1715
    %2291 = vmatpush1.bf16.msra.mxu0 %v1714
    %2292 = vmatprep.subr.bf16.mxu0 %v1790
    %2293 = vmatpush2.bf16.msra.mxu0 %v1789
    %2294 = vmatprep.subr.bf16.mxu0 %v1785
    %2295 = vmatpush2.bf16.msra.mxu0 %v1784
    %2296 = vmatprep.subr.bf16.mxu0 %v1780
    %2297 = vmatpush2.bf16.msra.mxu0 %v1779
    %2298 = vmatprep.subr.bf16.mxu0 %v1775
    %2299 = vmatpush2.bf16.msra.mxu0 %v1774
    %2300 = vmatprep.subr.bf16.mxu0 %v1770
    %2301 = vmatpush2.bf16.msra.mxu0 %v1769
    %2302 = vmatprep.subr.bf16.mxu0 %v1765
    %2303 = vmatpush2.bf16.msra.mxu0 %v1764
    %2304 = vmatprep.subr.bf16.mxu0 %v1760
    %2305 = vmatpush2.bf16.msra.mxu0 %v1759
    %2306 = vmatprep.subr.bf16.mxu0 %v1755
    %2307 = vmatpush2.bf16.msra.mxu0 %v1754
    %2308 = vmatprep.mubr.bf16.mxu0 %v116
    %2309 = vmatmul.mubr.bf16.gmra.mxu0 %v115
    %v2310 = vpop.f32.mrf.mxu0
    %v2311 = vadd.f32 %v2270, %v2310
    %v2312 = vpop.f32.mrf.mxu0
    %v2313 = vadd.f32 %v2272, %v2312
    %v2314 = vpop.f32.mrf.mxu0
    %v2315 = vpop.f32.mrf.mxu0
    %2316 = vdwg.mxu0
    %2317 = vmatprep.subr.bf16.mxu0 %v1830
    %2318 = vmatpush1.bf16.msra.mxu0 %v1829
    %2319 = vmatprep.subr.bf16.mxu0 %v1825
    %2320 = vmatpush1.bf16.msra.mxu0 %v1824
    %2321 = vmatprep.subr.bf16.mxu0 %v1820
    %2322 = vmatpush1.bf16.msra.mxu0 %v1819
    %2323 = vmatprep.subr.bf16.mxu0 %v1815
    %2324 = vmatpush1.bf16.msra.mxu0 %v1814
    %2325 = vmatprep.subr.bf16.mxu0 %v1810
    %2326 = vmatpush1.bf16.msra.mxu0 %v1809
    %2327 = vmatprep.subr.bf16.mxu0 %v1805
    %2328 = vmatpush1.bf16.msra.mxu0 %v1804
    %2329 = vmatprep.subr.bf16.mxu0 %v1800
    %2330 = vmatpush1.bf16.msra.mxu0 %v1799
    %2331 = vmatprep.subr.bf16.mxu0 %v1795
    %2332 = vmatpush1.bf16.msra.mxu0 %v1794
    %2333 = vmatprep.subr.bf16.mxu0 %v1870
    %2334 = vmatpush2.bf16.msra.mxu0 %v1869
    %2335 = vmatprep.subr.bf16.mxu0 %v1865
    %2336 = vmatpush2.bf16.msra.mxu0 %v1864
    %2337 = vmatprep.subr.bf16.mxu0 %v1860
    %2338 = vmatpush2.bf16.msra.mxu0 %v1859
    %2339 = vmatprep.subr.bf16.mxu0 %v1855
    %2340 = vmatpush2.bf16.msra.mxu0 %v1854
    %2341 = vmatprep.subr.bf16.mxu0 %v1850
    %2342 = vmatpush2.bf16.msra.mxu0 %v1849
    %2343 = vmatprep.subr.bf16.mxu0 %v1845
    %2344 = vmatpush2.bf16.msra.mxu0 %v1844
    %2345 = vmatprep.subr.bf16.mxu0 %v1840
    %2346 = vmatpush2.bf16.msra.mxu0 %v1839
    %2347 = vmatprep.subr.bf16.mxu0 %v1835
    %2348 = vmatpush2.bf16.msra.mxu0 %v1834
    %2349 = vmatprep.mubr.bf16.mxu0 %v118
    %2350 = vmatmul.mubr.bf16.gmra.mxu0 %v117
    %v2351 = vpop.f32.mrf.mxu0
    %v2352 = vadd.f32 %v2311, %v2351
    %v2353 = vpop.f32.mrf.mxu0
    %v2354 = vadd.f32 %v2313, %v2353
    %v2355 = vpop.f32.mrf.mxu0
    %v2356 = vpop.f32.mrf.mxu0
    %2357 = vdwg.mxu0
    %2358 = vmatprep.subr.bf16.mxu0 %v1592
    %2359 = vmatpush1.bf16.msra.mxu0 %v1591
    %2360 = vmatprep.subr.bf16.mxu0 %v1587
    %2361 = vmatpush1.bf16.msra.mxu0 %v1586
    %2362 = vmatprep.subr.bf16.mxu0 %v1582
    %2363 = vmatpush1.bf16.msra.mxu0 %v1581
    %2364 = vmatprep.subr.bf16.mxu0 %v1577
    %2365 = vmatpush1.bf16.msra.mxu0 %v1576
    %2366 = vmatprep.subr.bf16.mxu0 %v1572
    %2367 = vmatpush1.bf16.msra.mxu0 %v1571
    %2368 = vmatprep.subr.bf16.mxu0 %v1567
    %2369 = vmatpush1.bf16.msra.mxu0 %v1566
    %2370 = vmatprep.subr.bf16.mxu0 %v1562
    %2371 = vmatpush1.bf16.msra.mxu0 %v1561
    %2372 = vmatprep.subr.bf16.mxu0 %v1557
    %2373 = vmatpush1.bf16.msra.mxu0 %v1556
    %2374 = vmatprep.subr.bf16.mxu0 %v1632
    %2375 = vmatpush2.bf16.msra.mxu0 %v1631
    %2376 = vmatprep.subr.bf16.mxu0 %v1627
    %2377 = vmatpush2.bf16.msra.mxu0 %v1626
    %2378 = vmatprep.subr.bf16.mxu0 %v1622
    %2379 = vmatpush2.bf16.msra.mxu0 %v1621
    %2380 = vmatprep.subr.bf16.mxu0 %v1617
    %2381 = vmatpush2.bf16.msra.mxu0 %v1616
    %2382 = vmatprep.subr.bf16.mxu0 %v1612
    %2383 = vmatpush2.bf16.msra.mxu0 %v1611
    %2384 = vmatprep.subr.bf16.mxu0 %v1607
    %2385 = vmatpush2.bf16.msra.mxu0 %v1606
    %2386 = vmatprep.subr.bf16.mxu0 %v1602
    %2387 = vmatpush2.bf16.msra.mxu0 %v1601
    %2388 = vmatprep.subr.bf16.mxu0 %v1597
    %2389 = vmatpush2.bf16.msra.mxu0 %v1596
    %2390 = vmatprep.mubr.bf16.mxu0 %v112
    %2391 = vmatmul.mubr.bf16.gmra.mxu0 %v111
    %v2392 = vpop.f32.mrf.mxu0
    %v2393 = vadd.f32 %v516, %v2392
    %v2394 = vpop.f32.mrf.mxu0
    %v2395 = vadd.f32 %v520, %v2394
    %v2396 = vpop.f32.mrf.mxu0
    %v2397 = vpop.f32.mrf.mxu0
    %2398 = vdwg.mxu0
    %2399 = vmatprep.subr.bf16.mxu0 %v1672
    %2400 = vmatpush1.bf16.msra.mxu0 %v1671
    %2401 = vmatprep.subr.bf16.mxu0 %v1667
    %2402 = vmatpush1.bf16.msra.mxu0 %v1666
    %2403 = vmatprep.subr.bf16.mxu0 %v1662
    %2404 = vmatpush1.bf16.msra.mxu0 %v1661
    %2405 = vmatprep.subr.bf16.mxu0 %v1657
    %2406 = vmatpush1.bf16.msra.mxu0 %v1656
    %2407 = vmatprep.subr.bf16.mxu0 %v1652
    %2408 = vmatpush1.bf16.msra.mxu0 %v1651
    %2409 = vmatprep.subr.bf16.mxu0 %v1647
    %2410 = vmatpush1.bf16.msra.mxu0 %v1646
    %2411 = vmatprep.subr.bf16.mxu0 %v1642
    %2412 = vmatpush1.bf16.msra.mxu0 %v1641
    %2413 = vmatprep.subr.bf16.mxu0 %v1637
    %2414 = vmatpush1.bf16.msra.mxu0 %v1636
    %2415 = vmatprep.subr.bf16.mxu0 %v1712
    %2416 = vmatpush2.bf16.msra.mxu0 %v1711
    %2417 = vmatprep.subr.bf16.mxu0 %v1707
    %2418 = vmatpush2.bf16.msra.mxu0 %v1706
    %2419 = vmatprep.subr.bf16.mxu0 %v1702
    %2420 = vmatpush2.bf16.msra.mxu0 %v1701
    %2421 = vmatprep.subr.bf16.mxu0 %v1697
    %2422 = vmatpush2.bf16.msra.mxu0 %v1696
    %2423 = vmatprep.subr.bf16.mxu0 %v1692
    %2424 = vmatpush2.bf16.msra.mxu0 %v1691
    %2425 = vmatprep.subr.bf16.mxu0 %v1687
    %2426 = vmatpush2.bf16.msra.mxu0 %v1686
    %2427 = vmatprep.subr.bf16.mxu0 %v1682
    %2428 = vmatpush2.bf16.msra.mxu0 %v1681
    %2429 = vmatprep.subr.bf16.mxu0 %v1677
    %2430 = vmatpush2.bf16.msra.mxu0 %v1676
    %2431 = vmatprep.mubr.bf16.mxu0 %v114
    %2432 = vmatmul.mubr.bf16.gmra.mxu0 %v113
    %v2433 = vpop.f32.mrf.mxu0
    %v2434 = vadd.f32 %v2393, %v2433
    %v2435 = vpop.f32.mrf.mxu0
    %v2436 = vadd.f32 %v2395, %v2435
    %v2437 = vpop.f32.mrf.mxu0
    %v2438 = vpop.f32.mrf.mxu0
    %2439 = vdwg.mxu0
    %2440 = vmatprep.subr.bf16.mxu0 %v1752
    %2441 = vmatpush1.bf16.msra.mxu0 %v1751
    %2442 = vmatprep.subr.bf16.mxu0 %v1747
    %2443 = vmatpush1.bf16.msra.mxu0 %v1746
    %2444 = vmatprep.subr.bf16.mxu0 %v1742
    %2445 = vmatpush1.bf16.msra.mxu0 %v1741
    %2446 = vmatprep.subr.bf16.mxu0 %v1737
    %2447 = vmatpush1.bf16.msra.mxu0 %v1736
    %2448 = vmatprep.subr.bf16.mxu0 %v1732
    %2449 = vmatpush1.bf16.msra.mxu0 %v1731
    %2450 = vmatprep.subr.bf16.mxu0 %v1727
    %2451 = vmatpush1.bf16.msra.mxu0 %v1726
    %2452 = vmatprep.subr.bf16.mxu0 %v1722
    %2453 = vmatpush1.bf16.msra.mxu0 %v1721
    %2454 = vmatprep.subr.bf16.mxu0 %v1717
    %2455 = vmatpush1.bf16.msra.mxu0 %v1716
    %2456 = vmatprep.subr.bf16.mxu0 %v1792
    %2457 = vmatpush2.bf16.msra.mxu0 %v1791
    %2458 = vmatprep.subr.bf16.mxu0 %v1787
    %2459 = vmatpush2.bf16.msra.mxu0 %v1786
    %2460 = vmatprep.subr.bf16.mxu0 %v1782
    %2461 = vmatpush2.bf16.msra.mxu0 %v1781
    %2462 = vmatprep.subr.bf16.mxu0 %v1777
    %2463 = vmatpush2.bf16.msra.mxu0 %v1776
    %2464 = vmatprep.subr.bf16.mxu0 %v1772
    %2465 = vmatpush2.bf16.msra.mxu0 %v1771
    %2466 = vmatprep.subr.bf16.mxu0 %v1767
    %2467 = vmatpush2.bf16.msra.mxu0 %v1766
    %2468 = vmatprep.subr.bf16.mxu0 %v1762
    %2469 = vmatpush2.bf16.msra.mxu0 %v1761
    %2470 = vmatprep.subr.bf16.mxu0 %v1757
    %2471 = vmatpush2.bf16.msra.mxu0 %v1756
    %2472 = vmatprep.mubr.bf16.mxu0 %v116
    %2473 = vmatmul.mubr.bf16.gmra.mxu0 %v115
    %v2474 = vpop.f32.mrf.mxu0
    %v2475 = vadd.f32 %v2434, %v2474
    %v2476 = vpop.f32.mrf.mxu0
    %v2477 = vadd.f32 %v2436, %v2476
    %v2478 = vpop.f32.mrf.mxu0
    %v2479 = vpop.f32.mrf.mxu0
    %2480 = vdwg.mxu0
    %2481 = vmatprep.subr.bf16.mxu0 %v1832
    %2482 = vmatpush1.bf16.msra.mxu0 %v1831
    %2483 = vmatprep.subr.bf16.mxu0 %v1827
    %2484 = vmatpush1.bf16.msra.mxu0 %v1826
    %2485 = vmatprep.subr.bf16.mxu0 %v1822
    %2486 = vmatpush1.bf16.msra.mxu0 %v1821
    %2487 = vmatprep.subr.bf16.mxu0 %v1817
    %2488 = vmatpush1.bf16.msra.mxu0 %v1816
    %2489 = vmatprep.subr.bf16.mxu0 %v1812
    %2490 = vmatpush1.bf16.msra.mxu0 %v1811
    %2491 = vmatprep.subr.bf16.mxu0 %v1807
    %2492 = vmatpush1.bf16.msra.mxu0 %v1806
    %2493 = vmatprep.subr.bf16.mxu0 %v1802
    %2494 = vmatpush1.bf16.msra.mxu0 %v1801
    %2495 = vmatprep.subr.bf16.mxu0 %v1797
    %2496 = vmatpush1.bf16.msra.mxu0 %v1796
    %2497 = vmatprep.subr.bf16.mxu0 %v1872
    %2498 = vmatpush2.bf16.msra.mxu0 %v1871
    %2499 = vmatprep.subr.bf16.mxu0 %v1867
    %2500 = vmatpush2.bf16.msra.mxu0 %v1866
    %2501 = vmatprep.subr.bf16.mxu0 %v1862
    %2502 = vmatpush2.bf16.msra.mxu0 %v1861
    %2503 = vmatprep.subr.bf16.mxu0 %v1857
    %2504 = vmatpush2.bf16.msra.mxu0 %v1856
    %2505 = vmatprep.subr.bf16.mxu0 %v1852
    %2506 = vmatpush2.bf16.msra.mxu0 %v1851
    %2507 = vmatprep.subr.bf16.mxu0 %v1847
    %2508 = vmatpush2.bf16.msra.mxu0 %v1846
    %2509 = vmatprep.subr.bf16.mxu0 %v1842
    %2510 = vmatpush2.bf16.msra.mxu0 %v1841
    %2511 = vmatprep.subr.bf16.mxu0 %v1837
    %2512 = vmatpush2.bf16.msra.mxu0 %v1836
    %2513 = vmatprep.mubr.bf16.mxu0 %v118
    %2514 = vmatmul.mubr.bf16.gmra.mxu0 %v117
    %v2515 = vpop.f32.mrf.mxu0
    %v2516 = vadd.f32 %v2475, %v2515
    %v2517 = vpop.f32.mrf.mxu0
    %v2518 = vadd.f32 %v2477, %v2517
    %v2519 = vpop.f32.mrf.mxu0
    %v2520 = vpop.f32.mrf.mxu0
    %2521 = vdwg.mxu0
    %2522 = vmatprep.subr.bf16.mxu0 0
    %2523 = vmatpush1.bf16.msra.mxu0 %v1593
    %2524 = vmatprep.subr.bf16.mxu0 0
    %2525 = vmatpush1.bf16.msra.mxu0 %v1588
    %2526 = vmatprep.subr.bf16.mxu0 0
    %2527 = vmatpush1.bf16.msra.mxu0 %v1583
    %2528 = vmatprep.subr.bf16.mxu0 0
    %2529 = vmatpush1.bf16.msra.mxu0 %v1578
    %2530 = vmatprep.subr.bf16.mxu0 0
    %2531 = vmatpush1.bf16.msra.mxu0 %v1573
    %2532 = vmatprep.subr.bf16.mxu0 0
    %2533 = vmatpush1.bf16.msra.mxu0 %v1568
    %2534 = vmatprep.subr.bf16.mxu0 0
    %2535 = vmatpush1.bf16.msra.mxu0 %v1563
    %2536 = vmatprep.subr.bf16.mxu0 0
    %2537 = vmatpush1.bf16.msra.mxu0 %v1558
    %2538 = vmatprep.subr.bf16.mxu0 0
    %2539 = vmatpush2.bf16.msra.mxu0 %v1633
    %2540 = vmatprep.subr.bf16.mxu0 0
    %2541 = vmatpush2.bf16.msra.mxu0 %v1628
    %2542 = vmatprep.subr.bf16.mxu0 0
    %2543 = vmatpush2.bf16.msra.mxu0 %v1623
    %2544 = vmatprep.subr.bf16.mxu0 0
    %2545 = vmatpush2.bf16.msra.mxu0 %v1618
    %2546 = vmatprep.subr.bf16.mxu0 0
    %2547 = vmatpush2.bf16.msra.mxu0 %v1613
    %2548 = vmatprep.subr.bf16.mxu0 0
    %2549 = vmatpush2.bf16.msra.mxu0 %v1608
    %2550 = vmatprep.subr.bf16.mxu0 0
    %2551 = vmatpush2.bf16.msra.mxu0 %v1603
    %2552 = vmatprep.subr.bf16.mxu0 0
    %2553 = vmatpush2.bf16.msra.mxu0 %v1598
    %2554 = vmatprep.mubr.bf16.mxu0 %v112
    %2555 = vmatmul.mubr.bf16.gmra.mxu0 %v111
    %v2556 = vpop.f32.mrf.mxu0
    %v2557 = vadd.f32 %v524, %v2556
    %v2558 = vpop.f32.mrf.mxu0
    %v2559 = vpop.f32.mrf.mxu0
    %v2560 = vpop.f32.mrf.mxu0
    %2561 = vdwg.mxu0
    %2562 = vmatprep.subr.bf16.mxu0 0
    %2563 = vmatpush1.bf16.msra.mxu0 %v1673
    %2564 = vmatprep.subr.bf16.mxu0 0
    %2565 = vmatpush1.bf16.msra.mxu0 %v1668
    %2566 = vmatprep.subr.bf16.mxu0 0
    %2567 = vmatpush1.bf16.msra.mxu0 %v1663
    %2568 = vmatprep.subr.bf16.mxu0 0
    %2569 = vmatpush1.bf16.msra.mxu0 %v1658
    %2570 = vmatprep.subr.bf16.mxu0 0
    %2571 = vmatpush1.bf16.msra.mxu0 %v1653
    %2572 = vmatprep.subr.bf16.mxu0 0
    %2573 = vmatpush1.bf16.msra.mxu0 %v1648
    %2574 = vmatprep.subr.bf16.mxu0 0
    %2575 = vmatpush1.bf16.msra.mxu0 %v1643
    %2576 = vmatprep.subr.bf16.mxu0 0
    %2577 = vmatpush1.bf16.msra.mxu0 %v1638
    %2578 = vmatprep.subr.bf16.mxu0 0
    %2579 = vmatpush2.bf16.msra.mxu0 %v1713
    %2580 = vmatprep.subr.bf16.mxu0 0
    %2581 = vmatpush2.bf16.msra.mxu0 %v1708
    %2582 = vmatprep.subr.bf16.mxu0 0
    %2583 = vmatpush2.bf16.msra.mxu0 %v1703
    %2584 = vmatprep.subr.bf16.mxu0 0
    %2585 = vmatpush2.bf16.msra.mxu0 %v1698
    %2586 = vmatprep.subr.bf16.mxu0 0
    %2587 = vmatpush2.bf16.msra.mxu0 %v1693
    %2588 = vmatprep.subr.bf16.mxu0 0
    %2589 = vmatpush2.bf16.msra.mxu0 %v1688
    %2590 = vmatprep.subr.bf16.mxu0 0
    %2591 = vmatpush2.bf16.msra.mxu0 %v1683
    %2592 = vmatprep.subr.bf16.mxu0 0
    %2593 = vmatpush2.bf16.msra.mxu0 %v1678
    %2594 = vmatprep.mubr.bf16.mxu0 %v114
    %2595 = vmatmul.mubr.bf16.gmra.mxu0 %v113
    %v2596 = vpop.f32.mrf.mxu0
    %v2597 = vadd.f32 %v2557, %v2596
    %v2598 = vpop.f32.mrf.mxu0
    %v2599 = vpop.f32.mrf.mxu0
    %v2600 = vpop.f32.mrf.mxu0
    %2601 = vdwg.mxu0
    %2602 = vmatprep.subr.bf16.mxu0 0
    %2603 = vmatpush1.bf16.msra.mxu0 %v1753
    %2604 = vmatprep.subr.bf16.mxu0 0
    %2605 = vmatpush1.bf16.msra.mxu0 %v1748
    %2606 = vmatprep.subr.bf16.mxu0 0
    %2607 = vmatpush1.bf16.msra.mxu0 %v1743
    %2608 = vmatprep.subr.bf16.mxu0 0
    %2609 = vmatpush1.bf16.msra.mxu0 %v1738
    %2610 = vmatprep.subr.bf16.mxu0 0
    %2611 = vmatpush1.bf16.msra.mxu0 %v1733
    %2612 = vmatprep.subr.bf16.mxu0 0
    %2613 = vmatpush1.bf16.msra.mxu0 %v1728
    %2614 = vmatprep.subr.bf16.mxu0 0
    %2615 = vmatpush1.bf16.msra.mxu0 %v1723
    %2616 = vmatprep.subr.bf16.mxu0 0
    %2617 = vmatpush1.bf16.msra.mxu0 %v1718
    %2618 = vmatprep.subr.bf16.mxu0 0
    %2619 = vmatpush2.bf16.msra.mxu0 %v1793
    %2620 = vmatprep.subr.bf16.mxu0 0
    %2621 = vmatpush2.bf16.msra.mxu0 %v1788
    %2622 = vmatprep.subr.bf16.mxu0 0
    %2623 = vmatpush2.bf16.msra.mxu0 %v1783
    %2624 = vmatprep.subr.bf16.mxu0 0
    %2625 = vmatpush2.bf16.msra.mxu0 %v1778
    %2626 = vmatprep.subr.bf16.mxu0 0
    %2627 = vmatpush2.bf16.msra.mxu0 %v1773
    %2628 = vmatprep.subr.bf16.mxu0 0
    %2629 = vmatpush2.bf16.msra.mxu0 %v1768
    %2630 = vmatprep.subr.bf16.mxu0 0
    %2631 = vmatpush2.bf16.msra.mxu0 %v1763
    %2632 = vmatprep.subr.bf16.mxu0 0
    %2633 = vmatpush2.bf16.msra.mxu0 %v1758
    %2634 = vmatprep.mubr.bf16.mxu0 %v116
    %2635 = vmatmul.mubr.bf16.gmra.mxu0 %v115
    %v2636 = vpop.f32.mrf.mxu0
    %v2637 = vadd.f32 %v2597, %v2636
    %v2638 = vpop.f32.mrf.mxu0
    %v2639 = vpop.f32.mrf.mxu0
    %v2640 = vpop.f32.mrf.mxu0
    %2641 = vdwg.mxu0
    %2642 = vmatprep.subr.bf16.mxu0 0
    %2643 = vmatpush1.bf16.msra.mxu0 %v1833
    %2644 = vmatprep.subr.bf16.mxu0 0
    %2645 = vmatpush1.bf16.msra.mxu0 %v1828
    %2646 = vmatprep.subr.bf16.mxu0 0
    %2647 = vmatpush1.bf16.msra.mxu0 %v1823
    %2648 = vmatprep.subr.bf16.mxu0 0
    %2649 = vmatpush1.bf16.msra.mxu0 %v1818
    %2650 = vmatprep.subr.bf16.mxu0 0
    %2651 = vmatpush1.bf16.msra.mxu0 %v1813
    %2652 = vmatprep.subr.bf16.mxu0 0
    %2653 = vmatpush1.bf16.msra.mxu0 %v1808
    %2654 = vmatprep.subr.bf16.mxu0 0
    %2655 = vmatpush1.bf16.msra.mxu0 %v1803
    %2656 = vmatprep.subr.bf16.mxu0 0
    %2657 = vmatpush1.bf16.msra.mxu0 %v1798
    %2658 = vmatprep.subr.bf16.mxu0 0
    %2659 = vmatpush2.bf16.msra.mxu0 %v1873
    %2660 = vmatprep.subr.bf16.mxu0 0
    %2661 = vmatpush2.bf16.msra.mxu0 %v1868
    %2662 = vmatprep.subr.bf16.mxu0 0
    %2663 = vmatpush2.bf16.msra.mxu0 %v1863
    %2664 = vmatprep.subr.bf16.mxu0 0
    %2665 = vmatpush2.bf16.msra.mxu0 %v1858
    %2666 = vmatprep.subr.bf16.mxu0 0
    %2667 = vmatpush2.bf16.msra.mxu0 %v1853
    %2668 = vmatprep.subr.bf16.mxu0 0
    %2669 = vmatpush2.bf16.msra.mxu0 %v1848
    %2670 = vmatprep.subr.bf16.mxu0 0
    %2671 = vmatpush2.bf16.msra.mxu0 %v1843
    %2672 = vmatprep.subr.bf16.mxu0 0
    %2673 = vmatpush2.bf16.msra.mxu0 %v1838
    %2674 = vmatprep.mubr.bf16.mxu0 %v118
    %2675 = vmatmul.mubr.bf16.gmra.mxu0 %v117
    %v2676 = vpop.f32.mrf.mxu0
    %v2677 = vadd.f32 %v2637, %v2676
    %v2678 = vpop.f32.mrf.mxu0
    %v2679 = vpop.f32.mrf.mxu0
    %v2680 = vpop.f32.mrf.mxu0
    %2681 = vdwg.mxu0
    %v2682 = vmax.f32 %v2352, 0.0
    %v2683 = vmax.f32 %v2354, 0.0
    %v2684 = vmax.f32 %v2516, 0.0
    %v2685 = vmax.f32 %v2518, 0.0
    %v2686 = vmax.f32 %v2677, 0.0
    %v2687 = vpack.c.bf16 %v2682, %v2682
    %v2688 = vpack.c.bf16 %v2683, %v2683
    %v2689 = vpack.c.bf16 %v2684, %v2684
    %v2690 = vpack.c.bf16 %v2685, %v2685
    %v2691 = vpack.c.bf16 %v2686, %v2686
    %v2692 = vld [vmem:[#allocation8] sm:$0xff]
    %v2693 = vld [vmem:[#allocation8 + $0x8] sm:$0xf]
    %v2694 = vld [vmem:[#allocation8 + $0xc] sm:$0xff]
    %v2695 = vld [vmem:[#allocation8 + $0x14] sm:$0xf]
    %v2696 = vld [vmem:[#allocation8 + $0x18] sm:$0xff]
    %v2697 = vld [vmem:[#allocation8 + $0x20] sm:$0xf]
    %v2698 = vld [vmem:[#allocation8 + $0x24] sm:$0xff]
    %v2699 = vld [vmem:[#allocation8 + $0x2c] sm:$0xf]
    %v2700 = vld [vmem:[#allocation8 + $0x30] sm:$0xff]
    %v2701 = vld [vmem:[#allocation8 + $0x38] sm:$0xf]
    %v2702 = vld [vmem:[#allocation8 + $0x3c] sm:$0xff]
    %v2703 = vld [vmem:[#allocation8 + $0x44] sm:$0xf]
    %v2704 = vld [vmem:[#allocation8 + $0x48] sm:$0xff]
    %v2705 = vld [vmem:[#allocation8 + $0x50] sm:$0xf]
    %v2706 = vld [vmem:[#allocation8 + $0x54] sm:$0xff]
    %v2707 = vld [vmem:[#allocation8 + $0x5c] sm:$0xf]
    %v2708 = vld [vmem:[#allocation8 + $0x60] sm:$0xff]
    %v2709 = vld [vmem:[#allocation8 + $0x68] sm:$0xf]
    %v2710 = vld [vmem:[#allocation8 + $0x6c] sm:$0xff]
    %v2711 = vld [vmem:[#allocation8 + $0x74] sm:$0xf]
    %v2712 = vld [vmem:[#allocation8 + $0x78] sm:$0xff]
    %v2713 = vld [vmem:[#allocation8 + $0x80] sm:$0xf]
    %v2714 = vld [vmem:[#allocation8 + $0x84] sm:$0xff]
    %v2715 = vld [vmem:[#allocation8 + $0x8c] sm:$0xf]
    %v2716 = vld [vmem:[#allocation8 + $0x90] sm:$0xff]
    %v2717 = vld [vmem:[#allocation8 + $0x98] sm:$0xf]
    %v2718 = vld [vmem:[#allocation8 + $0x9c] sm:$0xff]
    %v2719 = vld [vmem:[#allocation8 + $0xa4] sm:$0xf]
    %v2720 = vld [vmem:[#allocation8 + $0xa8] sm:$0xff]
    %v2721 = vld [vmem:[#allocation8 + $0xb0] sm:$0xf]
    %v2722 = vld [vmem:[#allocation8 + $0xb4] sm:$0xff]
    %v2723 = vld [vmem:[#allocation8 + $0xbc] sm:$0xf]
    %v2724 = vld [vmem:[#allocation8 + $0xc0] sm:$0xff]
    %v2725 = vld [vmem:[#allocation8 + $0xc8] sm:$0xf]
    %v2726 = vld [vmem:[#allocation8 + $0xcc] sm:$0xff]
    %v2727 = vld [vmem:[#allocation8 + $0xd4] sm:$0xf]
    %v2728 = vld [vmem:[#allocation8 + $0xd8] sm:$0xff]
    %v2729 = vld [vmem:[#allocation8 + $0xe0] sm:$0xf]
    %v2730 = vld [vmem:[#allocation8 + $0xe4] sm:$0xff]
    %v2731 = vld [vmem:[#allocation8 + $0xec] sm:$0xf]
    %v2732 = vld [vmem:[#allocation8 + $0xf0] sm:$0xff]
    %v2733 = vld [vmem:[#allocation8 + $0xf8] sm:$0xf]
    %v2734 = vld [vmem:[#allocation8 + $0xfc] sm:$0xff]
    %v2735 = vld [vmem:[#allocation8 + $0x104] sm:$0xf]
    %v2736 = vld [vmem:[#allocation8 + $0x108] sm:$0xff]
    %v2737 = vld [vmem:[#allocation8 + $0x110] sm:$0xf]
    %v2738 = vld [vmem:[#allocation8 + $0x114] sm:$0xff]
    %v2739 = vld [vmem:[#allocation8 + $0x11c] sm:$0xf]
    %v2740 = vld [vmem:[#allocation8 + $0x120] sm:$0xff]
    %v2741 = vld [vmem:[#allocation8 + $0x128] sm:$0xf]
    %v2742 = vld [vmem:[#allocation8 + $0x12c] sm:$0xff]
    %v2743 = vld [vmem:[#allocation8 + $0x134] sm:$0xf]
    %v2744 = vld [vmem:[#allocation8 + $0x138] sm:$0xff]
    %v2745 = vld [vmem:[#allocation8 + $0x140] sm:$0xf]
    %v2746 = vld [vmem:[#allocation8 + $0x144] sm:$0xff]
    %v2747 = vld [vmem:[#allocation8 + $0x14c] sm:$0xf]
    %v2748 = vld [vmem:[#allocation8 + $0x150] sm:$0xff]
    %v2749 = vld [vmem:[#allocation8 + $0x158] sm:$0xf]
    %v2750 = vld [vmem:[#allocation8 + $0x15c] sm:$0xff]
    %v2751 = vld [vmem:[#allocation8 + $0x164] sm:$0xf]
    %v2752 = vld [vmem:[#allocation8 + $0x168] sm:$0xff]
    %v2753 = vld [vmem:[#allocation8 + $0x170] sm:$0xf]
    %v2754 = vld [vmem:[#allocation8 + $0x174] sm:$0xff]
    %v2755 = vld [vmem:[#allocation8 + $0x17c] sm:$0xf]
    %v2756 = vld [vmem:[#allocation8 + $0x180] sm:$0xff]
    %v2757 = vld [vmem:[#allocation8 + $0x188] sm:$0xf]
    %v2758 = vld [vmem:[#allocation8 + $0x18c] sm:$0xff]
    %v2759 = vld [vmem:[#allocation8 + $0x194] sm:$0xf]
    %v2760 = vld [vmem:[#allocation8 + $0x198] sm:$0xff]
    %v2761 = vld [vmem:[#allocation8 + $0x1a0] sm:$0xf]
    %v2762 = vld [vmem:[#allocation8 + $0x1a4] sm:$0xff]
    %v2763 = vld [vmem:[#allocation8 + $0x1ac] sm:$0xf]
    %v2764 = vld [vmem:[#allocation8 + $0x1b0] sm:$0xff]
    %v2765 = vld [vmem:[#allocation8 + $0x1b8] sm:$0xf]
    %v2766 = vld [vmem:[#allocation8 + $0x1bc] sm:$0xff]
    %v2767 = vld [vmem:[#allocation8 + $0x1c4] sm:$0xf]
    %v2768 = vld [vmem:[#allocation8 + $0x1c8] sm:$0xff]
    %v2769 = vld [vmem:[#allocation8 + $0x1d0] sm:$0xf]
    %v2770 = vld [vmem:[#allocation8 + $0x1d4] sm:$0xff]
    %v2771 = vld [vmem:[#allocation8 + $0x1dc] sm:$0xf]
    %v2772 = vld [vmem:[#allocation8 + $0x1e0] sm:$0xff]
    %v2773 = vld [vmem:[#allocation8 + $0x1e8] sm:$0xf]
    %v2774 = vld [vmem:[#allocation8 + $0x1ec] sm:$0xff]
    %v2775 = vld [vmem:[#allocation8 + $0x1f4] sm:$0xf]
    %v2776 = vld [vmem:[#allocation8 + $0x1f8] sm:$0xff]
    %v2777 = vld [vmem:[#allocation8 + $0x200] sm:$0xf]
    %v2778 = vld [vmem:[#allocation8 + $0x204] sm:$0xff]
    %v2779 = vld [vmem:[#allocation8 + $0x20c] sm:$0xf]
    %v2780 = vld [vmem:[#allocation8 + $0x210] sm:$0xff]
    %v2781 = vld [vmem:[#allocation8 + $0x218] sm:$0xf]
    %v2782 = vld [vmem:[#allocation8 + $0x21c] sm:$0xff]
    %v2783 = vld [vmem:[#allocation8 + $0x224] sm:$0xf]
    %v2784 = vld [vmem:[#allocation8 + $0x228] sm:$0xff]
    %v2785 = vld [vmem:[#allocation8 + $0x230] sm:$0xf]
    %v2786 = vld [vmem:[#allocation8 + $0x234] sm:$0xff]
    %v2787 = vld [vmem:[#allocation8 + $0x23c] sm:$0xf]
    %v2788 = vld [vmem:[#allocation8 + $0x240] sm:$0xff]
    %v2789 = vld [vmem:[#allocation8 + $0x248] sm:$0xf]
    %v2790 = vld [vmem:[#allocation8 + $0x24c] sm:$0xff]
    %v2791 = vld [vmem:[#allocation8 + $0x254] sm:$0xf]
    %v2792 = vld [vmem:[#allocation8 + $0x258] sm:$0xff]
    %v2793 = vld [vmem:[#allocation8 + $0x260] sm:$0xf]
    %v2794 = vld [vmem:[#allocation8 + $0x264] sm:$0xff]
    %v2795 = vld [vmem:[#allocation8 + $0x26c] sm:$0xf]
    %v2796 = vld [vmem:[#allocation8 + $0x270] sm:$0xff]
    %v2797 = vld [vmem:[#allocation8 + $0x278] sm:$0xf]
    %v2798 = vld [vmem:[#allocation8 + $0x27c] sm:$0xff]
    %v2799 = vld [vmem:[#allocation8 + $0x284] sm:$0xf]
    %v2800 = vld [vmem:[#allocation8 + $0x288] sm:$0xff]
    %v2801 = vld [vmem:[#allocation8 + $0x290] sm:$0xf]
    %v2802 = vld [vmem:[#allocation8 + $0x294] sm:$0xff]
    %v2803 = vld [vmem:[#allocation8 + $0x29c] sm:$0xf]
    %v2804 = vld [vmem:[#allocation8 + $0x2a0] sm:$0xff]
    %v2805 = vld [vmem:[#allocation8 + $0x2a8] sm:$0xf]
    %v2806 = vld [vmem:[#allocation8 + $0x2ac] sm:$0xff]
    %v2807 = vld [vmem:[#allocation8 + $0x2b4] sm:$0xf]
    %v2808 = vld [vmem:[#allocation8 + $0x2b8] sm:$0xff]
    %v2809 = vld [vmem:[#allocation8 + $0x2c0] sm:$0xf]
    %v2810 = vld [vmem:[#allocation8 + $0x2c4] sm:$0xff]
    %v2811 = vld [vmem:[#allocation8 + $0x2cc] sm:$0xf]
    %v2812 = vld [vmem:[#allocation8 + $0x2d0] sm:$0xff]
    %v2813 = vld [vmem:[#allocation8 + $0x2d8] sm:$0xf]
    %v2814 = vld [vmem:[#allocation8 + $0x2dc] sm:$0xff]
    %v2815 = vld [vmem:[#allocation8 + $0x2e4] sm:$0xf]
    %v2816 = vld [vmem:[#allocation8 + $0x2e8] sm:$0xff]
    %v2817 = vld [vmem:[#allocation8 + $0x2f0] sm:$0xf]
    %v2818 = vld [vmem:[#allocation8 + $0x2f4] sm:$0xff]
    %v2819 = vld [vmem:[#allocation8 + $0x2fc] sm:$0xf]
    %v2820 = vld [vmem:[#allocation8 + $0x300] sm:$0xff]
    %v2821 = vld [vmem:[#allocation8 + $0x308] sm:$0xf]
    %v2822 = vld [vmem:[#allocation8 + $0x30c] sm:$0xff]
    %v2823 = vld [vmem:[#allocation8 + $0x314] sm:$0xf]
    %v2824 = vld [vmem:[#allocation8 + $0x318] sm:$0xff]
    %v2825 = vld [vmem:[#allocation8 + $0x320] sm:$0xf]
    %v2826 = vld [vmem:[#allocation8 + $0x324] sm:$0xff]
    %v2827 = vld [vmem:[#allocation8 + $0x32c] sm:$0xf]
    %v2828 = vld [vmem:[#allocation8 + $0x330] sm:$0xff]
    %v2829 = vld [vmem:[#allocation8 + $0x338] sm:$0xf]
    %v2830 = vld [vmem:[#allocation8 + $0x33c] sm:$0xff]
    %v2831 = vld [vmem:[#allocation8 + $0x344] sm:$0xf]
    %v2832 = vld [vmem:[#allocation8 + $0x348] sm:$0xff]
    %v2833 = vld [vmem:[#allocation8 + $0x350] sm:$0xf]
    %v2834 = vld [vmem:[#allocation8 + $0x354] sm:$0xff]
    %v2835 = vld [vmem:[#allocation8 + $0x35c] sm:$0xf]
    %v2836 = vld [vmem:[#allocation8 + $0x360] sm:$0xff]
    %v2837 = vld [vmem:[#allocation8 + $0x368] sm:$0xf]
    %v2838 = vld [vmem:[#allocation8 + $0x36c] sm:$0xff]
    %v2839 = vld [vmem:[#allocation8 + $0x374] sm:$0xf]
    %v2840 = vld [vmem:[#allocation8 + $0x378] sm:$0xff]
    %v2841 = vld [vmem:[#allocation8 + $0x380] sm:$0xf]
    %v2842 = vld [vmem:[#allocation8 + $0x384] sm:$0xff]
    %v2843 = vld [vmem:[#allocation8 + $0x38c] sm:$0xf]
    %v2844 = vld [vmem:[#allocation8 + $0x390] sm:$0xff]
    %v2845 = vld [vmem:[#allocation8 + $0x398] sm:$0xf]
    %v2846 = vld [vmem:[#allocation8 + $0x39c] sm:$0xff]
    %v2847 = vld [vmem:[#allocation8 + $0x3a4] sm:$0xf]
    %v2848 = vld [vmem:[#allocation8 + $0x3a8] sm:$0xff]
    %v2849 = vld [vmem:[#allocation8 + $0x3b0] sm:$0xf]
    %v2850 = vld [vmem:[#allocation8 + $0x3b4] sm:$0xff]
    %v2851 = vld [vmem:[#allocation8 + $0x3bc] sm:$0xf]
    %v2852 = vld [vmem:[#allocation10] sm:$0x7]
    %v2854 = vlaneseq
    %v2855 = vshrl.u32 %v2854, 7
    %v2856 = vsub.s32 0, %v2855
    %v2857 = vrot.slane %v2852, %v2856
    %v2858 = vlaneseq
    %v2859 = vshrl.u32 %v2858, 7
    %v2860 = vsub.s32 1, %v2859
    %v2861 = vrot.slane %v2852, %v2860
    %v2862 = vlaneseq
    %v2863 = vshrl.u32 %v2862, 7
    %v2864 = vsub.s32 2, %v2863
    %v2865 = vrot.slane %v2852, %v2864
    %v3029 = vunpack.c.l.b16 %v2692
    %v3030 = vunpack.c.h.b16 %v2692
    %v3031 = vunpack.c.l.b16 %v2693
    %v3032 = vunpack.c.l.b16 %v2694
    %v3033 = vunpack.c.h.b16 %v2694
    %v3034 = vunpack.c.l.b16 %v2695
    %v3035 = vunpack.c.l.b16 %v2696
    %v3036 = vunpack.c.h.b16 %v2696
    %v3037 = vunpack.c.l.b16 %v2697
    %v3038 = vunpack.c.l.b16 %v2698
    %v3039 = vunpack.c.h.b16 %v2698
    %v3040 = vunpack.c.l.b16 %v2699
    %v3041 = vunpack.c.l.b16 %v2700
    %v3042 = vunpack.c.h.b16 %v2700
    %v3043 = vunpack.c.l.b16 %v2701
    %v3044 = vunpack.c.l.b16 %v2702
    %v3045 = vunpack.c.h.b16 %v2702
    %v3046 = vunpack.c.l.b16 %v2703
    %v3047 = vunpack.c.l.b16 %v2704
    %v3048 = vunpack.c.h.b16 %v2704
    %v3049 = vunpack.c.l.b16 %v2705
    %v3050 = vunpack.c.l.b16 %v2706
    %v3051 = vunpack.c.h.b16 %v2706
    %v3052 = vunpack.c.l.b16 %v2707
    %v3053 = vunpack.c.l.b16 %v2708
    %v3054 = vunpack.c.h.b16 %v2708
    %v3055 = vunpack.c.l.b16 %v2709
    %v3056 = vunpack.c.l.b16 %v2710
    %v3057 = vunpack.c.h.b16 %v2710
    %v3058 = vunpack.c.l.b16 %v2711
    %v3059 = vunpack.c.l.b16 %v2712
    %v3060 = vunpack.c.h.b16 %v2712
    %v3061 = vunpack.c.l.b16 %v2713
    %v3062 = vunpack.c.l.b16 %v2714
    %v3063 = vunpack.c.h.b16 %v2714
    %v3064 = vunpack.c.l.b16 %v2715
    %v3065 = vunpack.c.l.b16 %v2716
    %v3066 = vunpack.c.h.b16 %v2716
    %v3067 = vunpack.c.l.b16 %v2717
    %v3068 = vunpack.c.l.b16 %v2718
    %v3069 = vunpack.c.h.b16 %v2718
    %v3070 = vunpack.c.l.b16 %v2719
    %v3071 = vunpack.c.l.b16 %v2720
    %v3072 = vunpack.c.h.b16 %v2720
    %v3073 = vunpack.c.l.b16 %v2721
    %v3074 = vunpack.c.l.b16 %v2722
    %v3075 = vunpack.c.h.b16 %v2722
    %v3076 = vunpack.c.l.b16 %v2723
    %v3077 = vunpack.c.l.b16 %v2724
    %v3078 = vunpack.c.h.b16 %v2724
    %v3079 = vunpack.c.l.b16 %v2725
    %v3080 = vunpack.c.l.b16 %v2726
    %v3081 = vunpack.c.h.b16 %v2726
    %v3082 = vunpack.c.l.b16 %v2727
    %v3083 = vunpack.c.l.b16 %v2728
    %v3084 = vunpack.c.h.b16 %v2728
    %v3085 = vunpack.c.l.b16 %v2729
    %v3086 = vunpack.c.l.b16 %v2730
    %v3087 = vunpack.c.h.b16 %v2730
    %v3088 = vunpack.c.l.b16 %v2731
    %v3089 = vunpack.c.l.b16 %v2732
    %v3090 = vunpack.c.h.b16 %v2732
    %v3091 = vunpack.c.l.b16 %v2733
    %v3092 = vunpack.c.l.b16 %v2734
    %v3093 = vunpack.c.h.b16 %v2734
    %v3094 = vunpack.c.l.b16 %v2735
    %v3095 = vunpack.c.l.b16 %v2736
    %v3096 = vunpack.c.h.b16 %v2736
    %v3097 = vunpack.c.l.b16 %v2737
    %v3098 = vunpack.c.l.b16 %v2738
    %v3099 = vunpack.c.h.b16 %v2738
    %v3100 = vunpack.c.l.b16 %v2739
    %v3101 = vunpack.c.l.b16 %v2740
    %v3102 = vunpack.c.h.b16 %v2740
    %v3103 = vunpack.c.l.b16 %v2741
    %v3104 = vunpack.c.l.b16 %v2742
    %v3105 = vunpack.c.h.b16 %v2742
    %v3106 = vunpack.c.l.b16 %v2743
    %v3107 = vunpack.c.l.b16 %v2744
    %v3108 = vunpack.c.h.b16 %v2744
    %v3109 = vunpack.c.l.b16 %v2745
    %v3110 = vunpack.c.l.b16 %v2746
    %v3111 = vunpack.c.h.b16 %v2746
    %v3112 = vunpack.c.l.b16 %v2747
    %v3113 = vunpack.c.l.b16 %v2748
    %v3114 = vunpack.c.h.b16 %v2748
    %v3115 = vunpack.c.l.b16 %v2749
    %v3116 = vunpack.c.l.b16 %v2750
    %v3117 = vunpack.c.h.b16 %v2750
    %v3118 = vunpack.c.l.b16 %v2751
    %v3119 = vunpack.c.l.b16 %v2752
    %v3120 = vunpack.c.h.b16 %v2752
    %v3121 = vunpack.c.l.b16 %v2753
    %v3122 = vunpack.c.l.b16 %v2754
    %v3123 = vunpack.c.h.b16 %v2754
    %v3124 = vunpack.c.l.b16 %v2755
    %v3125 = vunpack.c.l.b16 %v2756
    %v3126 = vunpack.c.h.b16 %v2756
    %v3127 = vunpack.c.l.b16 %v2757
    %v3128 = vunpack.c.l.b16 %v2758
    %v3129 = vunpack.c.h.b16 %v2758
    %v3130 = vunpack.c.l.b16 %v2759
    %v3131 = vunpack.c.l.b16 %v2760
    %v3132 = vunpack.c.h.b16 %v2760
    %v3133 = vunpack.c.l.b16 %v2761
    %v3134 = vunpack.c.l.b16 %v2762
    %v3135 = vunpack.c.h.b16 %v2762
    %v3136 = vunpack.c.l.b16 %v2763
    %v3137 = vunpack.c.l.b16 %v2764
    %v3138 = vunpack.c.h.b16 %v2764
    %v3139 = vunpack.c.l.b16 %v2765
    %v3140 = vunpack.c.l.b16 %v2766
    %v3141 = vunpack.c.h.b16 %v2766
    %v3142 = vunpack.c.l.b16 %v2767
    %v3143 = vunpack.c.l.b16 %v2768
    %v3144 = vunpack.c.h.b16 %v2768
    %v3145 = vunpack.c.l.b16 %v2769
    %v3146 = vunpack.c.l.b16 %v2770
    %v3147 = vunpack.c.h.b16 %v2770
    %v3148 = vunpack.c.l.b16 %v2771
    %v3149 = vunpack.c.l.b16 %v2772
    %v3150 = vunpack.c.h.b16 %v2772
    %v3151 = vunpack.c.l.b16 %v2773
    %v3152 = vunpack.c.l.b16 %v2774
    %v3153 = vunpack.c.h.b16 %v2774
    %v3154 = vunpack.c.l.b16 %v2775
    %v3155 = vunpack.c.l.b16 %v2776
    %v3156 = vunpack.c.h.b16 %v2776
    %v3157 = vunpack.c.l.b16 %v2777
    %v3158 = vunpack.c.l.b16 %v2778
    %v3159 = vunpack.c.h.b16 %v2778
    %v3160 = vunpack.c.l.b16 %v2779
    %v3161 = vunpack.c.l.b16 %v2780
    %v3162 = vunpack.c.h.b16 %v2780
    %v3163 = vunpack.c.l.b16 %v2781
    %v3164 = vunpack.c.l.b16 %v2782
    %v3165 = vunpack.c.h.b16 %v2782
    %v3166 = vunpack.c.l.b16 %v2783
    %v3167 = vunpack.c.l.b16 %v2784
    %v3168 = vunpack.c.h.b16 %v2784
    %v3169 = vunpack.c.l.b16 %v2785
    %v3170 = vunpack.c.l.b16 %v2786
    %v3171 = vunpack.c.h.b16 %v2786
    %v3172 = vunpack.c.l.b16 %v2787
    %v3173 = vunpack.c.l.b16 %v2788
    %v3174 = vunpack.c.h.b16 %v2788
    %v3175 = vunpack.c.l.b16 %v2789
    %v3176 = vunpack.c.l.b16 %v2790
    %v3177 = vunpack.c.h.b16 %v2790
    %v3178 = vunpack.c.l.b16 %v2791
    %v3179 = vunpack.c.l.b16 %v2792
    %v3180 = vunpack.c.h.b16 %v2792
    %v3181 = vunpack.c.l.b16 %v2793
    %v3182 = vunpack.c.l.b16 %v2794
    %v3183 = vunpack.c.h.b16 %v2794
    %v3184 = vunpack.c.l.b16 %v2795
    %v3185 = vunpack.c.l.b16 %v2796
    %v3186 = vunpack.c.h.b16 %v2796
    %v3187 = vunpack.c.l.b16 %v2797
    %v3188 = vunpack.c.l.b16 %v2798
    %v3189 = vunpack.c.h.b16 %v2798
    %v3190 = vunpack.c.l.b16 %v2799
    %v3191 = vunpack.c.l.b16 %v2800
    %v3192 = vunpack.c.h.b16 %v2800
    %v3193 = vunpack.c.l.b16 %v2801
    %v3194 = vunpack.c.l.b16 %v2802
    %v3195 = vunpack.c.h.b16 %v2802
    %v3196 = vunpack.c.l.b16 %v2803
    %v3197 = vunpack.c.l.b16 %v2804
    %v3198 = vunpack.c.h.b16 %v2804
    %v3199 = vunpack.c.l.b16 %v2805
    %v3200 = vunpack.c.l.b16 %v2806
    %v3201 = vunpack.c.h.b16 %v2806
    %v3202 = vunpack.c.l.b16 %v2807
    %v3203 = vunpack.c.l.b16 %v2808
    %v3204 = vunpack.c.h.b16 %v2808
    %v3205 = vunpack.c.l.b16 %v2809
    %v3206 = vunpack.c.l.b16 %v2810
    %v3207 = vunpack.c.h.b16 %v2810
    %v3208 = vunpack.c.l.b16 %v2811
    %v3209 = vunpack.c.l.b16 %v2812
    %v3210 = vunpack.c.h.b16 %v2812
    %v3211 = vunpack.c.l.b16 %v2813
    %v3212 = vunpack.c.l.b16 %v2814
    %v3213 = vunpack.c.h.b16 %v2814
    %v3214 = vunpack.c.l.b16 %v2815
    %v3215 = vunpack.c.l.b16 %v2816
    %v3216 = vunpack.c.h.b16 %v2816
    %v3217 = vunpack.c.l.b16 %v2817
    %v3218 = vunpack.c.l.b16 %v2818
    %v3219 = vunpack.c.h.b16 %v2818
    %v3220 = vunpack.c.l.b16 %v2819
    %v3221 = vunpack.c.l.b16 %v2820
    %v3222 = vunpack.c.h.b16 %v2820
    %v3223 = vunpack.c.l.b16 %v2821
    %v3224 = vunpack.c.l.b16 %v2822
    %v3225 = vunpack.c.h.b16 %v2822
    %v3226 = vunpack.c.l.b16 %v2823
    %v3227 = vunpack.c.l.b16 %v2824
    %v3228 = vunpack.c.h.b16 %v2824
    %v3229 = vunpack.c.l.b16 %v2825
    %v3230 = vunpack.c.l.b16 %v2826
    %v3231 = vunpack.c.h.b16 %v2826
    %v3232 = vunpack.c.l.b16 %v2827
    %v3233 = vunpack.c.l.b16 %v2828
    %v3234 = vunpack.c.h.b16 %v2828
    %v3235 = vunpack.c.l.b16 %v2829
    %v3236 = vunpack.c.l.b16 %v2830
    %v3237 = vunpack.c.h.b16 %v2830
    %v3238 = vunpack.c.l.b16 %v2831
    %v3239 = vunpack.c.l.b16 %v2832
    %v3240 = vunpack.c.h.b16 %v2832
    %v3241 = vunpack.c.l.b16 %v2833
    %v3242 = vunpack.c.l.b16 %v2834
    %v3243 = vunpack.c.h.b16 %v2834
    %v3244 = vunpack.c.l.b16 %v2835
    %v3245 = vunpack.c.l.b16 %v2836
    %v3246 = vunpack.c.h.b16 %v2836
    %v3247 = vunpack.c.l.b16 %v2837
    %v3248 = vunpack.c.l.b16 %v2838
    %v3249 = vunpack.c.h.b16 %v2838
    %v3250 = vunpack.c.l.b16 %v2839
    %v3251 = vunpack.c.l.b16 %v2840
    %v3252 = vunpack.c.h.b16 %v2840
    %v3253 = vunpack.c.l.b16 %v2841
    %v3254 = vunpack.c.l.b16 %v2842
    %v3255 = vunpack.c.h.b16 %v2842
    %v3256 = vunpack.c.l.b16 %v2843
    %v3257 = vunpack.c.l.b16 %v2844
    %v3258 = vunpack.c.h.b16 %v2844
    %v3259 = vunpack.c.l.b16 %v2845
    %v3260 = vunpack.c.l.b16 %v2846
    %v3261 = vunpack.c.h.b16 %v2846
    %v3262 = vunpack.c.l.b16 %v2847
    %v3263 = vunpack.c.l.b16 %v2848
    %v3264 = vunpack.c.h.b16 %v2848
    %v3265 = vunpack.c.l.b16 %v2849
    %v3266 = vunpack.c.l.b16 %v2850
    %v3267 = vunpack.c.h.b16 %v2850
    %v3268 = vunpack.c.l.b16 %v2851
    %v3269 = vpack.c.b16 %v3032, %v3029
    %v3270 = vpack.c.b16 %v3033, %v3030
    %v3271 = vpack.c.b16 %v3034, %v3031
    %v3272 = vpack.c.b16 %v3038, %v3035
    %v3273 = vpack.c.b16 %v3039, %v3036
    %v3274 = vpack.c.b16 %v3040, %v3037
    %v3275 = vpack.c.b16 %v3044, %v3041
    %v3276 = vpack.c.b16 %v3045, %v3042
    %v3277 = vpack.c.b16 %v3046, %v3043
    %v3278 = vpack.c.b16 %v3050, %v3047
    %v3279 = vpack.c.b16 %v3051, %v3048
    %v3280 = vpack.c.b16 %v3052, %v3049
    %v3281 = vpack.c.b16 %v3056, %v3053
    %v3282 = vpack.c.b16 %v3057, %v3054
    %v3283 = vpack.c.b16 %v3058, %v3055
    %v3284 = vpack.c.b16 %v3062, %v3059
    %v3285 = vpack.c.b16 %v3063, %v3060
    %v3286 = vpack.c.b16 %v3064, %v3061
    %v3287 = vpack.c.b16 %v3068, %v3065
    %v3288 = vpack.c.b16 %v3069, %v3066
    %v3289 = vpack.c.b16 %v3070, %v3067
    %v3290 = vpack.c.b16 %v3074, %v3071
    %v3291 = vpack.c.b16 %v3075, %v3072
    %v3292 = vpack.c.b16 %v3076, %v3073
    %v3293 = vpack.c.b16 %v3080, %v3077
    %v3294 = vpack.c.b16 %v3081, %v3078
    %v3295 = vpack.c.b16 %v3082, %v3079
    %v3296 = vpack.c.b16 %v3086, %v3083
    %v3297 = vpack.c.b16 %v3087, %v3084
    %v3298 = vpack.c.b16 %v3088, %v3085
    %v3299 = vpack.c.b16 %v3092, %v3089
    %v3300 = vpack.c.b16 %v3093, %v3090
    %v3301 = vpack.c.b16 %v3094, %v3091
    %v3302 = vpack.c.b16 %v3098, %v3095
    %v3303 = vpack.c.b16 %v3099, %v3096
    %v3304 = vpack.c.b16 %v3100, %v3097
    %v3305 = vpack.c.b16 %v3104, %v3101
    %v3306 = vpack.c.b16 %v3105, %v3102
    %v3307 = vpack.c.b16 %v3106, %v3103
    %v3308 = vpack.c.b16 %v3110, %v3107
    %v3309 = vpack.c.b16 %v3111, %v3108
    %v3310 = vpack.c.b16 %v3112, %v3109
    %v3311 = vpack.c.b16 %v3116, %v3113
    %v3312 = vpack.c.b16 %v3117, %v3114
    %v3313 = vpack.c.b16 %v3118, %v3115
    %v3314 = vpack.c.b16 %v3122, %v3119
    %v3315 = vpack.c.b16 %v3123, %v3120
    %v3316 = vpack.c.b16 %v3124, %v3121
    %v3317 = vpack.c.b16 %v3128, %v3125
    %v3318 = vpack.c.b16 %v3129, %v3126
    %v3319 = vpack.c.b16 %v3130, %v3127
    %v3320 = vpack.c.b16 %v3134, %v3131
    %v3321 = vpack.c.b16 %v3135, %v3132
    %v3322 = vpack.c.b16 %v3136, %v3133
    %v3323 = vpack.c.b16 %v3140, %v3137
    %v3324 = vpack.c.b16 %v3141, %v3138
    %v3325 = vpack.c.b16 %v3142, %v3139
    %v3326 = vpack.c.b16 %v3146, %v3143
    %v3327 = vpack.c.b16 %v3147, %v3144
    %v3328 = vpack.c.b16 %v3148, %v3145
    %v3329 = vpack.c.b16 %v3152, %v3149
    %v3330 = vpack.c.b16 %v3153, %v3150
    %v3331 = vpack.c.b16 %v3154, %v3151
    %v3332 = vpack.c.b16 %v3158, %v3155
    %v3333 = vpack.c.b16 %v3159, %v3156
    %v3334 = vpack.c.b16 %v3160, %v3157
    %v3335 = vpack.c.b16 %v3164, %v3161
    %v3336 = vpack.c.b16 %v3165, %v3162
    %v3337 = vpack.c.b16 %v3166, %v3163
    %v3338 = vpack.c.b16 %v3170, %v3167
    %v3339 = vpack.c.b16 %v3171, %v3168
    %v3340 = vpack.c.b16 %v3172, %v3169
    %v3341 = vpack.c.b16 %v3176, %v3173
    %v3342 = vpack.c.b16 %v3177, %v3174
    %v3343 = vpack.c.b16 %v3178, %v3175
    %v3344 = vpack.c.b16 %v3182, %v3179
    %v3345 = vpack.c.b16 %v3183, %v3180
    %v3346 = vpack.c.b16 %v3184, %v3181
    %v3347 = vpack.c.b16 %v3188, %v3185
    %v3348 = vpack.c.b16 %v3189, %v3186
    %v3349 = vpack.c.b16 %v3190, %v3187
    %v3350 = vpack.c.b16 %v3194, %v3191
    %v3351 = vpack.c.b16 %v3195, %v3192
    %v3352 = vpack.c.b16 %v3196, %v3193
    %v3353 = vpack.c.b16 %v3200, %v3197
    %v3354 = vpack.c.b16 %v3201, %v3198
    %v3355 = vpack.c.b16 %v3202, %v3199
    %v3356 = vpack.c.b16 %v3206, %v3203
    %v3357 = vpack.c.b16 %v3207, %v3204
    %v3358 = vpack.c.b16 %v3208, %v3205
    %v3359 = vpack.c.b16 %v3212, %v3209
    %v3360 = vpack.c.b16 %v3213, %v3210
    %v3361 = vpack.c.b16 %v3214, %v3211
    %v3362 = vpack.c.b16 %v3218, %v3215
    %v3363 = vpack.c.b16 %v3219, %v3216
    %v3364 = vpack.c.b16 %v3220, %v3217
    %v3365 = vpack.c.b16 %v3224, %v3221
    %v3366 = vpack.c.b16 %v3225, %v3222
    %v3367 = vpack.c.b16 %v3226, %v3223
    %v3368 = vpack.c.b16 %v3230, %v3227
    %v3369 = vpack.c.b16 %v3231, %v3228
    %v3370 = vpack.c.b16 %v3232, %v3229
    %v3371 = vpack.c.b16 %v3236, %v3233
    %v3372 = vpack.c.b16 %v3237, %v3234
    %v3373 = vpack.c.b16 %v3238, %v3235
    %v3374 = vpack.c.b16 %v3242, %v3239
    %v3375 = vpack.c.b16 %v3243, %v3240
    %v3376 = vpack.c.b16 %v3244, %v3241
    %v3377 = vpack.c.b16 %v3248, %v3245
    %v3378 = vpack.c.b16 %v3249, %v3246
    %v3379 = vpack.c.b16 %v3250, %v3247
    %v3380 = vpack.c.b16 %v3254, %v3251
    %v3381 = vpack.c.b16 %v3255, %v3252
    %v3382 = vpack.c.b16 %v3256, %v3253
    %v3383 = vpack.c.b16 %v3260, %v3257
    %v3384 = vpack.c.b16 %v3261, %v3258
    %v3385 = vpack.c.b16 %v3262, %v3259
    %v3386 = vpack.c.b16 %v3266, %v3263
    %v3387 = vpack.c.b16 %v3267, %v3264
    %v3388 = vpack.c.b16 %v3268, %v3265
    %3509 = vmatprep.subr.bf16.mxu0 %v3291
    %3510 = vmatpush1.bf16.msra.mxu0 %v3290
    %3511 = vmatprep.subr.bf16.mxu0 %v3288
    %3512 = vmatpush1.bf16.msra.mxu0 %v3287
    %3513 = vmatprep.subr.bf16.mxu0 %v3285
    %3514 = vmatpush1.bf16.msra.mxu0 %v3284
    %3515 = vmatprep.subr.bf16.mxu0 %v3282
    %3516 = vmatpush1.bf16.msra.mxu0 %v3281
    %3517 = vmatprep.subr.bf16.mxu0 %v3279
    %3518 = vmatpush1.bf16.msra.mxu0 %v3278
    %3519 = vmatprep.subr.bf16.mxu0 %v3276
    %3520 = vmatpush1.bf16.msra.mxu0 %v3275
    %3521 = vmatprep.subr.bf16.mxu0 %v3273
    %3522 = vmatpush1.bf16.msra.mxu0 %v3272
    %3523 = vmatprep.subr.bf16.mxu0 %v3270
    %3524 = vmatpush1.bf16.msra.mxu0 %v3269
    %3525 = vmatprep.subr.bf16.mxu0 %v3315
    %3526 = vmatpush2.bf16.msra.mxu0 %v3314
    %3527 = vmatprep.subr.bf16.mxu0 %v3312
    %3528 = vmatpush2.bf16.msra.mxu0 %v3311
    %3529 = vmatprep.subr.bf16.mxu0 %v3309
    %3530 = vmatpush2.bf16.msra.mxu0 %v3308
    %3531 = vmatprep.subr.bf16.mxu0 %v3306
    %3532 = vmatpush2.bf16.msra.mxu0 %v3305
    %3533 = vmatprep.subr.bf16.mxu0 %v3303
    %3534 = vmatpush2.bf16.msra.mxu0 %v3302
    %3535 = vmatprep.subr.bf16.mxu0 %v3300
    %3536 = vmatpush2.bf16.msra.mxu0 %v3299
    %3537 = vmatprep.subr.bf16.mxu0 %v3297
    %3538 = vmatpush2.bf16.msra.mxu0 %v3296
    %3539 = vmatprep.subr.bf16.mxu0 %v3294
    %3540 = vmatpush2.bf16.msra.mxu0 %v3293
    %3541 = vmatprep.mubr.bf16.mxu0 %v2688
    %3542 = vmatmul.mubr.bf16.gmra.mxu0 %v2687
    %v3543 = vpop.f32.mrf.mxu0
    %v3544 = vadd.f32 %v2857, %v3543
    %v3545 = vpop.f32.mrf.mxu0
    %v3546 = vadd.f32 %v2861, %v3545
    %v3547 = vpop.f32.mrf.mxu0
    %v3548 = vpop.f32.mrf.mxu0
    %3549 = vdwg.mxu0
    %3550 = vmatprep.subr.bf16.mxu0 %v3339
    %3551 = vmatpush1.bf16.msra.mxu0 %v3338
    %3552 = vmatprep.subr.bf16.mxu0 %v3336
    %3553 = vmatpush1.bf16.msra.mxu0 %v3335
    %3554 = vmatprep.subr.bf16.mxu0 %v3333
    %3555 = vmatpush1.bf16.msra.mxu0 %v3332
    %3556 = vmatprep.subr.bf16.mxu0 %v3330
    %3557 = vmatpush1.bf16.msra.mxu0 %v3329
    %3558 = vmatprep.subr.bf16.mxu0 %v3327
    %3559 = vmatpush1.bf16.msra.mxu0 %v3326
    %3560 = vmatprep.subr.bf16.mxu0 %v3324
    %3561 = vmatpush1.bf16.msra.mxu0 %v3323
    %3562 = vmatprep.subr.bf16.mxu0 %v3321
    %3563 = vmatpush1.bf16.msra.mxu0 %v3320
    %3564 = vmatprep.subr.bf16.mxu0 %v3318
    %3565 = vmatpush1.bf16.msra.mxu0 %v3317
    %3566 = vmatprep.subr.bf16.mxu0 %v3363
    %3567 = vmatpush2.bf16.msra.mxu0 %v3362
    %3568 = vmatprep.subr.bf16.mxu0 %v3360
    %3569 = vmatpush2.bf16.msra.mxu0 %v3359
    %3570 = vmatprep.subr.bf16.mxu0 %v3357
    %3571 = vmatpush2.bf16.msra.mxu0 %v3356
    %3572 = vmatprep.subr.bf16.mxu0 %v3354
    %3573 = vmatpush2.bf16.msra.mxu0 %v3353
    %3574 = vmatprep.subr.bf16.mxu0 %v3351
    %3575 = vmatpush2.bf16.msra.mxu0 %v3350
    %3576 = vmatprep.subr.bf16.mxu0 %v3348
    %3577 = vmatpush2.bf16.msra.mxu0 %v3347
    %3578 = vmatprep.subr.bf16.mxu0 %v3345
    %3579 = vmatpush2.bf16.msra.mxu0 %v3344
    %3580 = vmatprep.subr.bf16.mxu0 %v3342
    %3581 = vmatpush2.bf16.msra.mxu0 %v3341
    %3582 = vmatprep.mubr.bf16.mxu0 %v2690
    %3583 = vmatmul.mubr.bf16.gmra.mxu0 %v2689
    %v3584 = vpop.f32.mrf.mxu0
    %v3585 = vadd.f32 %v3544, %v3584
    %v3586 = vpop.f32.mrf.mxu0
    %v3587 = vadd.f32 %v3546, %v3586
    %v3588 = vpop.f32.mrf.mxu0
    %v3589 = vpop.f32.mrf.mxu0
    %3590 = vdwg.mxu0
    %3591 = vmatprep.subr.bf16.mxu0 %v3387
    %3592 = vmatpush1.bf16.msra.mxu0 %v3386
    %3593 = vmatprep.subr.bf16.mxu0 %v3384
    %3594 = vmatpush1.bf16.msra.mxu0 %v3383
    %3595 = vmatprep.subr.bf16.mxu0 %v3381
    %3596 = vmatpush1.bf16.msra.mxu0 %v3380
    %3597 = vmatprep.subr.bf16.mxu0 %v3378
    %3598 = vmatpush1.bf16.msra.mxu0 %v3377
    %3599 = vmatprep.subr.bf16.mxu0 %v3375
    %3600 = vmatpush1.bf16.msra.mxu0 %v3374
    %3601 = vmatprep.subr.bf16.mxu0 %v3372
    %3602 = vmatpush1.bf16.msra.mxu0 %v3371
    %3603 = vmatprep.subr.bf16.mxu0 %v3369
    %3604 = vmatpush1.bf16.msra.mxu0 %v3368
    %3605 = vmatprep.subr.bf16.mxu0 %v3366
    %3606 = vmatpush1.bf16.msra.mxu0 %v3365
    %3607 = vmatprep.subr.bf16.mxu0 0
    %3608 = vmatpush2.bf16.msra.mxu0 0
    %3609 = vmatprep.subr.bf16.mxu0 0
    %3610 = vmatpush2.bf16.msra.mxu0 0
    %3611 = vmatprep.subr.bf16.mxu0 0
    %3612 = vmatpush2.bf16.msra.mxu0 0
    %3613 = vmatprep.subr.bf16.mxu0 0
    %3614 = vmatpush2.bf16.msra.mxu0 0
    %3615 = vmatprep.subr.bf16.mxu0 0
    %3616 = vmatpush2.bf16.msra.mxu0 0
    %3617 = vmatprep.subr.bf16.mxu0 0
    %3618 = vmatpush2.bf16.msra.mxu0 0
    %3619 = vmatprep.subr.bf16.mxu0 0
    %3620 = vmatpush2.bf16.msra.mxu0 0
    %3621 = vmatprep.subr.bf16.mxu0 0
    %3622 = vmatpush2.bf16.msra.mxu0 0
    %3623 = vmatprep.mubr.bf16.mxu0 0
    %3624 = vmatmul.mubr.bf16.gmra.mxu0 %v2691
    %v3625 = vpop.f32.mrf.mxu0
    %v3626 = vadd.f32 %v3585, %v3625
    %v3627 = vpop.f32.mrf.mxu0
    %v3628 = vadd.f32 %v3587, %v3627
    %v3629 = vpop.f32.mrf.mxu0
    %v3630 = vpop.f32.mrf.mxu0
    %3631 = vdwg.mxu0
    %3632 = vmatprep.subr.bf16.mxu0 0
    %3633 = vmatpush1.bf16.msra.mxu0 %v3292
    %3634 = vmatprep.subr.bf16.mxu0 0
    %3635 = vmatpush1.bf16.msra.mxu0 %v3289
    %3636 = vmatprep.subr.bf16.mxu0 0
    %3637 = vmatpush1.bf16.msra.mxu0 %v3286
    %3638 = vmatprep.subr.bf16.mxu0 0
    %3639 = vmatpush1.bf16.msra.mxu0 %v3283
    %3640 = vmatprep.subr.bf16.mxu0 0
    %3641 = vmatpush1.bf16.msra.mxu0 %v3280
    %3642 = vmatprep.subr.bf16.mxu0 0
    %3643 = vmatpush1.bf16.msra.mxu0 %v3277
    %3644 = vmatprep.subr.bf16.mxu0 0
    %3645 = vmatpush1.bf16.msra.mxu0 %v3274
    %3646 = vmatprep.subr.bf16.mxu0 0
    %3647 = vmatpush1.bf16.msra.mxu0 %v3271
    %3648 = vmatprep.subr.bf16.mxu0 0
    %3649 = vmatpush2.bf16.msra.mxu0 %v3316
    %3650 = vmatprep.subr.bf16.mxu0 0
    %3651 = vmatpush2.bf16.msra.mxu0 %v3313
    %3652 = vmatprep.subr.bf16.mxu0 0
    %3653 = vmatpush2.bf16.msra.mxu0 %v3310
    %3654 = vmatprep.subr.bf16.mxu0 0
    %3655 = vmatpush2.bf16.msra.mxu0 %v3307
    %3656 = vmatprep.subr.bf16.mxu0 0
    %3657 = vmatpush2.bf16.msra.mxu0 %v3304
    %3658 = vmatprep.subr.bf16.mxu0 0
    %3659 = vmatpush2.bf16.msra.mxu0 %v3301
    %3660 = vmatprep.subr.bf16.mxu0 0
    %3661 = vmatpush2.bf16.msra.mxu0 %v3298
    %3662 = vmatprep.subr.bf16.mxu0 0
    %3663 = vmatpush2.bf16.msra.mxu0 %v3295
    %3664 = vmatprep.mubr.bf16.mxu0 %v2688
    %3665 = vmatmul.mubr.bf16.gmra.mxu0 %v2687
    %v3666 = vpop.f32.mrf.mxu0
    %v3667 = vadd.f32 %v2865, %v3666
    %v3668 = vpop.f32.mrf.mxu0
    %v3669 = vpop.f32.mrf.mxu0
    %v3670 = vpop.f32.mrf.mxu0
    %3671 = vdwg.mxu0
    %3672 = vmatprep.subr.bf16.mxu0 0
    %3673 = vmatpush1.bf16.msra.mxu0 %v3340
    %3674 = vmatprep.subr.bf16.mxu0 0
    %3675 = vmatpush1.bf16.msra.mxu0 %v3337
    %3676 = vmatprep.subr.bf16.mxu0 0
    %3677 = vmatpush1.bf16.msra.mxu0 %v3334
    %3678 = vmatprep.subr.bf16.mxu0 0
    %3679 = vmatpush1.bf16.msra.mxu0 %v3331
    %3680 = vmatprep.subr.bf16.mxu0 0
    %3681 = vmatpush1.bf16.msra.mxu0 %v3328
    %3682 = vmatprep.subr.bf16.mxu0 0
    %3683 = vmatpush1.bf16.msra.mxu0 %v3325
    %3684 = vmatprep.subr.bf16.mxu0 0
    %3685 = vmatpush1.bf16.msra.mxu0 %v3322
    %3686 = vmatprep.subr.bf16.mxu0 0
    %3687 = vmatpush1.bf16.msra.mxu0 %v3319
    %3688 = vmatprep.subr.bf16.mxu0 0
    %3689 = vmatpush2.bf16.msra.mxu0 %v3364
    %3690 = vmatprep.subr.bf16.mxu0 0
    %3691 = vmatpush2.bf16.msra.mxu0 %v3361
    %3692 = vmatprep.subr.bf16.mxu0 0
    %3693 = vmatpush2.bf16.msra.mxu0 %v3358
    %3694 = vmatprep.subr.bf16.mxu0 0
    %3695 = vmatpush2.bf16.msra.mxu0 %v3355
    %3696 = vmatprep.subr.bf16.mxu0 0
    %3697 = vmatpush2.bf16.msra.mxu0 %v3352
    %3698 = vmatprep.subr.bf16.mxu0 0
    %3699 = vmatpush2.bf16.msra.mxu0 %v3349
    %3700 = vmatprep.subr.bf16.mxu0 0
    %3701 = vmatpush2.bf16.msra.mxu0 %v3346
    %3702 = vmatprep.subr.bf16.mxu0 0
    %3703 = vmatpush2.bf16.msra.mxu0 %v3343
    %3704 = vmatprep.mubr.bf16.mxu0 %v2690
    %3705 = vmatmul.mubr.bf16.gmra.mxu0 %v2689
    %v3706 = vpop.f32.mrf.mxu0
    %v3707 = vadd.f32 %v3667, %v3706
    %v3708 = vpop.f32.mrf.mxu0
    %v3709 = vpop.f32.mrf.mxu0
    %v3710 = vpop.f32.mrf.mxu0
    %3711 = vdwg.mxu0
    %3712 = vmatprep.subr.bf16.mxu0 0
    %3713 = vmatpush1.bf16.msra.mxu0 %v3388
    %3714 = vmatprep.subr.bf16.mxu0 0
    %3715 = vmatpush1.bf16.msra.mxu0 %v3385
    %3716 = vmatprep.subr.bf16.mxu0 0
    %3717 = vmatpush1.bf16.msra.mxu0 %v3382
    %3718 = vmatprep.subr.bf16.mxu0 0
    %3719 = vmatpush1.bf16.msra.mxu0 %v3379
    %3720 = vmatprep.subr.bf16.mxu0 0
    %3721 = vmatpush1.bf16.msra.mxu0 %v3376
    %3722 = vmatprep.subr.bf16.mxu0 0
    %3723 = vmatpush1.bf16.msra.mxu0 %v3373
    %3724 = vmatprep.subr.bf16.mxu0 0
    %3725 = vmatpush1.bf16.msra.mxu0 %v3370
    %3726 = vmatprep.subr.bf16.mxu0 0
    %3727 = vmatpush1.bf16.msra.mxu0 %v3367
    %3728 = vmatprep.subr.bf16.mxu0 0
    %3729 = vmatpush2.bf16.msra.mxu0 0
    %3730 = vmatprep.subr.bf16.mxu0 0
    %3731 = vmatpush2.bf16.msra.mxu0 0
    %3732 = vmatprep.subr.bf16.mxu0 0
    %3733 = vmatpush2.bf16.msra.mxu0 0
    %3734 = vmatprep.subr.bf16.mxu0 0
    %3735 = vmatpush2.bf16.msra.mxu0 0
    %3736 = vmatprep.subr.bf16.mxu0 0
    %3737 = vmatpush2.bf16.msra.mxu0 0
    %3738 = vmatprep.subr.bf16.mxu0 0
    %3739 = vmatpush2.bf16.msra.mxu0 0
    %3740 = vmatprep.subr.bf16.mxu0 0
    %3741 = vmatpush2.bf16.msra.mxu0 0
    %3742 = vmatprep.subr.bf16.mxu0 0
    %3743 = vmatpush2.bf16.msra.mxu0 0
    %3744 = vmatprep.mubr.bf16.mxu0 0
    %3745 = vmatmul.mubr.bf16.gmra.mxu0 %v2691
    %v3746 = vpop.f32.mrf.mxu0
    %v3747 = vadd.f32 %v3707, %v3746
    %v3748 = vpop.f32.mrf.mxu0
    %v3749 = vpop.f32.mrf.mxu0
    %v3750 = vpop.f32.mrf.mxu0
    %3751 = vdwg.mxu0
    %v3752 = vmax.f32 %v3626, 0.0
    %v3753 = vmax.f32 %v3628, 0.0
    %v3754 = vmax.f32 %v3747, 0.0
    %v3755 = vld [vmem:[#allocation11] sm:$0x7]
    %v3756 = vunpack.c.l.bf16 %v3755
    %v3758 = vlaneseq
    %v3759 = vshrl.u32 %v3758, 7
    %v3760 = vsub.s32 0, %v3759
    %v3761 = vrot.slane %v3756, %v3760
    %v3762 = vlaneseq
    %v3763 = vshrl.u32 %v3762, 7
    %v3764 = vsub.s32 2, %v3763
    %v3765 = vrot.slane %v3756, %v3764
    %v3766 = vlaneseq
    %v3767 = vshrl.u32 %v3766, 7
    %v3768 = vsub.s32 4, %v3767
    %v3769 = vrot.slane %v3756, %v3768
    %v3773 = vlaneseq
    %v3774 = vshrl.u32 %v3773, 7
    %v3775 = vsub.s32 0, %v3774
    %v3776 = vrot.slane %v3761, %v3775
    %v3777 = vlaneseq
    %v3778 = vshrl.u32 %v3777, 7
    %v3779 = vsub.s32 0, %v3778
    %v3780 = vrot.slane %v3765, %v3779
    %v3781 = vlaneseq
    %v3782 = vshrl.u32 %v3781, 7
    %v3783 = vsub.s32 0, %v3782
    %v3784 = vrot.slane %v3769, %v3783
    %v3785 = vmul.f32 %v3752, %v3776
    %v3786 = vmul.f32 %v3753, %v3780
    %v3787 = vmul.f32 %v3754, %v3784
    %v3788 = vadd.f32 %v3785, %v3786
    %v3789 = vadd.f32 %v3788, %v3787
    %3790 = vadd.xlane.f32.xlu0 %v3789
    %v3791 = vpop.xlane.xlu0 %3790
    %v3792 = vld [vmem:[#allocation2] sm:$0x1]
    %v3794 = vlaneseq
    %v3795 = vshrl.u32 %v3794, 7
    %v3796 = vsub.s32 0, %v3795
    %v3797 = vrot.slane %v3792, %v3796
    %v3799 = vadd.f32 %v3791, %v3797
    %vm3800 = vcmask 7168
    %3801 = vst.msk [vmem:[%s7] sm:$0xff] %vm3800, %v3799
    // Predicated region
    $region54: #{tpu_custom_call.1} parent=1 // pred_check
      _
    $region55: #{tpu_custom_call.1} parent=1 // pred_check_branch
      %3803 = sbr.rel (0) target = $region57
    $region56: #{tpu_custom_call.1} parent=1 // pred_region
      _
    $region57: #{tpu_custom_call.1} parent=1 // pred_fallthru
      _
    // Predicated region
    $region58: #{tpu_custom_call.1} parent=1 // pred_check
      _
    $region59: #{tpu_custom_call.1} parent=1 // pred_check_branch
      %3805 = sbr.rel (0) target = $region61
    $region60: #{tpu_custom_call.1} parent=1 // pred_region
      _
    $region61: #{tpu_custom_call.1} parent=1 // pred_fallthru
      _
    %3806 = vsyncpa [#allocation4], 1
    %3807 = vsyncpa [#allocation6], 1
    %3808 = vsyncpa [#allocation9], 1
    %3809 = vsyncpa [#allocation12], 1

</llo_original>
